<compile_context>
chip_gen: v6e
topology: v6e:2x2x1
jax: 0.10.0
libtpu: 0.0.40
codegen_flags: <defaults>
</compile_context>

<pallas_src>
import jax
import jax.numpy as jnp
from jax.experimental import pallas as pl
from jax.experimental.pallas import tpu as pltpu


def _round_up(x, m):
    return (x + m - 1) // m * m


def _pad_to(a, shape):
    return jnp.pad(a, [(0, s - d) for d, s in zip(a.shape, shape)])


# ---------------- Pallas kernels ----------------

def _conv_pool_relu_kernel(x_ref, w_ref, b_ref, o_ref):
    # x_ref: (9, TP, Kp) bf16 -- axis 0 enumerates the 3x3 pooling-window members,
    # each row is the im2col patch of one conv-output pixel. One MXU matmul per
    # member, pooled via 8 chained VPU maxes on the f32 accumulators; bias added
    # once after the max, then ReLU. Output (TP, 128) is lane-dense.
    acc = jnp.dot(x_ref[0], w_ref[...], preferred_element_type=jnp.float32)
    for r in range(1, 9):
        acc = jnp.maximum(
            acc, jnp.dot(x_ref[r], w_ref[...], preferred_element_type=jnp.float32))
    o_ref[...] = jnp.maximum(acc + b_ref[...], 0.0)


def _im2col_pool_windows(x, k, pad):
    # x: (N,H,W,C). Stride-1 'same' im2col restricted to the pooled region,
    # grouped by 3x3 pooling-window member -> (9, N*Ho*Wo, k*k*C), cols = (ki,kj,c).
    # TODO(synk): fuse patch extraction into the kernel (halo DMA) to avoid the
    # k^2 im2col HBM blowup; bf16 operands already halve the patch traffic.
    N, H, W, C = x.shape
    Ho, Wo = H // 3, W // 3
    xp = jnp.pad(x, ((0, 0), (pad, pad), (pad, pad), (0, 0)))
    cols = [xp[:, ki:ki + H, kj:kj + W, :] for ki in range(k) for kj in range(k)]
    patches = jnp.stack(cols, axis=3).reshape(N, H, W, k * k * C)
    patches = patches[:, :Ho * 3, :Wo * 3, :]
    patches = patches.reshape(N, Ho, 3, Wo, 3, k * k * C)
    return patches.transpose(2, 4, 0, 1, 3, 5).reshape(9, N * Ho * Wo, k * k * C)


def conv_pool_relu(x, w, b, *, tp=512):
    """Fused conv(k x k, stride 1, 'same') -> maxpool(3, stride 3, floor) -> relu.

    x: (N,H,W,Cin) NHWC f32.  w: (Cout,Cin,k,k) torch layout.  b: (Cout,)
    Returns (N, H//3, W//3, Cp) f32 with Cp = round_up(Cout, 128); padded lanes = 0.
    """
    N, H, W, Cin = x.shape
    Cout, _, k, _ = w.shape
    Ho, Wo = H // 3, W // 3
    patches = _im2col_pool_windows(x.astype(jnp.bfloat16), k, pad=k // 2)
    K = k * k * Cin
    Kp = _round_up(K, 16)                       # bf16 sublane-friendly contraction
    Cp = _round_up(Cout, 128)                   # lane-dense output (no masked vst)
    R = N * Ho * Wo
    TP = min(tp, _round_up(R, 8))               # row tiling -> pipelining, bounded VMEM
    Rp = _round_up(R, TP)
    xp = _pad_to(patches, (9, Rp, Kp))
    wr = w.transpose(2, 3, 1, 0).reshape(K, Cout)   # (ki,kj,cin) rows match patches
    wp = _pad_to(wr.astype(jnp.bfloat16), (Kp, Cp))
    bp = _pad_to(b.astype(jnp.float32).reshape(1, Cout), (1, Cp))
    out = pl.pallas_call(
        _conv_pool_relu_kernel,
        out_shape=jax.ShapeDtypeStruct((Rp, Cp), jnp.float32),
        grid=(Rp // TP,),
        in_specs=[pl.BlockSpec((9, TP, Kp), lambda i: (0, i, 0)),
                  pl.BlockSpec((Kp, Cp), lambda i: (0, 0)),    # weights resident
                  pl.BlockSpec((1, Cp), lambda i: (0, 0))],
        out_specs=pl.BlockSpec((TP, Cp), lambda i: (i, 0)),
        compiler_params=pltpu.CompilerParams(
            dimension_semantics=("parallel",)),
    )(xp, wp, bp)
    return out[:R].reshape(N, Ho, Wo, Cp)


def _make_head_kernel(num_classes):
    def kernel(x_ref, w1_ref, b1_ref, w2_ref, b2_ref, o_ref):
        h = jnp.maximum(
            jnp.dot(x_ref[...], w1_ref[...],
                    preferred_element_type=jnp.float32) + b1_ref[...], 0.0)
        logits = (jnp.dot(h.astype(jnp.bfloat16), w2_ref[...],
                          preferred_element_type=jnp.float32) + b2_ref[...])
        col = jax.lax.broadcasted_iota(jnp.int32, logits.shape, 1)
        logits = jnp.where(col < num_classes, logits, -jnp.inf)   # mask pad lanes
        m = jnp.max(logits, axis=-1, keepdims=True)
        z = logits - m
        lse = jnp.log(jnp.sum(jnp.exp(z), axis=-1, keepdims=True))
        o_ref[...] = z - lse
    return kernel


def mlp_head(x, w1, b1, w2, b2, *, tb=256):
    # fc1 -> relu -> fc2 -> log_softmax, fused; hidden / logit dims padded to 128.
    B, D = x.shape
    Hf, O = w1.shape[1], w2.shape[1]
    Hp, Op = _round_up(Hf, 128), _round_up(O, 128)
    TB = min(tb, _round_up(B, 8))
    Bp = _round_up(B, TB)
    xp = _pad_to(x.astype(jnp.bfloat16), (Bp, D))
    w1p = _pad_to(w1.astype(jnp.bfloat16), (D, Hp))
    b1p = _pad_to(b1.astype(jnp.float32).reshape(1, Hf), (1, Hp))
    w2p = _pad_to(w2.astype(jnp.bfloat16), (Hp, Op))
    b2p = _pad_to(b2.astype(jnp.float32).reshape(1, O), (1, Op))
    out = pl.pallas_call(
        _make_head_kernel(O),
        out_shape=jax.ShapeDtypeStruct((Bp, Op), jnp.float32),
        grid=(Bp // TB,),
        in_specs=[pl.BlockSpec((TB, D), lambda i: (i, 0)),
                  pl.BlockSpec((D, Hp), lambda i: (0, 0)),
                  pl.BlockSpec((1, Hp), lambda i: (0, 0)),
                  pl.BlockSpec((Hp, Op), lambda i: (0, 0)),
                  pl.BlockSpec((1, Op), lambda i: (0, 0))],
        out_specs=pl.BlockSpec((TB, Op), lambda i: (i, 0)),
        compiler_params=pltpu.CompilerParams(
            dimension_semantics=("parallel",)),
    )(xp, w1p, b1p, w2p, b2p)
    return out[:B, :O]


# ---------------- params / forward / reference ----------------

def init_params(key):
    ks = jax.random.split(key, 8)
    s = 0.05
    return {
        "w_conv1": jax.random.normal(ks[0], (10, 1, 5, 5), jnp.float32) * s,
        "b_conv1": jax.random.normal(ks[1], (10,), jnp.float32) * s,
        "w_conv2": jax.random.normal(ks[2], (40, 10, 5, 5), jnp.float32) * s,
        "b_conv2": jax.random.normal(ks[3], (40,), jnp.float32) * s,
        "w_fc1": jax.random.normal(ks[4], (360, 50), jnp.float32) * s,
        "b_fc1": jax.random.normal(ks[5], (50,), jnp.float32) * s,
        "w_fc2": jax.random.normal(ks[6], (50, 10), jnp.float32) * s,
        "b_fc2": jax.random.normal(ks[7], (10,), jnp.float32) * s,
    }


@jax.jit
def net_forward(params, x):
    # x: (N, 1, 28, 28) float32, NCHW
    N = x.shape[0]
    c1_out = params["w_conv2"].shape[1]     # 10
    c2_out = params["w_conv2"].shape[0]     # 40
    x = jnp.transpose(x, (0, 2, 3, 1))                                   # NHWC
    y = conv_pool_relu(x, params["w_conv1"], params["b_conv1"])          # (N,9,9,128)
    y = y[..., :c1_out]
    # TODO(synk): Dropout2d and F.dropout are identity in eval mode (inference forward).
    y = conv_pool_relu(y, params["w_conv2"], params["b_conv2"])          # (N,3,3,128)
    y = y[..., :c2_out]
    y = jnp.transpose(y, (0, 3, 1, 2)).reshape(N, c2_out * 9)            # torch .view(-1,360)
    return mlp_head(y, params["w_fc1"], params["b_fc1"],
                    params["w_fc2"], params["b_fc2"])                    # (N,10) log-probs


@jax.jit
def _reference_forward(params, x):
    # Pure-JAX mirror of the torch module in eval mode (f32 everywhere).
    dn = ("NCHW", "OIHW", "NCHW")
    y = jax.lax.conv_general_dilated(x, params["w_conv1"], (1, 1), ((2, 2), (2, 2)),
                                     dimension_numbers=dn)
    y = y + params["b_conv1"][None, :, None, None]
    y = jax.lax.reduce_window(y, -jnp.inf, jax.lax.max, (1, 1, 3, 3), (1, 1, 3, 3), "VALID")
    y = jnp.maximum(y, 0.0)
    y = jax.lax.conv_general_dilated(y, params["w_conv2"], (1, 1), ((2, 2), (2, 2)),
                                     dimension_numbers=dn)
    y = y + params["b_conv2"][None, :, None, None]
    y = jax.lax.reduce_window(y, -jnp.inf, jax.lax.max, (1, 1, 3, 3), (1, 1, 3, 3), "VALID")
    y = jnp.maximum(y, 0.0)
    y = y.reshape(x.shape[0], -1)
    y = jnp.maximum(y @ params["w_fc1"] + params["b_fc1"], 0.0)
    y = y @ params["w_fc2"] + params["b_fc2"]
    return jax.nn.log_softmax(y, axis=-1)


if __name__ == "__main__":
    key = jax.random.PRNGKey(0)
    pkey, xkey = jax.random.split(key)
    params = init_params(pkey)
    # fc1 expects 360 = 40*3*3 features => input spatial must be 28x28 (MNIST).
    x = jax.random.normal(xkey, (2, 1, 28, 28), jnp.float32)
    out = jax.block_until_ready(net_forward(params, x))
    ref = jax.block_until_ready(_reference_forward(params, x))
    assert out.shape == (2, 10)
    assert bool(jnp.all(jnp.isfinite(out)))
    # log_softmax rows must exponentiate-sum to 1
    assert bool(jnp.allclose(jnp.sum(jnp.exp(out), axis=-1), 1.0, atol=1e-4))
    # bf16 matmul operands vs f32 reference -> modest tolerance
    assert bool(jnp.allclose(out, ref, atol=7e-2)), float(jnp.max(jnp.abs(out - ref)))
    print("KERNEL_OK")
</pallas_src>

<mosaic_0001>
module attributes {stable_mosaic.version = 11 : i64} {
  func.func @_conv_pool_relu_kernel(%arg0: i32, %arg1: memref<9x168x32xbf16, #tpu.memory_space<vmem>>, %arg2: memref<32x128xbf16, #tpu.memory_space<vmem>>, %arg3: memref<1x128xf32, #tpu.memory_space<vmem>>, %arg4: memref<168x128xf32, #tpu.memory_space<vmem>>) attributes {dimension_semantics = [#tpu.dimension_semantics<parallel>], iteration_bounds = array<i64: 1>, scalar_prefetch = 0 : i64, scratch_operands = 0 : i64, tpu.core_type = #tpu.core_type<tc>, window_params = [{transform_indices = @transform_0, window_bounds = array<i64: 9, 168, 32>}, {pipeline_mode = #tpu.pipeline_mode<synchronous>, transform_indices = @transform_1, window_bounds = array<i64: 32, 128>}, {pipeline_mode = #tpu.pipeline_mode<synchronous>, transform_indices = @transform_2, window_bounds = array<i64: 1, 128>}, {transform_indices = @transform_3, window_bounds = array<i64: 168, 128>}]} {
    %c0 = arith.constant 0 : index
    %c0_0 = arith.constant 0 : index
    %c0_1 = arith.constant 0 : index
    %0 = vector.load %arg1[%c0, %c0_0, %c0_1] : memref<9x168x32xbf16, #tpu.memory_space<vmem>>, vector<1x168x32xbf16>
    %1 = vector.shape_cast %0 : vector<1x168x32xbf16> to vector<168x32xbf16>
    %c0_2 = arith.constant 0 : index
    %c0_3 = arith.constant 0 : index
    %2 = vector.load %arg2[%c0_2, %c0_3] : memref<32x128xbf16, #tpu.memory_space<vmem>>, vector<32x128xbf16>
    %cst = arith.constant dense<0.000000e+00> : vector<168x128xf32>
    %3 = tpu.matmul %1, %2, %cst {dimension_numbers = #tpu.dot_dimension_numbers<[1], [0], [0], [1], [0, 0, 1, 1], [], []>} : vector<168x32xbf16>, vector<32x128xbf16>, vector<168x128xf32> -> vector<168x128xf32>
    %c1 = arith.constant 1 : index
    %c0_4 = arith.constant 0 : index
    %c0_5 = arith.constant 0 : index
    %4 = vector.load %arg1[%c1, %c0_4, %c0_5] : memref<9x168x32xbf16, #tpu.memory_space<vmem>>, vector<1x168x32xbf16>
    %5 = vector.shape_cast %4 : vector<1x168x32xbf16> to vector<168x32xbf16>
    %c0_6 = arith.constant 0 : index
    %c0_7 = arith.constant 0 : index
    %6 = vector.load %arg2[%c0_6, %c0_7] : memref<32x128xbf16, #tpu.memory_space<vmem>>, vector<32x128xbf16>
    %cst_8 = arith.constant dense<0.000000e+00> : vector<168x128xf32>
    %7 = tpu.matmul %5, %6, %cst_8 {dimension_numbers = #tpu.dot_dimension_numbers<[1], [0], [0], [1], [0, 0, 1, 1], [], []>} : vector<168x32xbf16>, vector<32x128xbf16>, vector<168x128xf32> -> vector<168x128xf32>
    %8 = arith.maximumf %3, %7 : vector<168x128xf32>
    %c2 = arith.constant 2 : index
    %c0_9 = arith.constant 0 : index
    %c0_10 = arith.constant 0 : index
    %9 = vector.load %arg1[%c2, %c0_9, %c0_10] : memref<9x168x32xbf16, #tpu.memory_space<vmem>>, vector<1x168x32xbf16>
    %10 = vector.shape_cast %9 : vector<1x168x32xbf16> to vector<168x32xbf16>
    %c0_11 = arith.constant 0 : index
    %c0_12 = arith.constant 0 : index
    %11 = vector.load %arg2[%c0_11, %c0_12] : memref<32x128xbf16, #tpu.memory_space<vmem>>, vector<32x128xbf16>
    %cst_13 = arith.constant dense<0.000000e+00> : vector<168x128xf32>
    %12 = tpu.matmul %10, %11, %cst_13 {dimension_numbers = #tpu.dot_dimension_numbers<[1], [0], [0], [1], [0, 0, 1, 1], [], []>} : vector<168x32xbf16>, vector<32x128xbf16>, vector<168x128xf32> -> vector<168x128xf32>
    %13 = arith.maximumf %8, %12 : vector<168x128xf32>
    %c3 = arith.constant 3 : index
    %c0_14 = arith.constant 0 : index
    %c0_15 = arith.constant 0 : index
    %14 = vector.load %arg1[%c3, %c0_14, %c0_15] : memref<9x168x32xbf16, #tpu.memory_space<vmem>>, vector<1x168x32xbf16>
    %15 = vector.shape_cast %14 : vector<1x168x32xbf16> to vector<168x32xbf16>
    %c0_16 = arith.constant 0 : index
    %c0_17 = arith.constant 0 : index
    %16 = vector.load %arg2[%c0_16, %c0_17] : memref<32x128xbf16, #tpu.memory_space<vmem>>, vector<32x128xbf16>
    %cst_18 = arith.constant dense<0.000000e+00> : vector<168x128xf32>
    %17 = tpu.matmul %15, %16, %cst_18 {dimension_numbers = #tpu.dot_dimension_numbers<[1], [0], [0], [1], [0, 0, 1, 1], [], []>} : vector<168x32xbf16>, vector<32x128xbf16>, vector<168x128xf32> -> vector<168x128xf32>
    %18 = arith.maximumf %13, %17 : vector<168x128xf32>
    %c4 = arith.constant 4 : index
    %c0_19 = arith.constant 0 : index
    %c0_20 = arith.constant 0 : index
    %19 = vector.load %arg1[%c4, %c0_19, %c0_20] : memref<9x168x32xbf16, #tpu.memory_space<vmem>>, vector<1x168x32xbf16>
    %20 = vector.shape_cast %19 : vector<1x168x32xbf16> to vector<168x32xbf16>
    %c0_21 = arith.constant 0 : index
    %c0_22 = arith.constant 0 : index
    %21 = vector.load %arg2[%c0_21, %c0_22] : memref<32x128xbf16, #tpu.memory_space<vmem>>, vector<32x128xbf16>
    %cst_23 = arith.constant dense<0.000000e+00> : vector<168x128xf32>
    %22 = tpu.matmul %20, %21, %cst_23 {dimension_numbers = #tpu.dot_dimension_numbers<[1], [0], [0], [1], [0, 0, 1, 1], [], []>} : vector<168x32xbf16>, vector<32x128xbf16>, vector<168x128xf32> -> vector<168x128xf32>
    %23 = arith.maximumf %18, %22 : vector<168x128xf32>
    %c5 = arith.constant 5 : index
    %c0_24 = arith.constant 0 : index
    %c0_25 = arith.constant 0 : index
    %24 = vector.load %arg1[%c5, %c0_24, %c0_25] : memref<9x168x32xbf16, #tpu.memory_space<vmem>>, vector<1x168x32xbf16>
    %25 = vector.shape_cast %24 : vector<1x168x32xbf16> to vector<168x32xbf16>
    %c0_26 = arith.constant 0 : index
    %c0_27 = arith.constant 0 : index
    %26 = vector.load %arg2[%c0_26, %c0_27] : memref<32x128xbf16, #tpu.memory_space<vmem>>, vector<32x128xbf16>
    %cst_28 = arith.constant dense<0.000000e+00> : vector<168x128xf32>
    %27 = tpu.matmul %25, %26, %cst_28 {dimension_numbers = #tpu.dot_dimension_numbers<[1], [0], [0], [1], [0, 0, 1, 1], [], []>} : vector<168x32xbf16>, vector<32x128xbf16>, vector<168x128xf32> -> vector<168x128xf32>
    %28 = arith.maximumf %23, %27 : vector<168x128xf32>
    %c6 = arith.constant 6 : index
    %c0_29 = arith.constant 0 : index
    %c0_30 = arith.constant 0 : index
    %29 = vector.load %arg1[%c6, %c0_29, %c0_30] : memref<9x168x32xbf16, #tpu.memory_space<vmem>>, vector<1x168x32xbf16>
    %30 = vector.shape_cast %29 : vector<1x168x32xbf16> to vector<168x32xbf16>
    %c0_31 = arith.constant 0 : index
    %c0_32 = arith.constant 0 : index
    %31 = vector.load %arg2[%c0_31, %c0_32] : memref<32x128xbf16, #tpu.memory_space<vmem>>, vector<32x128xbf16>
    %cst_33 = arith.constant dense<0.000000e+00> : vector<168x128xf32>
    %32 = tpu.matmul %30, %31, %cst_33 {dimension_numbers = #tpu.dot_dimension_numbers<[1], [0], [0], [1], [0, 0, 1, 1], [], []>} : vector<168x32xbf16>, vector<32x128xbf16>, vector<168x128xf32> -> vector<168x128xf32>
    %33 = arith.maximumf %28, %32 : vector<168x128xf32>
    %c7 = arith.constant 7 : index
    %c0_34 = arith.constant 0 : index
    %c0_35 = arith.constant 0 : index
    %34 = vector.load %arg1[%c7, %c0_34, %c0_35] : memref<9x168x32xbf16, #tpu.memory_space<vmem>>, vector<1x168x32xbf16>
    %35 = vector.shape_cast %34 : vector<1x168x32xbf16> to vector<168x32xbf16>
    %c0_36 = arith.constant 0 : index
    %c0_37 = arith.constant 0 : index
    %36 = vector.load %arg2[%c0_36, %c0_37] : memref<32x128xbf16, #tpu.memory_space<vmem>>, vector<32x128xbf16>
    %cst_38 = arith.constant dense<0.000000e+00> : vector<168x128xf32>
    %37 = tpu.matmul %35, %36, %cst_38 {dimension_numbers = #tpu.dot_dimension_numbers<[1], [0], [0], [1], [0, 0, 1, 1], [], []>} : vector<168x32xbf16>, vector<32x128xbf16>, vector<168x128xf32> -> vector<168x128xf32>
    %38 = arith.maximumf %33, %37 : vector<168x128xf32>
    %c8 = arith.constant 8 : index
    %c0_39 = arith.constant 0 : index
    %c0_40 = arith.constant 0 : index
    %39 = vector.load %arg1[%c8, %c0_39, %c0_40] : memref<9x168x32xbf16, #tpu.memory_space<vmem>>, vector<1x168x32xbf16>
    %40 = vector.shape_cast %39 : vector<1x168x32xbf16> to vector<168x32xbf16>
    %c0_41 = arith.constant 0 : index
    %c0_42 = arith.constant 0 : index
    %41 = vector.load %arg2[%c0_41, %c0_42] : memref<32x128xbf16, #tpu.memory_space<vmem>>, vector<32x128xbf16>
    %cst_43 = arith.constant dense<0.000000e+00> : vector<168x128xf32>
    %42 = tpu.matmul %40, %41, %cst_43 {dimension_numbers = #tpu.dot_dimension_numbers<[1], [0], [0], [1], [0, 0, 1, 1], [], []>} : vector<168x32xbf16>, vector<32x128xbf16>, vector<168x128xf32> -> vector<168x128xf32>
    %43 = arith.maximumf %38, %42 : vector<168x128xf32>
    %c0_44 = arith.constant 0 : index
    %c0_45 = arith.constant 0 : index
    %44 = vector.load %arg3[%c0_44, %c0_45] : memref<1x128xf32, #tpu.memory_space<vmem>>, vector<1x128xf32>
    %45 = vector.broadcast %44 : vector<1x128xf32> to vector<168x128xf32>
    %46 = arith.addf %43, %45 : vector<168x128xf32>
    %cst_46 = arith.constant 0.000000e+00 : f32
    %47 = vector.broadcast %cst_46 : f32 to vector<168x128xf32>
    %48 = arith.maximumf %46, %47 : vector<168x128xf32>
    %c0_47 = arith.constant 0 : index
    %c0_48 = arith.constant 0 : index
    %49 = vector.load %arg4[%c0_47, %c0_48] : memref<168x128xf32, #tpu.memory_space<vmem>>, vector<168x128xf32>
    tpu.vector_store %arg4[%c0_47, %c0_48], %48 {strides = array<i32>} : memref<168x128xf32, #tpu.memory_space<vmem>>, vector<168x128xf32>,
    return
  }
  func.func @transform_0(%arg0: i32) -> (i32, i32, i32) {
    %c0_i32 = arith.constant 0 : i32
    %c0_i32_0 = arith.constant 0 : i32
    %c0_i32_1 = arith.constant 0 : i32
    return %c0_i32, %arg0, %c0_i32_0 : i32, i32, i32
  }
  func.func @transform_1(%arg0: i32) -> (i32, i32) {
    %c0_i32 = arith.constant 0 : i32
    %c0_i32_0 = arith.constant 0 : i32
    %c0_i32_1 = arith.constant 0 : i32
    return %c0_i32, %c0_i32_0 : i32, i32
  }
  func.func @transform_2(%arg0: i32) -> (i32, i32) {
    %c0_i32 = arith.constant 0 : i32
    %c0_i32_0 = arith.constant 0 : i32
    %c0_i32_1 = arith.constant 0 : i32
    return %c0_i32, %c0_i32_0 : i32, i32
  }
  func.func @transform_3(%arg0: i32) -> (i32, i32) {
    %c0_i32 = arith.constant 0 : i32
    %c0_i32_0 = arith.constant 0 : i32
    return %arg0, %c0_i32 : i32, i32
  }
}

module attributes {stable_mosaic.version = 11 : i64} {
  func.func @_conv_pool_relu_kernel(%arg0: i32, %arg1: memref<9x24x256xbf16, #tpu.memory_space<vmem>>, %arg2: memref<256x128xbf16, #tpu.memory_space<vmem>>, %arg3: memref<1x128xf32, #tpu.memory_space<vmem>>, %arg4: memref<24x128xf32, #tpu.memory_space<vmem>>) attributes {dimension_semantics = [#tpu.dimension_semantics<parallel>], iteration_bounds = array<i64: 1>, scalar_prefetch = 0 : i64, scratch_operands = 0 : i64, tpu.core_type = #tpu.core_type<tc>, window_params = [{transform_indices = @transform_0, window_bounds = array<i64: 9, 24, 256>}, {pipeline_mode = #tpu.pipeline_mode<synchronous>, transform_indices = @transform_1, window_bounds = array<i64: 256, 128>}, {pipeline_mode = #tpu.pipeline_mode<synchronous>, transform_indices = @transform_2, window_bounds = array<i64: 1, 128>}, {transform_indices = @transform_3, window_bounds = array<i64: 24, 128>}]} {
    %c0 = arith.constant 0 : index
    %c0_0 = arith.constant 0 : index
    %c0_1 = arith.constant 0 : index
    %0 = vector.load %arg1[%c0, %c0_0, %c0_1] : memref<9x24x256xbf16, #tpu.memory_space<vmem>>, vector<1x24x256xbf16>
    %1 = vector.shape_cast %0 : vector<1x24x256xbf16> to vector<24x256xbf16>
    %c0_2 = arith.constant 0 : index
    %c0_3 = arith.constant 0 : index
    %2 = vector.load %arg2[%c0_2, %c0_3] : memref<256x128xbf16, #tpu.memory_space<vmem>>, vector<256x128xbf16>
    %cst = arith.constant dense<0.000000e+00> : vector<24x128xf32>
    %3 = tpu.matmul %1, %2, %cst {dimension_numbers = #tpu.dot_dimension_numbers<[1], [0], [0], [1], [0, 0, 1, 1], [], []>} : vector<24x256xbf16>, vector<256x128xbf16>, vector<24x128xf32> -> vector<24x128xf32>
    %c1 = arith.constant 1 : index
    %c0_4 = arith.constant 0 : index
    %c0_5 = arith.constant 0 : index
    %4 = vector.load %arg1[%c1, %c0_4, %c0_5] : memref<9x24x256xbf16, #tpu.memory_space<vmem>>, vector<1x24x256xbf16>
    %5 = vector.shape_cast %4 : vector<1x24x256xbf16> to vector<24x256xbf16>
    %c0_6 = arith.constant 0 : index
    %c0_7 = arith.constant 0 : index
    %6 = vector.load %arg2[%c0_6, %c0_7] : memref<256x128xbf16, #tpu.memory_space<vmem>>, vector<256x128xbf16>
    %cst_8 = arith.constant dense<0.000000e+00> : vector<24x128xf32>
    %7 = tpu.matmul %5, %6, %cst_8 {dimension_numbers = #tpu.dot_dimension_numbers<[1], [0], [0], [1], [0, 0, 1, 1], [], []>} : vector<24x256xbf16>, vector<256x128xbf16>, vector<24x128xf32> -> vector<24x128xf32>
    %8 = arith.maximumf %3, %7 : vector<24x128xf32>
    %c2 = arith.constant 2 : index
    %c0_9 = arith.constant 0 : index
    %c0_10 = arith.constant 0 : index
    %9 = vector.load %arg1[%c2, %c0_9, %c0_10] : memref<9x24x256xbf16, #tpu.memory_space<vmem>>, vector<1x24x256xbf16>
    %10 = vector.shape_cast %9 : vector<1x24x256xbf16> to vector<24x256xbf16>
    %c0_11 = arith.constant 0 : index
    %c0_12 = arith.constant 0 : index
    %11 = vector.load %arg2[%c0_11, %c0_12] : memref<256x128xbf16, #tpu.memory_space<vmem>>, vector<256x128xbf16>
    %cst_13 = arith.constant dense<0.000000e+00> : vector<24x128xf32>
    %12 = tpu.matmul %10, %11, %cst_13 {dimension_numbers = #tpu.dot_dimension_numbers<[1], [0], [0], [1], [0, 0, 1, 1], [], []>} : vector<24x256xbf16>, vector<256x128xbf16>, vector<24x128xf32> -> vector<24x128xf32>
    %13 = arith.maximumf %8, %12 : vector<24x128xf32>
    %c3 = arith.constant 3 : index
    %c0_14 = arith.constant 0 : index
    %c0_15 = arith.constant 0 : index
    %14 = vector.load %arg1[%c3, %c0_14, %c0_15] : memref<9x24x256xbf16, #tpu.memory_space<vmem>>, vector<1x24x256xbf16>
    %15 = vector.shape_cast %14 : vector<1x24x256xbf16> to vector<24x256xbf16>
    %c0_16 = arith.constant 0 : index
    %c0_17 = arith.constant 0 : index
    %16 = vector.load %arg2[%c0_16, %c0_17] : memref<256x128xbf16, #tpu.memory_space<vmem>>, vector<256x128xbf16>
    %cst_18 = arith.constant dense<0.000000e+00> : vector<24x128xf32>
    %17 = tpu.matmul %15, %16, %cst_18 {dimension_numbers = #tpu.dot_dimension_numbers<[1], [0], [0], [1], [0, 0, 1, 1], [], []>} : vector<24x256xbf16>, vector<256x128xbf16>, vector<24x128xf32> -> vector<24x128xf32>
    %18 = arith.maximumf %13, %17 : vector<24x128xf32>
    %c4 = arith.constant 4 : index
    %c0_19 = arith.constant 0 : index
    %c0_20 = arith.constant 0 : index
    %19 = vector.load %arg1[%c4, %c0_19, %c0_20] : memref<9x24x256xbf16, #tpu.memory_space<vmem>>, vector<1x24x256xbf16>
    %20 = vector.shape_cast %19 : vector<1x24x256xbf16> to vector<24x256xbf16>
    %c0_21 = arith.constant 0 : index
    %c0_22 = arith.constant 0 : index
    %21 = vector.load %arg2[%c0_21, %c0_22] : memref<256x128xbf16, #tpu.memory_space<vmem>>, vector<256x128xbf16>
    %cst_23 = arith.constant dense<0.000000e+00> : vector<24x128xf32>
    %22 = tpu.matmul %20, %21, %cst_23 {dimension_numbers = #tpu.dot_dimension_numbers<[1], [0], [0], [1], [0, 0, 1, 1], [], []>} : vector<24x256xbf16>, vector<256x128xbf16>, vector<24x128xf32> -> vector<24x128xf32>
    %23 = arith.maximumf %18, %22 : vector<24x128xf32>
    %c5 = arith.constant 5 : index
    %c0_24 = arith.constant 0 : index
    %c0_25 = arith.constant 0 : index
    %24 = vector.load %arg1[%c5, %c0_24, %c0_25] : memref<9x24x256xbf16, #tpu.memory_space<vmem>>, vector<1x24x256xbf16>
    %25 = vector.shape_cast %24 : vector<1x24x256xbf16> to vector<24x256xbf16>
    %c0_26 = arith.constant 0 : index
    %c0_27 = arith.constant 0 : index
    %26 = vector.load %arg2[%c0_26, %c0_27] : memref<256x128xbf16, #tpu.memory_space<vmem>>, vector<256x128xbf16>
    %cst_28 = arith.constant dense<0.000000e+00> : vector<24x128xf32>
    %27 = tpu.matmul %25, %26, %cst_28 {dimension_numbers = #tpu.dot_dimension_numbers<[1], [0], [0], [1], [0, 0, 1, 1], [], []>} : vector<24x256xbf16>, vector<256x128xbf16>, vector<24x128xf32> -> vector<24x128xf32>
    %28 = arith.maximumf %23, %27 : vector<24x128xf32>
    %c6 = arith.constant 6 : index
    %c0_29 = arith.constant 0 : index
    %c0_30 = arith.constant 0 : index
    %29 = vector.load %arg1[%c6, %c0_29, %c0_30] : memref<9x24x256xbf16, #tpu.memory_space<vmem>>, vector<1x24x256xbf16>
    %30 = vector.shape_cast %29 : vector<1x24x256xbf16> to vector<24x256xbf16>
    %c0_31 = arith.constant 0 : index
    %c0_32 = arith.constant 0 : index
    %31 = vector.load %arg2[%c0_31, %c0_32] : memref<256x128xbf16, #tpu.memory_space<vmem>>, vector<256x128xbf16>
    %cst_33 = arith.constant dense<0.000000e+00> : vector<24x128xf32>
    %32 = tpu.matmul %30, %31, %cst_33 {dimension_numbers = #tpu.dot_dimension_numbers<[1], [0], [0], [1], [0, 0, 1, 1], [], []>} : vector<24x256xbf16>, vector<256x128xbf16>, vector<24x128xf32> -> vector<24x128xf32>
    %33 = arith.maximumf %28, %32 : vector<24x128xf32>
    %c7 = arith.constant 7 : index
    %c0_34 = arith.constant 0 : index
    %c0_35 = arith.constant 0 : index
    %34 = vector.load %arg1[%c7, %c0_34, %c0_35] : memref<9x24x256xbf16, #tpu.memory_space<vmem>>, vector<1x24x256xbf16>
    %35 = vector.shape_cast %34 : vector<1x24x256xbf16> to vector<24x256xbf16>
    %c0_36 = arith.constant 0 : index
    %c0_37 = arith.constant 0 : index
    %36 = vector.load %arg2[%c0_36, %c0_37] : memref<256x128xbf16, #tpu.memory_space<vmem>>, vector<256x128xbf16>
    %cst_38 = arith.constant dense<0.000000e+00> : vector<24x128xf32>
    %37 = tpu.matmul %35, %36, %cst_38 {dimension_numbers = #tpu.dot_dimension_numbers<[1], [0], [0], [1], [0, 0, 1, 1], [], []>} : vector<24x256xbf16>, vector<256x128xbf16>, vector<24x128xf32> -> vector<24x128xf32>
    %38 = arith.maximumf %33, %37 : vector<24x128xf32>
    %c8 = arith.constant 8 : index
    %c0_39 = arith.constant 0 : index
    %c0_40 = arith.constant 0 : index
    %39 = vector.load %arg1[%c8, %c0_39, %c0_40] : memref<9x24x256xbf16, #tpu.memory_space<vmem>>, vector<1x24x256xbf16>
    %40 = vector.shape_cast %39 : vector<1x24x256xbf16> to vector<24x256xbf16>
    %c0_41 = arith.constant 0 : index
    %c0_42 = arith.constant 0 : index
    %41 = vector.load %arg2[%c0_41, %c0_42] : memref<256x128xbf16, #tpu.memory_space<vmem>>, vector<256x128xbf16>
    %cst_43 = arith.constant dense<0.000000e+00> : vector<24x128xf32>
    %42 = tpu.matmul %40, %41, %cst_43 {dimension_numbers = #tpu.dot_dimension_numbers<[1], [0], [0], [1], [0, 0, 1, 1], [], []>} : vector<24x256xbf16>, vector<256x128xbf16>, vector<24x128xf32> -> vector<24x128xf32>
    %43 = arith.maximumf %38, %42 : vector<24x128xf32>
    %c0_44 = arith.constant 0 : index
    %c0_45 = arith.constant 0 : index
    %44 = vector.load %arg3[%c0_44, %c0_45] : memref<1x128xf32, #tpu.memory_space<vmem>>, vector<1x128xf32>
    %45 = vector.broadcast %44 : vector<1x128xf32> to vector<24x128xf32>
    %46 = arith.addf %43, %45 : vector<24x128xf32>
    %cst_46 = arith.constant 0.000000e+00 : f32
    %47 = vector.broadcast %cst_46 : f32 to vector<24x128xf32>
    %48 = arith.maximumf %46, %47 : vector<24x128xf32>
    %c0_47 = arith.constant 0 : index
    %c0_48 = arith.constant 0 : index
    %49 = vector.load %arg4[%c0_47, %c0_48] : memref<24x128xf32, #tpu.memory_space<vmem>>, vector<24x128xf32>
    tpu.vector_store %arg4[%c0_47, %c0_48], %48 {strides = array<i32>} : memref<24x128xf32, #tpu.memory_space<vmem>>, vector<24x128xf32>,
    return
  }
  func.func @transform_0(%arg0: i32) -> (i32, i32, i32) {
    %c0_i32 = arith.constant 0 : i32
    %c0_i32_0 = arith.constant 0 : i32
    %c0_i32_1 = arith.constant 0 : i32
    return %c0_i32, %arg0, %c0_i32_0 : i32, i32, i32
  }
  func.func @transform_1(%arg0: i32) -> (i32, i32) {
    %c0_i32 = arith.constant 0 : i32
    %c0_i32_0 = arith.constant 0 : i32
    %c0_i32_1 = arith.constant 0 : i32
    return %c0_i32, %c0_i32_0 : i32, i32
  }
  func.func @transform_2(%arg0: i32) -> (i32, i32) {
    %c0_i32 = arith.constant 0 : i32
    %c0_i32_0 = arith.constant 0 : i32
    %c0_i32_1 = arith.constant 0 : i32
    return %c0_i32, %c0_i32_0 : i32, i32
  }
  func.func @transform_3(%arg0: i32) -> (i32, i32) {
    %c0_i32 = arith.constant 0 : i32
    %c0_i32_0 = arith.constant 0 : i32
    return %arg0, %c0_i32 : i32, i32
  }
}

module attributes {stable_mosaic.version = 11 : i64} {
  func.func @kernel(%arg0: i32, %arg1: memref<8x360xbf16, #tpu.memory_space<vmem>>, %arg2: memref<360x128xbf16, #tpu.memory_space<vmem>>, %arg3: memref<1x128xf32, #tpu.memory_space<vmem>>, %arg4: memref<128x128xbf16, #tpu.memory_space<vmem>>, %arg5: memref<1x128xf32, #tpu.memory_space<vmem>>, %arg6: memref<8x128xf32, #tpu.memory_space<vmem>>) attributes {dimension_semantics = [#tpu.dimension_semantics<parallel>], iteration_bounds = array<i64: 1>, scalar_prefetch = 0 : i64, scratch_operands = 0 : i64, tpu.core_type = #tpu.core_type<tc>, window_params = [{transform_indices = @transform_0, window_bounds = array<i64: 8, 360>}, {pipeline_mode = #tpu.pipeline_mode<synchronous>, transform_indices = @transform_1, window_bounds = array<i64: 360, 128>}, {pipeline_mode = #tpu.pipeline_mode<synchronous>, transform_indices = @transform_2, window_bounds = array<i64: 1, 128>}, {pipeline_mode = #tpu.pipeline_mode<synchronous>, transform_indices = @transform_3, window_bounds = array<i64: 128, 128>}, {pipeline_mode = #tpu.pipeline_mode<synchronous>, transform_indices = @transform_4, window_bounds = array<i64: 1, 128>}, {transform_indices = @transform_5, window_bounds = array<i64: 8, 128>}]} {
    %c0 = arith.constant 0 : index
    %c0_0 = arith.constant 0 : index
    %0 = vector.load %arg1[%c0, %c0_0] : memref<8x360xbf16, #tpu.memory_space<vmem>>, vector<8x360xbf16>
    %c0_1 = arith.constant 0 : index
    %c0_2 = arith.constant 0 : index
    %1 = vector.load %arg2[%c0_1, %c0_2] : memref<360x128xbf16, #tpu.memory_space<vmem>>, vector<360x128xbf16>
    %cst = arith.constant dense<0.000000e+00> : vector<8x128xf32>
    %2 = tpu.matmul %0, %1, %cst {dimension_numbers = #tpu.dot_dimension_numbers<[1], [0], [0], [1], [0, 0, 1, 1], [], []>} : vector<8x360xbf16>, vector<360x128xbf16>, vector<8x128xf32> -> vector<8x128xf32>
    %c0_3 = arith.constant 0 : index
    %c0_4 = arith.constant 0 : index
    %3 = vector.load %arg3[%c0_3, %c0_4] : memref<1x128xf32, #tpu.memory_space<vmem>>, vector<1x128xf32>
    %4 = vector.broadcast %3 : vector<1x128xf32> to vector<8x128xf32>
    %5 = arith.addf %2, %4 : vector<8x128xf32>
    %cst_5 = arith.constant 0.000000e+00 : f32
    %6 = vector.broadcast %cst_5 : f32 to vector<8x128xf32>
    %7 = arith.maximumf %5, %6 : vector<8x128xf32>
    %8 = arith.truncf %7 : vector<8x128xf32> to vector<8x128xbf16>
    %c0_6 = arith.constant 0 : index
    %c0_7 = arith.constant 0 : index
    %9 = vector.load %arg4[%c0_6, %c0_7] : memref<128x128xbf16, #tpu.memory_space<vmem>>, vector<128x128xbf16>
    %cst_8 = arith.constant dense<0.000000e+00> : vector<8x128xf32>
    %10 = tpu.matmul %8, %9, %cst_8 {dimension_numbers = #tpu.dot_dimension_numbers<[1], [0], [0], [1], [0, 0, 1, 1], [], []>} : vector<8x128xbf16>, vector<128x128xbf16>, vector<8x128xf32> -> vector<8x128xf32>
    %c0_9 = arith.constant 0 : index
    %c0_10 = arith.constant 0 : index
    %11 = vector.load %arg5[%c0_9, %c0_10] : memref<1x128xf32, #tpu.memory_space<vmem>>, vector<1x128xf32>
    %12 = vector.broadcast %11 : vector<1x128xf32> to vector<8x128xf32>
    %13 = arith.addf %10, %12 : vector<8x128xf32>
    %14 = tpu.iota {dimensions = array<i32: 1>} : vector<8x128xi32>
    %c10_i32 = arith.constant 10 : i32
    %15 = vector.broadcast %c10_i32 : i32 to vector<8x128xi32>
    %16 = arith.cmpi slt, %14, %15 : vector<8x128xi32>
    %cst_11 = arith.constant 0xFF800000 : f32
    %17 = vector.broadcast %cst_11 : f32 to vector<8x128xf32>
    %18 = arith.select %16, %13, %17 : vector<8x128xi1>, vector<8x128xf32>
    %cst_12 = arith.constant dense<0xFF800000> : vector<8xf32>
    %19 = vector.multi_reduction <maximumf>, %18, %cst_12 [1] : vector<8x128xf32> to vector<8xf32>
    %20 = vector.shape_cast %19 : vector<8xf32> to vector<8x1xf32>
    %21 = vector.broadcast %20 : vector<8x1xf32> to vector<8x128xf32>
    %22 = arith.subf %18, %21 : vector<8x128xf32>
    %23 = math.exp %22 : vector<8x128xf32>
    %cst_13 = arith.constant dense<0.000000e+00> : vector<8xf32>
    %24 = vector.multi_reduction <add>, %23, %cst_13 [1] : vector<8x128xf32> to vector<8xf32>
    %25 = vector.shape_cast %24 : vector<8xf32> to vector<8x1xf32>
    %26 = math.log %25 : vector<8x1xf32>
    %27 = vector.broadcast %26 : vector<8x1xf32> to vector<8x128xf32>
    %28 = arith.subf %22, %27 : vector<8x128xf32>
    %c0_14 = arith.constant 0 : index
    %c0_15 = arith.constant 0 : index
    %29 = vector.load %arg6[%c0_14, %c0_15] : memref<8x128xf32, #tpu.memory_space<vmem>>, vector<8x128xf32>
    tpu.vector_store %arg6[%c0_14, %c0_15], %28 {strides = array<i32>} : memref<8x128xf32, #tpu.memory_space<vmem>>, vector<8x128xf32>,
    return
  }
  func.func @transform_0(%arg0: i32) -> (i32, i32) {
    %c0_i32 = arith.constant 0 : i32
    %c0_i32_0 = arith.constant 0 : i32
    return %arg0, %c0_i32 : i32, i32
  }
  func.func @transform_1(%arg0: i32) -> (i32, i32) {
    %c0_i32 = arith.constant 0 : i32
    %c0_i32_0 = arith.constant 0 : i32
    %c0_i32_1 = arith.constant 0 : i32
    return %c0_i32, %c0_i32_0 : i32, i32
  }
  func.func @transform_2(%arg0: i32) -> (i32, i32) {
    %c0_i32 = arith.constant 0 : i32
    %c0_i32_0 = arith.constant 0 : i32
    %c0_i32_1 = arith.constant 0 : i32
    return %c0_i32, %c0_i32_0 : i32, i32
  }
  func.func @transform_3(%arg0: i32) -> (i32, i32) {
    %c0_i32 = arith.constant 0 : i32
    %c0_i32_0 = arith.constant 0 : i32
    %c0_i32_1 = arith.constant 0 : i32
    return %c0_i32, %c0_i32_0 : i32, i32
  }
  func.func @transform_4(%arg0: i32) -> (i32, i32) {
    %c0_i32 = arith.constant 0 : i32
    %c0_i32_0 = arith.constant 0 : i32
    %c0_i32_1 = arith.constant 0 : i32
    return %c0_i32, %c0_i32_0 : i32, i32
  }
  func.func @transform_5(%arg0: i32) -> (i32, i32) {
    %c0_i32 = arith.constant 0 : i32
    %c0_i32_0 = arith.constant 0 : i32
    return %arg0, %c0_i32 : i32, i32
  }
}

</mosaic_0001>

<llo_original>
// kernel: net_forward.3
$region0: #{net_forward.3}
  #allocation0 [shape = 'u32[]', space=smem, size = 0x4, offset = 0x4, fixed_abs, tag = 'smem constant byte address 0x4 - core index']
  #allocation1 [shape = 'u32[144,128]{1,0:T(1,128)}', space=vmem, size = 0x12000, scoped, tag = 'internal scratch']
  %s0 = inlined_call_operand.vmem [shape: bf16[9,168,32], index: 0, kind: input, shape index: {}]
  %s1 = inlined_call_operand.vmem [shape: bf16[32,128], index: 1, kind: input, shape index: {}]
  %s2 = inlined_call_operand.vmem [shape: f32[1,128], index: 2, kind: input, shape index: {}]
  %s3 = inlined_call_operand.vmem [shape: f32[168,128], index: 3, kind: output, shape index: {}]
  %s4 = sld [smem:[#allocation0]]
  $region22: #{net_forward.3} parent=0
    _
  %s6 = ssub.s32 1, %s4
  %s7 = scalar_select 0, %s6, %s4
  // Predicated region
  $region2: #{net_forward.3} parent=0 // pred_check
    _
  $region3: #{net_forward.3} parent=0 // pred_check_branch
    %9 = sbr.rel (0) target = $region5
  $region4: #{net_forward.3} parent=0 // pred_region
    _
  $region5: #{net_forward.3} parent=0 // pred_fallthru
    _
  // Predicated region
  $region6: #{net_forward.3} parent=0 // pred_check
    _
  $region7: #{net_forward.3} parent=0 // pred_check_branch
    %11 = sbr.rel (0) target = $region9
  $region8: #{net_forward.3} parent=0 // pred_region
    _
  $region9: #{net_forward.3} parent=0 // pred_fallthru
    _
  // Predicated region
  $region10: #{net_forward.3} parent=0 // pred_check
    _
  $region11: #{net_forward.3} parent=0 // pred_check_branch
    %13 = sbr.rel (0) target = $region13
  $region12: #{net_forward.3} parent=0 // pred_region
    _
  $region13: #{net_forward.3} parent=0 // pred_fallthru
    _
  %v15 = vld [vmem:[%s0] sm:$0xf]
  %v16 = vld [vmem:[%s0 + $0x4] sm:$0xf]
  %v17 = vld [vmem:[%s0 + $0x8] sm:$0xf]
  %v18 = vld [vmem:[%s0 + $0xc] sm:$0xf]
  %v19 = vld [vmem:[%s0 + $0x10] sm:$0xf]
  %v20 = vld [vmem:[%s0 + $0x14] sm:$0xf]
  %v21 = vld [vmem:[%s0 + $0x18] sm:$0xf]
  %v22 = vld [vmem:[%s0 + $0x1c] sm:$0xf]
  %v23 = vld [vmem:[%s0 + $0x20] sm:$0xf]
  %v24 = vld [vmem:[%s0 + $0x24] sm:$0xf]
  %v25 = vld [vmem:[%s0 + $0x28] sm:$0xf]
  %v26 = vld [vmem:[%s0 + $0x2c] sm:$0xf]
  %v27 = vld [vmem:[%s0 + $0x30] sm:$0xf]
  %v28 = vld [vmem:[%s0 + $0x34] sm:$0xf]
  %v29 = vld [vmem:[%s0 + $0x38] sm:$0xf]
  %v30 = vld [vmem:[%s0 + $0x3c] sm:$0xf]
  %v31 = vld [vmem:[%s0 + $0x40] sm:$0xf]
  %v32 = vld [vmem:[%s0 + $0x44] sm:$0xf]
  %v33 = vld [vmem:[%s0 + $0x48] sm:$0xf]
  %v34 = vld [vmem:[%s0 + $0x4c] sm:$0xf]
  %v35 = vld [vmem:[%s0 + $0x50] sm:$0xf]
  %v36 = vld [vmem:[%s1] sm:$0xf]
  %v37 = vld [vmem:[%s1 + $0x4] sm:$0xf]
  %v38 = vld [vmem:[%s1 + $0x8] sm:$0xf]
  %v39 = vld [vmem:[%s1 + $0xc] sm:$0xf]
  %v61 = vunpack.c.l.b16 %v15
  %v62 = vunpack.c.l.b16 %v16
  %v63 = vunpack.c.l.b16 %v17
  %v64 = vunpack.c.l.b16 %v18
  %v65 = vunpack.c.l.b16 %v19
  %v66 = vunpack.c.l.b16 %v20
  %v67 = vunpack.c.l.b16 %v21
  %v68 = vunpack.c.l.b16 %v22
  %v69 = vunpack.c.l.b16 %v23
  %v70 = vunpack.c.l.b16 %v24
  %v71 = vunpack.c.l.b16 %v25
  %v72 = vunpack.c.l.b16 %v26
  %v73 = vunpack.c.l.b16 %v27
  %v74 = vunpack.c.l.b16 %v28
  %v75 = vunpack.c.l.b16 %v29
  %v76 = vunpack.c.l.b16 %v30
  %v77 = vunpack.c.l.b16 %v31
  %v78 = vunpack.c.l.b16 %v32
  %v79 = vunpack.c.l.b16 %v33
  %v80 = vunpack.c.l.b16 %v34
  %v81 = vunpack.c.l.b16 %v35
  %v82 = vpack.c.b16 %v62, %v61
  %v83 = vpack.c.b16 %v64, %v63
  %v84 = vpack.c.b16 %v66, %v65
  %v85 = vpack.c.b16 %v68, %v67
  %v86 = vpack.c.b16 %v70, %v69
  %v87 = vpack.c.b16 %v72, %v71
  %v88 = vpack.c.b16 %v74, %v73
  %v89 = vpack.c.b16 %v76, %v75
  %v90 = vpack.c.b16 %v78, %v77
  %v91 = vpack.c.b16 %v80, %v79
  %v92 = vpack.c.b16 %v81, %v81
  %v97 = vunpack.c.l.b16 %v36
  %v98 = vunpack.c.l.b16 %v37
  %v99 = vunpack.c.l.b16 %v38
  %v100 = vunpack.c.l.b16 %v39
  %v101 = vpack.c.b16 %v98, %v97
  %v102 = vpack.c.b16 %v100, %v99
  %vm105 = vcmask 261120
  %v107 = vsel %vm105, %v82, 0
  %v110 = vsel %vm105, %v83, 0
  %v113 = vsel %vm105, %v84, 0
  %v116 = vsel %vm105, %v85, 0
  %v119 = vsel %vm105, %v86, 0
  %v122 = vsel %vm105, %v87, 0
  %v125 = vsel %vm105, %v88, 0
  %v128 = vsel %vm105, %v89, 0
  %v131 = vsel %vm105, %v90, 0
  %v134 = vsel %vm105, %v91, 0
  %v137 = vsel %vm105, %v92, 0
  %139 = vmatprep.subr.bf16.mxu0 0
  %140 = vmatpush1.bf16.msra.mxu0 0
  %141 = vmatprep.subr.bf16.mxu0 0
  %142 = vmatpush1.bf16.msra.mxu0 0
  %143 = vmatprep.subr.bf16.mxu0 0
  %144 = vmatpush1.bf16.msra.mxu0 0
  %145 = vmatprep.subr.bf16.mxu0 0
  %146 = vmatpush1.bf16.msra.mxu0 0
  %147 = vmatprep.subr.bf16.mxu0 0
  %148 = vmatpush1.bf16.msra.mxu0 0
  %149 = vmatprep.subr.bf16.mxu0 0
  %150 = vmatpush1.bf16.msra.mxu0 0
  %151 = vmatprep.subr.bf16.mxu0 0
  %152 = vmatpush1.bf16.msra.mxu0 %v102
  %153 = vmatprep.subr.bf16.mxu0 0
  %154 = vmatpush1.bf16.msra.mxu0 %v101
  %155 = vmatprep.subr.bf16.mxu0 0
  %156 = vmatpush2.bf16.msra.mxu0 0
  %157 = vmatprep.subr.bf16.mxu0 0
  %158 = vmatpush2.bf16.msra.mxu0 0
  %159 = vmatprep.subr.bf16.mxu0 0
  %160 = vmatpush2.bf16.msra.mxu0 0
  %161 = vmatprep.subr.bf16.mxu0 0
  %162 = vmatpush2.bf16.msra.mxu0 0
  %163 = vmatprep.subr.bf16.mxu0 0
  %164 = vmatpush2.bf16.msra.mxu0 0
  %165 = vmatprep.subr.bf16.mxu0 0
  %166 = vmatpush2.bf16.msra.mxu0 0
  %167 = vmatprep.subr.bf16.mxu0 0
  %168 = vmatpush2.bf16.msra.mxu0 0
  %169 = vmatprep.subr.bf16.mxu0 0
  %170 = vmatpush2.bf16.msra.mxu0 0
  %171 = vmatprep.mubr.bf16.mxu0 0
  %172 = vmatmul.mubr.bf16.gmra.mxu0 %v107
  %v173 = vpop.f32.mrf.mxu0
  %v174 = vadd.f32 0.0, %v173
  %v175 = vpop.f32.mrf.mxu0
  %v176 = vpop.f32.mrf.mxu0
  %v177 = vadd.f32 0.0, %v176
  %v178 = vpop.f32.mrf.mxu0
  %179 = vmatprep.mubr.bf16.mxu0 0
  %180 = vmatmul.mubr.bf16.gmra.mxu0 %v110
  %v181 = vpop.f32.mrf.mxu0
  %v182 = vadd.f32 0.0, %v181
  %v183 = vpop.f32.mrf.mxu0
  %v184 = vpop.f32.mrf.mxu0
  %v185 = vadd.f32 0.0, %v184
  %v186 = vpop.f32.mrf.mxu0
  %187 = vmatprep.mubr.bf16.mxu0 0
  %188 = vmatmul.mubr.bf16.gmra.mxu0 %v113
  %v189 = vpop.f32.mrf.mxu0
  %v190 = vadd.f32 0.0, %v189
  %v191 = vpop.f32.mrf.mxu0
  %v192 = vpop.f32.mrf.mxu0
  %v193 = vadd.f32 0.0, %v192
  %v194 = vpop.f32.mrf.mxu0
  %195 = vmatprep.mubr.bf16.mxu0 0
  %196 = vmatmul.mubr.bf16.gmra.mxu0 %v116
  %v197 = vpop.f32.mrf.mxu0
  %v198 = vadd.f32 0.0, %v197
  %v199 = vpop.f32.mrf.mxu0
  %v200 = vpop.f32.mrf.mxu0
  %v201 = vadd.f32 0.0, %v200
  %v202 = vpop.f32.mrf.mxu0
  %203 = vmatprep.mubr.bf16.mxu0 0
  %204 = vmatmul.mubr.bf16.gmra.mxu0 %v119
  %v205 = vpop.f32.mrf.mxu0
  %v206 = vadd.f32 0.0, %v205
  %v207 = vpop.f32.mrf.mxu0
  %v208 = vpop.f32.mrf.mxu0
  %v209 = vadd.f32 0.0, %v208
  %v210 = vpop.f32.mrf.mxu0
  %211 = vmatprep.mubr.bf16.mxu0 0
  %212 = vmatmul.mubr.bf16.gmra.mxu0 %v122
  %v213 = vpop.f32.mrf.mxu0
  %v214 = vadd.f32 0.0, %v213
  %v215 = vpop.f32.mrf.mxu0
  %v216 = vpop.f32.mrf.mxu0
  %v217 = vadd.f32 0.0, %v216
  %v218 = vpop.f32.mrf.mxu0
  %219 = vmatprep.mubr.bf16.mxu0 0
  %220 = vmatmul.mubr.bf16.gmra.mxu0 %v125
  %v221 = vpop.f32.mrf.mxu0
  %v222 = vadd.f32 0.0, %v221
  %v223 = vpop.f32.mrf.mxu0
  %v224 = vpop.f32.mrf.mxu0
  %v225 = vadd.f32 0.0, %v224
  %v226 = vpop.f32.mrf.mxu0
  %227 = vmatprep.mubr.bf16.mxu0 0
  %228 = vmatmul.mubr.bf16.gmra.mxu0 %v128
  %v229 = vpop.f32.mrf.mxu0
  %v230 = vadd.f32 0.0, %v229
  %v231 = vpop.f32.mrf.mxu0
  %v232 = vpop.f32.mrf.mxu0
  %v233 = vadd.f32 0.0, %v232
  %v234 = vpop.f32.mrf.mxu0
  %235 = vmatprep.mubr.bf16.mxu0 0
  %236 = vmatmul.mubr.bf16.gmra.mxu0 %v131
  %v237 = vpop.f32.mrf.mxu0
  %v238 = vadd.f32 0.0, %v237
  %v239 = vpop.f32.mrf.mxu0
  %v240 = vpop.f32.mrf.mxu0
  %v241 = vadd.f32 0.0, %v240
  %v242 = vpop.f32.mrf.mxu0
  %243 = vmatprep.mubr.bf16.mxu0 0
  %244 = vmatmul.mubr.bf16.gmra.mxu0 %v134
  %v245 = vpop.f32.mrf.mxu0
  %v246 = vadd.f32 0.0, %v245
  %v247 = vpop.f32.mrf.mxu0
  %v248 = vpop.f32.mrf.mxu0
  %v249 = vadd.f32 0.0, %v248
  %v250 = vpop.f32.mrf.mxu0
  %251 = vmatprep.mubr.bf16.mxu0 0
  %252 = vmatmul.mubr.bf16.gmra.mxu0 %v137
  %v253 = vpop.f32.mrf.mxu0
  %v254 = vadd.f32 0.0, %v253
  %v255 = vpop.f32.mrf.mxu0
  %v256 = vpop.f32.mrf.mxu0
  %v257 = vpop.f32.mrf.mxu0
  %258 = vdwg.mxu0
  %s259 = scalar_lea.vmem %s0, 84
  %v260 = vld [vmem:[%s259] sm:$0xf]
  %v261 = vld [vmem:[%s259 + $0x4] sm:$0xf]
  %v262 = vld [vmem:[%s259 + $0x8] sm:$0xf]
  %v263 = vld [vmem:[%s259 + $0xc] sm:$0xf]
  %v264 = vld [vmem:[%s259 + $0x10] sm:$0xf]
  %v265 = vld [vmem:[%s259 + $0x14] sm:$0xf]
  %v266 = vld [vmem:[%s259 + $0x18] sm:$0xf]
  %v267 = vld [vmem:[%s259 + $0x1c] sm:$0xf]
  %v268 = vld [vmem:[%s259 + $0x20] sm:$0xf]
  %v269 = vld [vmem:[%s259 + $0x24] sm:$0xf]
  %v270 = vld [vmem:[%s259 + $0x28] sm:$0xf]
  %v271 = vld [vmem:[%s259 + $0x2c] sm:$0xf]
  %v272 = vld [vmem:[%s259 + $0x30] sm:$0xf]
  %v273 = vld [vmem:[%s259 + $0x34] sm:$0xf]
  %v274 = vld [vmem:[%s259 + $0x38] sm:$0xf]
  %v275 = vld [vmem:[%s259 + $0x3c] sm:$0xf]
  %v276 = vld [vmem:[%s259 + $0x40] sm:$0xf]
  %v277 = vld [vmem:[%s259 + $0x44] sm:$0xf]
  %v278 = vld [vmem:[%s259 + $0x48] sm:$0xf]
  %v279 = vld [vmem:[%s259 + $0x4c] sm:$0xf]
  %v280 = vld [vmem:[%s259 + $0x50] sm:$0xf]
  %v302 = vunpack.c.l.b16 %v260
  %v303 = vunpack.c.l.b16 %v261
  %v304 = vunpack.c.l.b16 %v262
  %v305 = vunpack.c.l.b16 %v263
  %v306 = vunpack.c.l.b16 %v264
  %v307 = vunpack.c.l.b16 %v265
  %v308 = vunpack.c.l.b16 %v266
  %v309 = vunpack.c.l.b16 %v267
  %v310 = vunpack.c.l.b16 %v268
  %v311 = vunpack.c.l.b16 %v269
  %v312 = vunpack.c.l.b16 %v270
  %v313 = vunpack.c.l.b16 %v271
  %v314 = vunpack.c.l.b16 %v272
  %v315 = vunpack.c.l.b16 %v273
  %v316 = vunpack.c.l.b16 %v274
  %v317 = vunpack.c.l.b16 %v275
  %v318 = vunpack.c.l.b16 %v276
  %v319 = vunpack.c.l.b16 %v277
  %v320 = vunpack.c.l.b16 %v278
  %v321 = vunpack.c.l.b16 %v279
  %v322 = vunpack.c.l.b16 %v280
  %v323 = vpack.c.b16 %v303, %v302
  %v324 = vpack.c.b16 %v305, %v304
  %v325 = vpack.c.b16 %v307, %v306
  %v326 = vpack.c.b16 %v309, %v308
  %v327 = vpack.c.b16 %v311, %v310
  %v328 = vpack.c.b16 %v313, %v312
  %v329 = vpack.c.b16 %v315, %v314
  %v330 = vpack.c.b16 %v317, %v316
  %v331 = vpack.c.b16 %v319, %v318
  %v332 = vpack.c.b16 %v321, %v320
  %v333 = vpack.c.b16 %v322, %v322
  %v335 = vsel %vm105, %v323, 0
  %v338 = vsel %vm105, %v324, 0
  %v341 = vsel %vm105, %v325, 0
  %v344 = vsel %vm105, %v326, 0
  %v347 = vsel %vm105, %v327, 0
  %v350 = vsel %vm105, %v328, 0
  %v353 = vsel %vm105, %v329, 0
  %v356 = vsel %vm105, %v330, 0
  %v359 = vsel %vm105, %v331, 0
  %v362 = vsel %vm105, %v332, 0
  %v365 = vsel %vm105, %v333, 0
  %367 = vmatprep.subr.bf16.mxu0 0
  %368 = vmatpush1.bf16.msra.mxu0 0
  %369 = vmatprep.subr.bf16.mxu0 0
  %370 = vmatpush1.bf16.msra.mxu0 0
  %371 = vmatprep.subr.bf16.mxu0 0
  %372 = vmatpush1.bf16.msra.mxu0 0
  %373 = vmatprep.subr.bf16.mxu0 0
  %374 = vmatpush1.bf16.msra.mxu0 0
  %375 = vmatprep.subr.bf16.mxu0 0
  %376 = vmatpush1.bf16.msra.mxu0 0
  %377 = vmatprep.subr.bf16.mxu0 0
  %378 = vmatpush1.bf16.msra.mxu0 0
  %379 = vmatprep.subr.bf16.mxu0 0
  %380 = vmatpush1.bf16.msra.mxu0 %v102
  %381 = vmatprep.subr.bf16.mxu0 0
  %382 = vmatpush1.bf16.msra.mxu0 %v101
  %383 = vmatprep.subr.bf16.mxu0 0
  %384 = vmatpush2.bf16.msra.mxu0 0
  %385 = vmatprep.subr.bf16.mxu0 0
  %386 = vmatpush2.bf16.msra.mxu0 0
  %387 = vmatprep.subr.bf16.mxu0 0
  %388 = vmatpush2.bf16.msra.mxu0 0
  %389 = vmatprep.subr.bf16.mxu0 0
  %390 = vmatpush2.bf16.msra.mxu0 0
  %391 = vmatprep.subr.bf16.mxu0 0
  %392 = vmatpush2.bf16.msra.mxu0 0
  %393 = vmatprep.subr.bf16.mxu0 0
  %394 = vmatpush2.bf16.msra.mxu0 0
  %395 = vmatprep.subr.bf16.mxu0 0
  %396 = vmatpush2.bf16.msra.mxu0 0
  %397 = vmatprep.subr.bf16.mxu0 0
  %398 = vmatpush2.bf16.msra.mxu0 0
  %399 = vmatprep.mubr.bf16.mxu0 0
  %400 = vmatmul.mubr.bf16.gmra.mxu0 %v335
  %v401 = vpop.f32.mrf.mxu0
  %v402 = vadd.f32 0.0, %v401
  %v403 = vpop.f32.mrf.mxu0
  %v404 = vpop.f32.mrf.mxu0
  %v405 = vadd.f32 0.0, %v404
  %v406 = vpop.f32.mrf.mxu0
  %407 = vmatprep.mubr.bf16.mxu0 0
  %408 = vmatmul.mubr.bf16.gmra.mxu0 %v338
  %v409 = vpop.f32.mrf.mxu0
  %v410 = vadd.f32 0.0, %v409
  %v411 = vpop.f32.mrf.mxu0
  %v412 = vpop.f32.mrf.mxu0
  %v413 = vadd.f32 0.0, %v412
  %v414 = vpop.f32.mrf.mxu0
  %415 = vmatprep.mubr.bf16.mxu0 0
  %416 = vmatmul.mubr.bf16.gmra.mxu0 %v341
  %v417 = vpop.f32.mrf.mxu0
  %v418 = vadd.f32 0.0, %v417
  %v419 = vpop.f32.mrf.mxu0
  %v420 = vpop.f32.mrf.mxu0
  %v421 = vadd.f32 0.0, %v420
  %v422 = vpop.f32.mrf.mxu0
  %423 = vmatprep.mubr.bf16.mxu0 0
  %424 = vmatmul.mubr.bf16.gmra.mxu0 %v344
  %v425 = vpop.f32.mrf.mxu0
  %v426 = vadd.f32 0.0, %v425
  %v427 = vpop.f32.mrf.mxu0
  %v428 = vpop.f32.mrf.mxu0
  %v429 = vadd.f32 0.0, %v428
  %v430 = vpop.f32.mrf.mxu0
  %431 = vmatprep.mubr.bf16.mxu0 0
  %432 = vmatmul.mubr.bf16.gmra.mxu0 %v347
  %v433 = vpop.f32.mrf.mxu0
  %v434 = vadd.f32 0.0, %v433
  %v435 = vpop.f32.mrf.mxu0
  %v436 = vpop.f32.mrf.mxu0
  %v437 = vadd.f32 0.0, %v436
  %v438 = vpop.f32.mrf.mxu0
  %439 = vmatprep.mubr.bf16.mxu0 0
  %440 = vmatmul.mubr.bf16.gmra.mxu0 %v350
  %v441 = vpop.f32.mrf.mxu0
  %v442 = vadd.f32 0.0, %v441
  %v443 = vpop.f32.mrf.mxu0
  %v444 = vpop.f32.mrf.mxu0
  %v445 = vadd.f32 0.0, %v444
  %v446 = vpop.f32.mrf.mxu0
  %447 = vmatprep.mubr.bf16.mxu0 0
  %448 = vmatmul.mubr.bf16.gmra.mxu0 %v353
  %v449 = vpop.f32.mrf.mxu0
  %v450 = vadd.f32 0.0, %v449
  %v451 = vpop.f32.mrf.mxu0
  %v452 = vpop.f32.mrf.mxu0
  %v453 = vadd.f32 0.0, %v452
  %v454 = vpop.f32.mrf.mxu0
  %455 = vmatprep.mubr.bf16.mxu0 0
  %456 = vmatmul.mubr.bf16.gmra.mxu0 %v356
  %v457 = vpop.f32.mrf.mxu0
  %v458 = vadd.f32 0.0, %v457
  %v459 = vpop.f32.mrf.mxu0
  %v460 = vpop.f32.mrf.mxu0
  %v461 = vadd.f32 0.0, %v460
  %v462 = vpop.f32.mrf.mxu0
  %463 = vmatprep.mubr.bf16.mxu0 0
  %464 = vmatmul.mubr.bf16.gmra.mxu0 %v359
  %v465 = vpop.f32.mrf.mxu0
  %v466 = vadd.f32 0.0, %v465
  %v467 = vpop.f32.mrf.mxu0
  %v468 = vpop.f32.mrf.mxu0
  %v469 = vadd.f32 0.0, %v468
  %v470 = vpop.f32.mrf.mxu0
  %471 = vmatprep.mubr.bf16.mxu0 0
  %472 = vmatmul.mubr.bf16.gmra.mxu0 %v362
  %v473 = vpop.f32.mrf.mxu0
  %v474 = vadd.f32 0.0, %v473
  %v475 = vpop.f32.mrf.mxu0
  %v476 = vpop.f32.mrf.mxu0
  %v477 = vadd.f32 0.0, %v476
  %v478 = vpop.f32.mrf.mxu0
  %479 = vmatprep.mubr.bf16.mxu0 0
  %480 = vmatmul.mubr.bf16.gmra.mxu0 %v365
  %v481 = vpop.f32.mrf.mxu0
  %v482 = vadd.f32 0.0, %v481
  %v483 = vpop.f32.mrf.mxu0
  %v484 = vpop.f32.mrf.mxu0
  %v485 = vpop.f32.mrf.mxu0
  %486 = vdwg.mxu0
  %v487 = vmax.f32 %v174, %v402
  %v488 = vmax.f32 %v177, %v405
  %v489 = vmax.f32 %v182, %v410
  %v490 = vmax.f32 %v185, %v413
  %v491 = vmax.f32 %v190, %v418
  %v492 = vmax.f32 %v193, %v421
  %v493 = vmax.f32 %v198, %v426
  %v494 = vmax.f32 %v201, %v429
  %v495 = vmax.f32 %v206, %v434
  %v496 = vmax.f32 %v209, %v437
  %v497 = vmax.f32 %v214, %v442
  %v498 = vmax.f32 %v217, %v445
  %v499 = vmax.f32 %v222, %v450
  %v500 = vmax.f32 %v225, %v453
  %v501 = vmax.f32 %v230, %v458
  %v502 = vmax.f32 %v233, %v461
  %v503 = vmax.f32 %v238, %v466
  %v504 = vmax.f32 %v241, %v469
  %v505 = vmax.f32 %v246, %v474
  %v506 = vmax.f32 %v249, %v477
  %v507 = vmax.f32 %v254, %v482
  %s508 = scalar_lea.vmem %s0, 168
  %v509 = vld [vmem:[%s508] sm:$0xf]
  %v510 = vld [vmem:[%s508 + $0x4] sm:$0xf]
  %v511 = vld [vmem:[%s508 + $0x8] sm:$0xf]
  %v512 = vld [vmem:[%s508 + $0xc] sm:$0xf]
  %v513 = vld [vmem:[%s508 + $0x10] sm:$0xf]
  %v514 = vld [vmem:[%s508 + $0x14] sm:$0xf]
  %v515 = vld [vmem:[%s508 + $0x18] sm:$0xf]
  %v516 = vld [vmem:[%s508 + $0x1c] sm:$0xf]
  %v517 = vld [vmem:[%s508 + $0x20] sm:$0xf]
  %v518 = vld [vmem:[%s508 + $0x24] sm:$0xf]
  %v519 = vld [vmem:[%s508 + $0x28] sm:$0xf]
  %v520 = vld [vmem:[%s508 + $0x2c] sm:$0xf]
  %v521 = vld [vmem:[%s508 + $0x30] sm:$0xf]
  %v522 = vld [vmem:[%s508 + $0x34] sm:$0xf]
  %v523 = vld [vmem:[%s508 + $0x38] sm:$0xf]
  %v524 = vld [vmem:[%s508 + $0x3c] sm:$0xf]
  %v525 = vld [vmem:[%s508 + $0x40] sm:$0xf]
  %v526 = vld [vmem:[%s508 + $0x44] sm:$0xf]
  %v527 = vld [vmem:[%s508 + $0x48] sm:$0xf]
  %v528 = vld [vmem:[%s508 + $0x4c] sm:$0xf]
  %v529 = vld [vmem:[%s508 + $0x50] sm:$0xf]
  %v551 = vunpack.c.l.b16 %v509
  %v552 = vunpack.c.l.b16 %v510
  %v553 = vunpack.c.l.b16 %v511
  %v554 = vunpack.c.l.b16 %v512
  %v555 = vunpack.c.l.b16 %v513
  %v556 = vunpack.c.l.b16 %v514
  %v557 = vunpack.c.l.b16 %v515
  %v558 = vunpack.c.l.b16 %v516
  %v559 = vunpack.c.l.b16 %v517
  %v560 = vunpack.c.l.b16 %v518
  %v561 = vunpack.c.l.b16 %v519
  %v562 = vunpack.c.l.b16 %v520
  %v563 = vunpack.c.l.b16 %v521
  %v564 = vunpack.c.l.b16 %v522
  %v565 = vunpack.c.l.b16 %v523
  %v566 = vunpack.c.l.b16 %v524
  %v567 = vunpack.c.l.b16 %v525
  %v568 = vunpack.c.l.b16 %v526
  %v569 = vunpack.c.l.b16 %v527
  %v570 = vunpack.c.l.b16 %v528
  %v571 = vunpack.c.l.b16 %v529
  %v572 = vpack.c.b16 %v552, %v551
  %v573 = vpack.c.b16 %v554, %v553
  %v574 = vpack.c.b16 %v556, %v555
  %v575 = vpack.c.b16 %v558, %v557
  %v576 = vpack.c.b16 %v560, %v559
  %v577 = vpack.c.b16 %v562, %v561
  %v578 = vpack.c.b16 %v564, %v563
  %v579 = vpack.c.b16 %v566, %v565
  %v580 = vpack.c.b16 %v568, %v567
  %v581 = vpack.c.b16 %v570, %v569
  %v582 = vpack.c.b16 %v571, %v571
  %v584 = vsel %vm105, %v572, 0
  %v587 = vsel %vm105, %v573, 0
  %v590 = vsel %vm105, %v574, 0
  %v593 = vsel %vm105, %v575, 0
  %v596 = vsel %vm105, %v576, 0
  %v599 = vsel %vm105, %v577, 0
  %v602 = vsel %vm105, %v578, 0
  %v605 = vsel %vm105, %v579, 0
  %v608 = vsel %vm105, %v580, 0
  %v611 = vsel %vm105, %v581, 0
  %v614 = vsel %vm105, %v582, 0
  %616 = vmatprep.subr.bf16.mxu0 0
  %617 = vmatpush1.bf16.msra.mxu0 0
  %618 = vmatprep.subr.bf16.mxu0 0
  %619 = vmatpush1.bf16.msra.mxu0 0
  %620 = vmatprep.subr.bf16.mxu0 0
  %621 = vmatpush1.bf16.msra.mxu0 0
  %622 = vmatprep.subr.bf16.mxu0 0
  %623 = vmatpush1.bf16.msra.mxu0 0
  %624 = vmatprep.subr.bf16.mxu0 0
  %625 = vmatpush1.bf16.msra.mxu0 0
  %626 = vmatprep.subr.bf16.mxu0 0
  %627 = vmatpush1.bf16.msra.mxu0 0
  %628 = vmatprep.subr.bf16.mxu0 0
  %629 = vmatpush1.bf16.msra.mxu0 %v102
  %630 = vmatprep.subr.bf16.mxu0 0
  %631 = vmatpush1.bf16.msra.mxu0 %v101
  %632 = vmatprep.subr.bf16.mxu0 0
  %633 = vmatpush2.bf16.msra.mxu0 0
  %634 = vmatprep.subr.bf16.mxu0 0
  %635 = vmatpush2.bf16.msra.mxu0 0
  %636 = vmatprep.subr.bf16.mxu0 0
  %637 = vmatpush2.bf16.msra.mxu0 0
  %638 = vmatprep.subr.bf16.mxu0 0
  %639 = vmatpush2.bf16.msra.mxu0 0
  %640 = vmatprep.subr.bf16.mxu0 0
  %641 = vmatpush2.bf16.msra.mxu0 0
  %642 = vmatprep.subr.bf16.mxu0 0
  %643 = vmatpush2.bf16.msra.mxu0 0
  %644 = vmatprep.subr.bf16.mxu0 0
  %645 = vmatpush2.bf16.msra.mxu0 0
  %646 = vmatprep.subr.bf16.mxu0 0
  %647 = vmatpush2.bf16.msra.mxu0 0
  %648 = vmatprep.mubr.bf16.mxu0 0
  %649 = vmatmul.mubr.bf16.gmra.mxu0 %v584
  %v650 = vpop.f32.mrf.mxu0
  %v651 = vadd.f32 0.0, %v650
  %v652 = vpop.f32.mrf.mxu0
  %v653 = vpop.f32.mrf.mxu0
  %v654 = vadd.f32 0.0, %v653
  %v655 = vpop.f32.mrf.mxu0
  %656 = vmatprep.mubr.bf16.mxu0 0
  %657 = vmatmul.mubr.bf16.gmra.mxu0 %v587
  %v658 = vpop.f32.mrf.mxu0
  %v659 = vadd.f32 0.0, %v658
  %v660 = vpop.f32.mrf.mxu0
  %v661 = vpop.f32.mrf.mxu0
  %v662 = vadd.f32 0.0, %v661
  %v663 = vpop.f32.mrf.mxu0
  %664 = vmatprep.mubr.bf16.mxu0 0
  %665 = vmatmul.mubr.bf16.gmra.mxu0 %v590
  %v666 = vpop.f32.mrf.mxu0
  %v667 = vadd.f32 0.0, %v666
  %v668 = vpop.f32.mrf.mxu0
  %v669 = vpop.f32.mrf.mxu0
  %v670 = vadd.f32 0.0, %v669
  %v671 = vpop.f32.mrf.mxu0
  %672 = vmatprep.mubr.bf16.mxu0 0
  %673 = vmatmul.mubr.bf16.gmra.mxu0 %v593
  %v674 = vpop.f32.mrf.mxu0
  %v675 = vadd.f32 0.0, %v674
  %v676 = vpop.f32.mrf.mxu0
  %v677 = vpop.f32.mrf.mxu0
  %v678 = vadd.f32 0.0, %v677
  %v679 = vpop.f32.mrf.mxu0
  %680 = vmatprep.mubr.bf16.mxu0 0
  %681 = vmatmul.mubr.bf16.gmra.mxu0 %v596
  %v682 = vpop.f32.mrf.mxu0
  %v683 = vadd.f32 0.0, %v682
  %v684 = vpop.f32.mrf.mxu0
  %v685 = vpop.f32.mrf.mxu0
  %v686 = vadd.f32 0.0, %v685
  %v687 = vpop.f32.mrf.mxu0
  %688 = vmatprep.mubr.bf16.mxu0 0
  %689 = vmatmul.mubr.bf16.gmra.mxu0 %v599
  %v690 = vpop.f32.mrf.mxu0
  %v691 = vadd.f32 0.0, %v690
  %v692 = vpop.f32.mrf.mxu0
  %v693 = vpop.f32.mrf.mxu0
  %v694 = vadd.f32 0.0, %v693
  %v695 = vpop.f32.mrf.mxu0
  %696 = vmatprep.mubr.bf16.mxu0 0
  %697 = vmatmul.mubr.bf16.gmra.mxu0 %v602
  %v698 = vpop.f32.mrf.mxu0
  %v699 = vadd.f32 0.0, %v698
  %v700 = vpop.f32.mrf.mxu0
  %v701 = vpop.f32.mrf.mxu0
  %v702 = vadd.f32 0.0, %v701
  %v703 = vpop.f32.mrf.mxu0
  %704 = vmatprep.mubr.bf16.mxu0 0
  %705 = vmatmul.mubr.bf16.gmra.mxu0 %v605
  %v706 = vpop.f32.mrf.mxu0
  %v707 = vadd.f32 0.0, %v706
  %v708 = vpop.f32.mrf.mxu0
  %v709 = vpop.f32.mrf.mxu0
  %v710 = vadd.f32 0.0, %v709
  %v711 = vpop.f32.mrf.mxu0
  %712 = vmatprep.mubr.bf16.mxu0 0
  %713 = vmatmul.mubr.bf16.gmra.mxu0 %v608
  %v714 = vpop.f32.mrf.mxu0
  %v715 = vadd.f32 0.0, %v714
  %v716 = vpop.f32.mrf.mxu0
  %v717 = vpop.f32.mrf.mxu0
  %v718 = vadd.f32 0.0, %v717
  %v719 = vpop.f32.mrf.mxu0
  %720 = vmatprep.mubr.bf16.mxu0 0
  %721 = vmatmul.mubr.bf16.gmra.mxu0 %v611
  %v722 = vpop.f32.mrf.mxu0
  %v723 = vadd.f32 0.0, %v722
  %v724 = vpop.f32.mrf.mxu0
  %v725 = vpop.f32.mrf.mxu0
  %v726 = vadd.f32 0.0, %v725
  %v727 = vpop.f32.mrf.mxu0
  %728 = vmatprep.mubr.bf16.mxu0 0
  %729 = vmatmul.mubr.bf16.gmra.mxu0 %v614
  %v730 = vpop.f32.mrf.mxu0
  %v731 = vadd.f32 0.0, %v730
  %v732 = vpop.f32.mrf.mxu0
  %v733 = vpop.f32.mrf.mxu0
  %v734 = vpop.f32.mrf.mxu0
  %735 = vdwg.mxu0
  %v736 = vmax.f32 %v487, %v651
  %v737 = vmax.f32 %v488, %v654
  %v738 = vmax.f32 %v489, %v659
  %v739 = vmax.f32 %v490, %v662
  %v740 = vmax.f32 %v491, %v667
  %v741 = vmax.f32 %v492, %v670
  %v742 = vmax.f32 %v493, %v675
  %v743 = vmax.f32 %v494, %v678
  %v744 = vmax.f32 %v495, %v683
  %v745 = vmax.f32 %v496, %v686
  %v746 = vmax.f32 %v497, %v691
  %v747 = vmax.f32 %v498, %v694
  %v748 = vmax.f32 %v499, %v699
  %v749 = vmax.f32 %v500, %v702
  %v750 = vmax.f32 %v501, %v707
  %v751 = vmax.f32 %v502, %v710
  %v752 = vmax.f32 %v503, %v715
  %v753 = vmax.f32 %v504, %v718
  %v754 = vmax.f32 %v505, %v723
  %v755 = vmax.f32 %v506, %v726
  %v756 = vmax.f32 %v507, %v731
  %s757 = scalar_lea.vmem %s0, 252
  %v758 = vld [vmem:[%s757] sm:$0xf]
  %v759 = vld [vmem:[%s757 + $0x4] sm:$0xf]
  %v760 = vld [vmem:[%s757 + $0x8] sm:$0xf]
  %v761 = vld [vmem:[%s757 + $0xc] sm:$0xf]
  %v762 = vld [vmem:[%s757 + $0x10] sm:$0xf]
  %v763 = vld [vmem:[%s757 + $0x14] sm:$0xf]
  %v764 = vld [vmem:[%s757 + $0x18] sm:$0xf]
  %v765 = vld [vmem:[%s757 + $0x1c] sm:$0xf]
  %v766 = vld [vmem:[%s757 + $0x20] sm:$0xf]
  %v767 = vld [vmem:[%s757 + $0x24] sm:$0xf]
  %v768 = vld [vmem:[%s757 + $0x28] sm:$0xf]
  %v769 = vld [vmem:[%s757 + $0x2c] sm:$0xf]
  %v770 = vld [vmem:[%s757 + $0x30] sm:$0xf]
  %v771 = vld [vmem:[%s757 + $0x34] sm:$0xf]
  %v772 = vld [vmem:[%s757 + $0x38] sm:$0xf]
  %v773 = vld [vmem:[%s757 + $0x3c] sm:$0xf]
  %v774 = vld [vmem:[%s757 + $0x40] sm:$0xf]
  %v775 = vld [vmem:[%s757 + $0x44] sm:$0xf]
  %v776 = vld [vmem:[%s757 + $0x48] sm:$0xf]
  %v777 = vld [vmem:[%s757 + $0x4c] sm:$0xf]
  %v778 = vld [vmem:[%s757 + $0x50] sm:$0xf]
  %v800 = vunpack.c.l.b16 %v758
  %v801 = vunpack.c.l.b16 %v759
  %v802 = vunpack.c.l.b16 %v760
  %v803 = vunpack.c.l.b16 %v761
  %v804 = vunpack.c.l.b16 %v762
  %v805 = vunpack.c.l.b16 %v763
  %v806 = vunpack.c.l.b16 %v764
  %v807 = vunpack.c.l.b16 %v765
  %v808 = vunpack.c.l.b16 %v766
  %v809 = vunpack.c.l.b16 %v767
  %v810 = vunpack.c.l.b16 %v768
  %v811 = vunpack.c.l.b16 %v769
  %v812 = vunpack.c.l.b16 %v770
  %v813 = vunpack.c.l.b16 %v771
  %v814 = vunpack.c.l.b16 %v772
  %v815 = vunpack.c.l.b16 %v773
  %v816 = vunpack.c.l.b16 %v774
  %v817 = vunpack.c.l.b16 %v775
  %v818 = vunpack.c.l.b16 %v776
  %v819 = vunpack.c.l.b16 %v777
  %v820 = vunpack.c.l.b16 %v778
  %v821 = vpack.c.b16 %v801, %v800
  %v822 = vpack.c.b16 %v803, %v802
  %v823 = vpack.c.b16 %v805, %v804
  %v824 = vpack.c.b16 %v807, %v806
  %v825 = vpack.c.b16 %v809, %v808
  %v826 = vpack.c.b16 %v811, %v810
  %v827 = vpack.c.b16 %v813, %v812
  %v828 = vpack.c.b16 %v815, %v814
  %v829 = vpack.c.b16 %v817, %v816
  %v830 = vpack.c.b16 %v819, %v818
  %v831 = vpack.c.b16 %v820, %v820
  %v833 = vsel %vm105, %v821, 0
  %v836 = vsel %vm105, %v822, 0
  %v839 = vsel %vm105, %v823, 0
  %v842 = vsel %vm105, %v824, 0
  %v845 = vsel %vm105, %v825, 0
  %v848 = vsel %vm105, %v826, 0
  %v851 = vsel %vm105, %v827, 0
  %v854 = vsel %vm105, %v828, 0
  %v857 = vsel %vm105, %v829, 0
  %v860 = vsel %vm105, %v830, 0
  %v863 = vsel %vm105, %v831, 0
  %865 = vmatprep.subr.bf16.mxu0 0
  %866 = vmatpush1.bf16.msra.mxu0 0
  %867 = vmatprep.subr.bf16.mxu0 0
  %868 = vmatpush1.bf16.msra.mxu0 0
  %869 = vmatprep.subr.bf16.mxu0 0
  %870 = vmatpush1.bf16.msra.mxu0 0
  %871 = vmatprep.subr.bf16.mxu0 0
  %872 = vmatpush1.bf16.msra.mxu0 0
  %873 = vmatprep.subr.bf16.mxu0 0
  %874 = vmatpush1.bf16.msra.mxu0 0
  %875 = vmatprep.subr.bf16.mxu0 0
  %876 = vmatpush1.bf16.msra.mxu0 0
  %877 = vmatprep.subr.bf16.mxu0 0
  %878 = vmatpush1.bf16.msra.mxu0 %v102
  %879 = vmatprep.subr.bf16.mxu0 0
  %880 = vmatpush1.bf16.msra.mxu0 %v101
  %881 = vmatprep.subr.bf16.mxu0 0
  %882 = vmatpush2.bf16.msra.mxu0 0
  %883 = vmatprep.subr.bf16.mxu0 0
  %884 = vmatpush2.bf16.msra.mxu0 0
  %885 = vmatprep.subr.bf16.mxu0 0
  %886 = vmatpush2.bf16.msra.mxu0 0
  %887 = vmatprep.subr.bf16.mxu0 0
  %888 = vmatpush2.bf16.msra.mxu0 0
  %889 = vmatprep.subr.bf16.mxu0 0
  %890 = vmatpush2.bf16.msra.mxu0 0
  %891 = vmatprep.subr.bf16.mxu0 0
  %892 = vmatpush2.bf16.msra.mxu0 0
  %893 = vmatprep.subr.bf16.mxu0 0
  %894 = vmatpush2.bf16.msra.mxu0 0
  %895 = vmatprep.subr.bf16.mxu0 0
  %896 = vmatpush2.bf16.msra.mxu0 0
  %897 = vmatprep.mubr.bf16.mxu0 0
  %898 = vmatmul.mubr.bf16.gmra.mxu0 %v833
  %v899 = vpop.f32.mrf.mxu0
  %v900 = vadd.f32 0.0, %v899
  %v901 = vpop.f32.mrf.mxu0
  %v902 = vpop.f32.mrf.mxu0
  %v903 = vadd.f32 0.0, %v902
  %v904 = vpop.f32.mrf.mxu0
  %905 = vmatprep.mubr.bf16.mxu0 0
  %906 = vmatmul.mubr.bf16.gmra.mxu0 %v836
  %v907 = vpop.f32.mrf.mxu0
  %v908 = vadd.f32 0.0, %v907
  %v909 = vpop.f32.mrf.mxu0
  %v910 = vpop.f32.mrf.mxu0
  %v911 = vadd.f32 0.0, %v910
  %v912 = vpop.f32.mrf.mxu0
  %913 = vmatprep.mubr.bf16.mxu0 0
  %914 = vmatmul.mubr.bf16.gmra.mxu0 %v839
  %v915 = vpop.f32.mrf.mxu0
  %v916 = vadd.f32 0.0, %v915
  %v917 = vpop.f32.mrf.mxu0
  %v918 = vpop.f32.mrf.mxu0
  %v919 = vadd.f32 0.0, %v918
  %v920 = vpop.f32.mrf.mxu0
  %921 = vmatprep.mubr.bf16.mxu0 0
  %922 = vmatmul.mubr.bf16.gmra.mxu0 %v842
  %v923 = vpop.f32.mrf.mxu0
  %v924 = vadd.f32 0.0, %v923
  %v925 = vpop.f32.mrf.mxu0
  %v926 = vpop.f32.mrf.mxu0
  %v927 = vadd.f32 0.0, %v926
  %v928 = vpop.f32.mrf.mxu0
  %929 = vmatprep.mubr.bf16.mxu0 0
  %930 = vmatmul.mubr.bf16.gmra.mxu0 %v845
  %v931 = vpop.f32.mrf.mxu0
  %v932 = vadd.f32 0.0, %v931
  %v933 = vpop.f32.mrf.mxu0
  %v934 = vpop.f32.mrf.mxu0
  %v935 = vadd.f32 0.0, %v934
  %v936 = vpop.f32.mrf.mxu0
  %937 = vmatprep.mubr.bf16.mxu0 0
  %938 = vmatmul.mubr.bf16.gmra.mxu0 %v848
  %v939 = vpop.f32.mrf.mxu0
  %v940 = vadd.f32 0.0, %v939
  %v941 = vpop.f32.mrf.mxu0
  %v942 = vpop.f32.mrf.mxu0
  %v943 = vadd.f32 0.0, %v942
  %v944 = vpop.f32.mrf.mxu0
  %945 = vmatprep.mubr.bf16.mxu0 0
  %946 = vmatmul.mubr.bf16.gmra.mxu0 %v851
  %v947 = vpop.f32.mrf.mxu0
  %v948 = vadd.f32 0.0, %v947
  %v949 = vpop.f32.mrf.mxu0
  %v950 = vpop.f32.mrf.mxu0
  %v951 = vadd.f32 0.0, %v950
  %v952 = vpop.f32.mrf.mxu0
  %953 = vmatprep.mubr.bf16.mxu0 0
  %954 = vmatmul.mubr.bf16.gmra.mxu0 %v854
  %v955 = vpop.f32.mrf.mxu0
  %v956 = vadd.f32 0.0, %v955
  %v957 = vpop.f32.mrf.mxu0
  %v958 = vpop.f32.mrf.mxu0
  %v959 = vadd.f32 0.0, %v958
  %v960 = vpop.f32.mrf.mxu0
  %961 = vmatprep.mubr.bf16.mxu0 0
  %962 = vmatmul.mubr.bf16.gmra.mxu0 %v857
  %v963 = vpop.f32.mrf.mxu0
  %v964 = vadd.f32 0.0, %v963
  %v965 = vpop.f32.mrf.mxu0
  %v966 = vpop.f32.mrf.mxu0
  %v967 = vadd.f32 0.0, %v966
  %v968 = vpop.f32.mrf.mxu0
  %969 = vmatprep.mubr.bf16.mxu0 0
  %970 = vmatmul.mubr.bf16.gmra.mxu0 %v860
  %v971 = vpop.f32.mrf.mxu0
  %v972 = vadd.f32 0.0, %v971
  %v973 = vpop.f32.mrf.mxu0
  %v974 = vpop.f32.mrf.mxu0
  %v975 = vadd.f32 0.0, %v974
  %v976 = vpop.f32.mrf.mxu0
  %977 = vmatprep.mubr.bf16.mxu0 0
  %978 = vmatmul.mubr.bf16.gmra.mxu0 %v863
  %v979 = vpop.f32.mrf.mxu0
  %v980 = vadd.f32 0.0, %v979
  %v981 = vpop.f32.mrf.mxu0
  %v982 = vpop.f32.mrf.mxu0
  %v983 = vpop.f32.mrf.mxu0
  %984 = vdwg.mxu0
  %v985 = vmax.f32 %v736, %v900
  %v986 = vmax.f32 %v737, %v903
  %v987 = vmax.f32 %v738, %v908
  %v988 = vmax.f32 %v739, %v911
  %v989 = vmax.f32 %v740, %v916
  %v990 = vmax.f32 %v741, %v919
  %v991 = vmax.f32 %v742, %v924
  %v992 = vmax.f32 %v743, %v927
  %v993 = vmax.f32 %v744, %v932
  %v994 = vmax.f32 %v745, %v935
  %v995 = vmax.f32 %v746, %v940
  %v996 = vmax.f32 %v747, %v943
  %v997 = vmax.f32 %v748, %v948
  %v998 = vmax.f32 %v749, %v951
  %v999 = vmax.f32 %v750, %v956
  %v1000 = vmax.f32 %v751, %v959
  %v1001 = vmax.f32 %v752, %v964
  %v1002 = vmax.f32 %v753, %v967
  %v1003 = vmax.f32 %v754, %v972
  %v1004 = vmax.f32 %v755, %v975
  %v1005 = vmax.f32 %v756, %v980
  %s1006 = scalar_lea.vmem %s0, 336
  %v1007 = vld [vmem:[%s1006] sm:$0xf]
  %v1008 = vld [vmem:[%s1006 + $0x4] sm:$0xf]
  %v1009 = vld [vmem:[%s1006 + $0x8] sm:$0xf]
  %v1010 = vld [vmem:[%s1006 + $0xc] sm:$0xf]
  %v1011 = vld [vmem:[%s1006 + $0x10] sm:$0xf]
  %v1012 = vld [vmem:[%s1006 + $0x14] sm:$0xf]
  %v1013 = vld [vmem:[%s1006 + $0x18] sm:$0xf]
  %v1014 = vld [vmem:[%s1006 + $0x1c] sm:$0xf]
  %v1015 = vld [vmem:[%s1006 + $0x20] sm:$0xf]
  %v1016 = vld [vmem:[%s1006 + $0x24] sm:$0xf]
  %v1017 = vld [vmem:[%s1006 + $0x28] sm:$0xf]
  %v1018 = vld [vmem:[%s1006 + $0x2c] sm:$0xf]
  %v1019 = vld [vmem:[%s1006 + $0x30] sm:$0xf]
  %v1020 = vld [vmem:[%s1006 + $0x34] sm:$0xf]
  %v1021 = vld [vmem:[%s1006 + $0x38] sm:$0xf]
  %v1022 = vld [vmem:[%s1006 + $0x3c] sm:$0xf]
  %v1023 = vld [vmem:[%s1006 + $0x40] sm:$0xf]
  %v1024 = vld [vmem:[%s1006 + $0x44] sm:$0xf]
  %v1025 = vld [vmem:[%s1006 + $0x48] sm:$0xf]
  %v1026 = vld [vmem:[%s1006 + $0x4c] sm:$0xf]
  %v1027 = vld [vmem:[%s1006 + $0x50] sm:$0xf]
  %v1049 = vunpack.c.l.b16 %v1007
  %v1050 = vunpack.c.l.b16 %v1008
  %v1051 = vunpack.c.l.b16 %v1009
  %v1052 = vunpack.c.l.b16 %v1010
  %v1053 = vunpack.c.l.b16 %v1011
  %v1054 = vunpack.c.l.b16 %v1012
  %v1055 = vunpack.c.l.b16 %v1013
  %v1056 = vunpack.c.l.b16 %v1014
  %v1057 = vunpack.c.l.b16 %v1015
  %v1058 = vunpack.c.l.b16 %v1016
  %v1059 = vunpack.c.l.b16 %v1017
  %v1060 = vunpack.c.l.b16 %v1018
  %v1061 = vunpack.c.l.b16 %v1019
  %v1062 = vunpack.c.l.b16 %v1020
  %v1063 = vunpack.c.l.b16 %v1021
  %v1064 = vunpack.c.l.b16 %v1022
  %v1065 = vunpack.c.l.b16 %v1023
  %v1066 = vunpack.c.l.b16 %v1024
  %v1067 = vunpack.c.l.b16 %v1025
  %v1068 = vunpack.c.l.b16 %v1026
  %v1069 = vunpack.c.l.b16 %v1027
  %v1070 = vpack.c.b16 %v1050, %v1049
  %v1071 = vpack.c.b16 %v1052, %v1051
  %v1072 = vpack.c.b16 %v1054, %v1053
  %v1073 = vpack.c.b16 %v1056, %v1055
  %v1074 = vpack.c.b16 %v1058, %v1057
  %v1075 = vpack.c.b16 %v1060, %v1059
  %v1076 = vpack.c.b16 %v1062, %v1061
  %v1077 = vpack.c.b16 %v1064, %v1063
  %v1078 = vpack.c.b16 %v1066, %v1065
  %v1079 = vpack.c.b16 %v1068, %v1067
  %v1080 = vpack.c.b16 %v1069, %v1069
  %v1082 = vsel %vm105, %v1070, 0
  %v1085 = vsel %vm105, %v1071, 0
  %v1088 = vsel %vm105, %v1072, 0
  %v1091 = vsel %vm105, %v1073, 0
  %v1094 = vsel %vm105, %v1074, 0
  %v1097 = vsel %vm105, %v1075, 0
  %v1100 = vsel %vm105, %v1076, 0
  %v1103 = vsel %vm105, %v1077, 0
  %v1106 = vsel %vm105, %v1078, 0
  %v1109 = vsel %vm105, %v1079, 0
  %v1112 = vsel %vm105, %v1080, 0
  %1114 = vmatprep.subr.bf16.mxu0 0
  %1115 = vmatpush1.bf16.msra.mxu0 0
  %1116 = vmatprep.subr.bf16.mxu0 0
  %1117 = vmatpush1.bf16.msra.mxu0 0
  %1118 = vmatprep.subr.bf16.mxu0 0
  %1119 = vmatpush1.bf16.msra.mxu0 0
  %1120 = vmatprep.subr.bf16.mxu0 0
  %1121 = vmatpush1.bf16.msra.mxu0 0
  %1122 = vmatprep.subr.bf16.mxu0 0
  %1123 = vmatpush1.bf16.msra.mxu0 0
  %1124 = vmatprep.subr.bf16.mxu0 0
  %1125 = vmatpush1.bf16.msra.mxu0 0
  %1126 = vmatprep.subr.bf16.mxu0 0
  %1127 = vmatpush1.bf16.msra.mxu0 %v102
  %1128 = vmatprep.subr.bf16.mxu0 0
  %1129 = vmatpush1.bf16.msra.mxu0 %v101
  %1130 = vmatprep.subr.bf16.mxu0 0
  %1131 = vmatpush2.bf16.msra.mxu0 0
  %1132 = vmatprep.subr.bf16.mxu0 0
  %1133 = vmatpush2.bf16.msra.mxu0 0
  %1134 = vmatprep.subr.bf16.mxu0 0
  %1135 = vmatpush2.bf16.msra.mxu0 0
  %1136 = vmatprep.subr.bf16.mxu0 0
  %1137 = vmatpush2.bf16.msra.mxu0 0
  %1138 = vmatprep.subr.bf16.mxu0 0
  %1139 = vmatpush2.bf16.msra.mxu0 0
  %1140 = vmatprep.subr.bf16.mxu0 0
  %1141 = vmatpush2.bf16.msra.mxu0 0
  %1142 = vmatprep.subr.bf16.mxu0 0
  %1143 = vmatpush2.bf16.msra.mxu0 0
  %1144 = vmatprep.subr.bf16.mxu0 0
  %1145 = vmatpush2.bf16.msra.mxu0 0
  %1146 = vmatprep.mubr.bf16.mxu0 0
  %1147 = vmatmul.mubr.bf16.gmra.mxu0 %v1082
  %v1148 = vpop.f32.mrf.mxu0
  %v1149 = vadd.f32 0.0, %v1148
  %v1150 = vpop.f32.mrf.mxu0
  %v1151 = vpop.f32.mrf.mxu0
  %v1152 = vadd.f32 0.0, %v1151
  %v1153 = vpop.f32.mrf.mxu0
  %1154 = vmatprep.mubr.bf16.mxu0 0
  %1155 = vmatmul.mubr.bf16.gmra.mxu0 %v1085
  %v1156 = vpop.f32.mrf.mxu0
  %v1157 = vadd.f32 0.0, %v1156
  %v1158 = vpop.f32.mrf.mxu0
  %v1159 = vpop.f32.mrf.mxu0
  %v1160 = vadd.f32 0.0, %v1159
  %v1161 = vpop.f32.mrf.mxu0
  %1162 = vmatprep.mubr.bf16.mxu0 0
  %1163 = vmatmul.mubr.bf16.gmra.mxu0 %v1088
  %v1164 = vpop.f32.mrf.mxu0
  %v1165 = vadd.f32 0.0, %v1164
  %v1166 = vpop.f32.mrf.mxu0
  %v1167 = vpop.f32.mrf.mxu0
  %v1168 = vadd.f32 0.0, %v1167
  %v1169 = vpop.f32.mrf.mxu0
  %1170 = vmatprep.mubr.bf16.mxu0 0
  %1171 = vmatmul.mubr.bf16.gmra.mxu0 %v1091
  %v1172 = vpop.f32.mrf.mxu0
  %v1173 = vadd.f32 0.0, %v1172
  %v1174 = vpop.f32.mrf.mxu0
  %v1175 = vpop.f32.mrf.mxu0
  %v1176 = vadd.f32 0.0, %v1175
  %v1177 = vpop.f32.mrf.mxu0
  %1178 = vmatprep.mubr.bf16.mxu0 0
  %1179 = vmatmul.mubr.bf16.gmra.mxu0 %v1094
  %v1180 = vpop.f32.mrf.mxu0
  %v1181 = vadd.f32 0.0, %v1180
  %v1182 = vpop.f32.mrf.mxu0
  %v1183 = vpop.f32.mrf.mxu0
  %v1184 = vadd.f32 0.0, %v1183
  %v1185 = vpop.f32.mrf.mxu0
  %1186 = vmatprep.mubr.bf16.mxu0 0
  %1187 = vmatmul.mubr.bf16.gmra.mxu0 %v1097
  %v1188 = vpop.f32.mrf.mxu0
  %v1189 = vadd.f32 0.0, %v1188
  %v1190 = vpop.f32.mrf.mxu0
  %v1191 = vpop.f32.mrf.mxu0
  %v1192 = vadd.f32 0.0, %v1191
  %v1193 = vpop.f32.mrf.mxu0
  %1194 = vmatprep.mubr.bf16.mxu0 0
  %1195 = vmatmul.mubr.bf16.gmra.mxu0 %v1100
  %v1196 = vpop.f32.mrf.mxu0
  %v1197 = vadd.f32 0.0, %v1196
  %v1198 = vpop.f32.mrf.mxu0
  %v1199 = vpop.f32.mrf.mxu0
  %v1200 = vadd.f32 0.0, %v1199
  %v1201 = vpop.f32.mrf.mxu0
  %1202 = vmatprep.mubr.bf16.mxu0 0
  %1203 = vmatmul.mubr.bf16.gmra.mxu0 %v1103
  %v1204 = vpop.f32.mrf.mxu0
  %v1205 = vadd.f32 0.0, %v1204
  %v1206 = vpop.f32.mrf.mxu0
  %v1207 = vpop.f32.mrf.mxu0
  %v1208 = vadd.f32 0.0, %v1207
  %v1209 = vpop.f32.mrf.mxu0
  %1210 = vmatprep.mubr.bf16.mxu0 0
  %1211 = vmatmul.mubr.bf16.gmra.mxu0 %v1106
  %v1212 = vpop.f32.mrf.mxu0
  %v1213 = vadd.f32 0.0, %v1212
  %v1214 = vpop.f32.mrf.mxu0
  %v1215 = vpop.f32.mrf.mxu0
  %v1216 = vadd.f32 0.0, %v1215
  %v1217 = vpop.f32.mrf.mxu0
  %1218 = vmatprep.mubr.bf16.mxu0 0
  %1219 = vmatmul.mubr.bf16.gmra.mxu0 %v1109
  %v1220 = vpop.f32.mrf.mxu0
  %v1221 = vadd.f32 0.0, %v1220
  %v1222 = vpop.f32.mrf.mxu0
  %v1223 = vpop.f32.mrf.mxu0
  %v1224 = vadd.f32 0.0, %v1223
  %v1225 = vpop.f32.mrf.mxu0
  %1226 = vmatprep.mubr.bf16.mxu0 0
  %1227 = vmatmul.mubr.bf16.gmra.mxu0 %v1112
  %v1228 = vpop.f32.mrf.mxu0
  %v1229 = vadd.f32 0.0, %v1228
  %v1230 = vpop.f32.mrf.mxu0
  %v1231 = vpop.f32.mrf.mxu0
  %v1232 = vpop.f32.mrf.mxu0
  %1233 = vdwg.mxu0
  %v1234 = vmax.f32 %v985, %v1149
  %v1235 = vmax.f32 %v986, %v1152
  %v1236 = vmax.f32 %v987, %v1157
  %v1237 = vmax.f32 %v988, %v1160
  %v1238 = vmax.f32 %v989, %v1165
  %v1239 = vmax.f32 %v990, %v1168
  %v1240 = vmax.f32 %v991, %v1173
  %v1241 = vmax.f32 %v992, %v1176
  %v1242 = vmax.f32 %v993, %v1181
  %v1243 = vmax.f32 %v994, %v1184
  %v1244 = vmax.f32 %v995, %v1189
  %v1245 = vmax.f32 %v996, %v1192
  %v1246 = vmax.f32 %v997, %v1197
  %v1247 = vmax.f32 %v998, %v1200
  %v1248 = vmax.f32 %v999, %v1205
  %v1249 = vmax.f32 %v1000, %v1208
  %v1250 = vmax.f32 %v1001, %v1213
  %v1251 = vmax.f32 %v1002, %v1216
  %v1252 = vmax.f32 %v1003, %v1221
  %v1253 = vmax.f32 %v1004, %v1224
  %v1254 = vmax.f32 %v1005, %v1229
  %s1255 = scalar_lea.vmem %s0, 420
  %v1256 = vld [vmem:[%s1255] sm:$0xf]
  %v1257 = vld [vmem:[%s1255 + $0x4] sm:$0xf]
  %v1258 = vld [vmem:[%s1255 + $0x8] sm:$0xf]
  %v1259 = vld [vmem:[%s1255 + $0xc] sm:$0xf]
  %v1260 = vld [vmem:[%s1255 + $0x10] sm:$0xf]
  %v1261 = vld [vmem:[%s1255 + $0x14] sm:$0xf]
  %v1262 = vld [vmem:[%s1255 + $0x18] sm:$0xf]
  %v1263 = vld [vmem:[%s1255 + $0x1c] sm:$0xf]
  %v1264 = vld [vmem:[%s1255 + $0x20] sm:$0xf]
  %v1265 = vld [vmem:[%s1255 + $0x24] sm:$0xf]
  %v1266 = vld [vmem:[%s1255 + $0x28] sm:$0xf]
  %v1267 = vld [vmem:[%s1255 + $0x2c] sm:$0xf]
  %v1268 = vld [vmem:[%s1255 + $0x30] sm:$0xf]
  %v1269 = vld [vmem:[%s1255 + $0x34] sm:$0xf]
  %v1270 = vld [vmem:[%s1255 + $0x38] sm:$0xf]
  %v1271 = vld [vmem:[%s1255 + $0x3c] sm:$0xf]
  %v1272 = vld [vmem:[%s1255 + $0x40] sm:$0xf]
  %v1273 = vld [vmem:[%s1255 + $0x44] sm:$0xf]
  %v1274 = vld [vmem:[%s1255 + $0x48] sm:$0xf]
  %v1275 = vld [vmem:[%s1255 + $0x4c] sm:$0xf]
  %v1276 = vld [vmem:[%s1255 + $0x50] sm:$0xf]
  %v1298 = vunpack.c.l.b16 %v1256
  %v1299 = vunpack.c.l.b16 %v1257
  %v1300 = vunpack.c.l.b16 %v1258
  %v1301 = vunpack.c.l.b16 %v1259
  %v1302 = vunpack.c.l.b16 %v1260
  %v1303 = vunpack.c.l.b16 %v1261
  %v1304 = vunpack.c.l.b16 %v1262
  %v1305 = vunpack.c.l.b16 %v1263
  %v1306 = vunpack.c.l.b16 %v1264
  %v1307 = vunpack.c.l.b16 %v1265
  %v1308 = vunpack.c.l.b16 %v1266
  %v1309 = vunpack.c.l.b16 %v1267
  %v1310 = vunpack.c.l.b16 %v1268
  %v1311 = vunpack.c.l.b16 %v1269
  %v1312 = vunpack.c.l.b16 %v1270
  %v1313 = vunpack.c.l.b16 %v1271
  %v1314 = vunpack.c.l.b16 %v1272
  %v1315 = vunpack.c.l.b16 %v1273
  %v1316 = vunpack.c.l.b16 %v1274
  %v1317 = vunpack.c.l.b16 %v1275
  %v1318 = vunpack.c.l.b16 %v1276
  %v1319 = vpack.c.b16 %v1299, %v1298
  %v1320 = vpack.c.b16 %v1301, %v1300
  %v1321 = vpack.c.b16 %v1303, %v1302
  %v1322 = vpack.c.b16 %v1305, %v1304
  %v1323 = vpack.c.b16 %v1307, %v1306
  %v1324 = vpack.c.b16 %v1309, %v1308
  %v1325 = vpack.c.b16 %v1311, %v1310
  %v1326 = vpack.c.b16 %v1313, %v1312
  %v1327 = vpack.c.b16 %v1315, %v1314
  %v1328 = vpack.c.b16 %v1317, %v1316
  %v1329 = vpack.c.b16 %v1318, %v1318
  %v1331 = vsel %vm105, %v1319, 0
  %v1334 = vsel %vm105, %v1320, 0
  %v1337 = vsel %vm105, %v1321, 0
  %v1340 = vsel %vm105, %v1322, 0
  %v1343 = vsel %vm105, %v1323, 0
  %v1346 = vsel %vm105, %v1324, 0
  %v1349 = vsel %vm105, %v1325, 0
  %v1352 = vsel %vm105, %v1326, 0
  %v1355 = vsel %vm105, %v1327, 0
  %v1358 = vsel %vm105, %v1328, 0
  %v1361 = vsel %vm105, %v1329, 0
  %1363 = vmatprep.subr.bf16.mxu0 0
  %1364 = vmatpush1.bf16.msra.mxu0 0
  %1365 = vmatprep.subr.bf16.mxu0 0
  %1366 = vmatpush1.bf16.msra.mxu0 0
  %1367 = vmatprep.subr.bf16.mxu0 0
  %1368 = vmatpush1.bf16.msra.mxu0 0
  %1369 = vmatprep.subr.bf16.mxu0 0
  %1370 = vmatpush1.bf16.msra.mxu0 0
  %1371 = vmatprep.subr.bf16.mxu0 0
  %1372 = vmatpush1.bf16.msra.mxu0 0
  %1373 = vmatprep.subr.bf16.mxu0 0
  %1374 = vmatpush1.bf16.msra.mxu0 0
  %1375 = vmatprep.subr.bf16.mxu0 0
  %1376 = vmatpush1.bf16.msra.mxu0 %v102
  %1377 = vmatprep.subr.bf16.mxu0 0
  %1378 = vmatpush1.bf16.msra.mxu0 %v101
  %1379 = vmatprep.subr.bf16.mxu0 0
  %1380 = vmatpush2.bf16.msra.mxu0 0
  %1381 = vmatprep.subr.bf16.mxu0 0
  %1382 = vmatpush2.bf16.msra.mxu0 0
  %1383 = vmatprep.subr.bf16.mxu0 0
  %1384 = vmatpush2.bf16.msra.mxu0 0
  %1385 = vmatprep.subr.bf16.mxu0 0
  %1386 = vmatpush2.bf16.msra.mxu0 0
  %1387 = vmatprep.subr.bf16.mxu0 0
  %1388 = vmatpush2.bf16.msra.mxu0 0
  %1389 = vmatprep.subr.bf16.mxu0 0
  %1390 = vmatpush2.bf16.msra.mxu0 0
  %1391 = vmatprep.subr.bf16.mxu0 0
  %1392 = vmatpush2.bf16.msra.mxu0 0
  %1393 = vmatprep.subr.bf16.mxu0 0
  %1394 = vmatpush2.bf16.msra.mxu0 0
  %1395 = vmatprep.mubr.bf16.mxu0 0
  %1396 = vmatmul.mubr.bf16.gmra.mxu0 %v1331
  %v1397 = vpop.f32.mrf.mxu0
  %v1398 = vadd.f32 0.0, %v1397
  %v1399 = vpop.f32.mrf.mxu0
  %v1400 = vpop.f32.mrf.mxu0
  %v1401 = vadd.f32 0.0, %v1400
  %v1402 = vpop.f32.mrf.mxu0
  %1403 = vmatprep.mubr.bf16.mxu0 0
  %1404 = vmatmul.mubr.bf16.gmra.mxu0 %v1334
  %v1405 = vpop.f32.mrf.mxu0
  %v1406 = vadd.f32 0.0, %v1405
  %v1407 = vpop.f32.mrf.mxu0
  %v1408 = vpop.f32.mrf.mxu0
  %v1409 = vadd.f32 0.0, %v1408
  %v1410 = vpop.f32.mrf.mxu0
  %1411 = vmatprep.mubr.bf16.mxu0 0
  %1412 = vmatmul.mubr.bf16.gmra.mxu0 %v1337
  %v1413 = vpop.f32.mrf.mxu0
  %v1414 = vadd.f32 0.0, %v1413
  %v1415 = vpop.f32.mrf.mxu0
  %v1416 = vpop.f32.mrf.mxu0
  %v1417 = vadd.f32 0.0, %v1416
  %v1418 = vpop.f32.mrf.mxu0
  %1419 = vmatprep.mubr.bf16.mxu0 0
  %1420 = vmatmul.mubr.bf16.gmra.mxu0 %v1340
  %v1421 = vpop.f32.mrf.mxu0
  %v1422 = vadd.f32 0.0, %v1421
  %v1423 = vpop.f32.mrf.mxu0
  %v1424 = vpop.f32.mrf.mxu0
  %v1425 = vadd.f32 0.0, %v1424
  %v1426 = vpop.f32.mrf.mxu0
  %1427 = vmatprep.mubr.bf16.mxu0 0
  %1428 = vmatmul.mubr.bf16.gmra.mxu0 %v1343
  %v1429 = vpop.f32.mrf.mxu0
  %v1430 = vadd.f32 0.0, %v1429
  %v1431 = vpop.f32.mrf.mxu0
  %v1432 = vpop.f32.mrf.mxu0
  %v1433 = vadd.f32 0.0, %v1432
  %v1434 = vpop.f32.mrf.mxu0
  %1435 = vmatprep.mubr.bf16.mxu0 0
  %1436 = vmatmul.mubr.bf16.gmra.mxu0 %v1346
  %v1437 = vpop.f32.mrf.mxu0
  %v1438 = vadd.f32 0.0, %v1437
  %v1439 = vpop.f32.mrf.mxu0
  %v1440 = vpop.f32.mrf.mxu0
  %v1441 = vadd.f32 0.0, %v1440
  %v1442 = vpop.f32.mrf.mxu0
  %1443 = vmatprep.mubr.bf16.mxu0 0
  %1444 = vmatmul.mubr.bf16.gmra.mxu0 %v1349
  %v1445 = vpop.f32.mrf.mxu0
  %v1446 = vadd.f32 0.0, %v1445
  %v1447 = vpop.f32.mrf.mxu0
  %v1448 = vpop.f32.mrf.mxu0
  %v1449 = vadd.f32 0.0, %v1448
  %v1450 = vpop.f32.mrf.mxu0
  %1451 = vmatprep.mubr.bf16.mxu0 0
  %1452 = vmatmul.mubr.bf16.gmra.mxu0 %v1352
  %v1453 = vpop.f32.mrf.mxu0
  %v1454 = vadd.f32 0.0, %v1453
  %v1455 = vpop.f32.mrf.mxu0
  %v1456 = vpop.f32.mrf.mxu0
  %v1457 = vadd.f32 0.0, %v1456
  %v1458 = vpop.f32.mrf.mxu0
  %1459 = vmatprep.mubr.bf16.mxu0 0
  %1460 = vmatmul.mubr.bf16.gmra.mxu0 %v1355
  %v1461 = vpop.f32.mrf.mxu0
  %v1462 = vadd.f32 0.0, %v1461
  %v1463 = vpop.f32.mrf.mxu0
  %v1464 = vpop.f32.mrf.mxu0
  %v1465 = vadd.f32 0.0, %v1464
  %v1466 = vpop.f32.mrf.mxu0
  %1467 = vmatprep.mubr.bf16.mxu0 0
  %1468 = vmatmul.mubr.bf16.gmra.mxu0 %v1358
  %v1469 = vpop.f32.mrf.mxu0
  %v1470 = vadd.f32 0.0, %v1469
  %v1471 = vpop.f32.mrf.mxu0
  %v1472 = vpop.f32.mrf.mxu0
  %v1473 = vadd.f32 0.0, %v1472
  %v1474 = vpop.f32.mrf.mxu0
  %1475 = vmatprep.mubr.bf16.mxu0 0
  %1476 = vmatmul.mubr.bf16.gmra.mxu0 %v1361
  %v1477 = vpop.f32.mrf.mxu0
  %v1478 = vadd.f32 0.0, %v1477
  %v1479 = vpop.f32.mrf.mxu0
  %v1480 = vpop.f32.mrf.mxu0
  %v1481 = vpop.f32.mrf.mxu0
  %1482 = vdwg.mxu0
  %v1483 = vmax.f32 %v1234, %v1398
  %v1484 = vmax.f32 %v1235, %v1401
  %v1485 = vmax.f32 %v1236, %v1406
  %v1486 = vmax.f32 %v1237, %v1409
  %v1487 = vmax.f32 %v1238, %v1414
  %v1488 = vmax.f32 %v1239, %v1417
  %v1489 = vmax.f32 %v1240, %v1422
  %v1490 = vmax.f32 %v1241, %v1425
  %v1491 = vmax.f32 %v1242, %v1430
  %v1492 = vmax.f32 %v1243, %v1433
  %v1493 = vmax.f32 %v1244, %v1438
  %v1494 = vmax.f32 %v1245, %v1441
  %v1495 = vmax.f32 %v1246, %v1446
  %v1496 = vmax.f32 %v1247, %v1449
  %v1497 = vmax.f32 %v1248, %v1454
  %v1498 = vmax.f32 %v1249, %v1457
  %v1499 = vmax.f32 %v1250, %v1462
  %v1500 = vmax.f32 %v1251, %v1465
  %v1501 = vmax.f32 %v1252, %v1470
  %v1502 = vmax.f32 %v1253, %v1473
  %v1503 = vmax.f32 %v1254, %v1478
  %s1504 = scalar_lea.vmem %s0, 504
  %v1505 = vld [vmem:[%s1504] sm:$0xf]
  %v1506 = vld [vmem:[%s1504 + $0x4] sm:$0xf]
  %v1507 = vld [vmem:[%s1504 + $0x8] sm:$0xf]
  %v1508 = vld [vmem:[%s1504 + $0xc] sm:$0xf]
  %v1509 = vld [vmem:[%s1504 + $0x10] sm:$0xf]
  %v1510 = vld [vmem:[%s1504 + $0x14] sm:$0xf]
  %v1511 = vld [vmem:[%s1504 + $0x18] sm:$0xf]
  %v1512 = vld [vmem:[%s1504 + $0x1c] sm:$0xf]
  %v1513 = vld [vmem:[%s1504 + $0x20] sm:$0xf]
  %v1514 = vld [vmem:[%s1504 + $0x24] sm:$0xf]
  %v1515 = vld [vmem:[%s1504 + $0x28] sm:$0xf]
  %v1516 = vld [vmem:[%s1504 + $0x2c] sm:$0xf]
  %v1517 = vld [vmem:[%s1504 + $0x30] sm:$0xf]
  %v1518 = vld [vmem:[%s1504 + $0x34] sm:$0xf]
  %v1519 = vld [vmem:[%s1504 + $0x38] sm:$0xf]
  %v1520 = vld [vmem:[%s1504 + $0x3c] sm:$0xf]
  %v1521 = vld [vmem:[%s1504 + $0x40] sm:$0xf]
  %v1522 = vld [vmem:[%s1504 + $0x44] sm:$0xf]
  %v1523 = vld [vmem:[%s1504 + $0x48] sm:$0xf]
  %v1524 = vld [vmem:[%s1504 + $0x4c] sm:$0xf]
  %v1525 = vld [vmem:[%s1504 + $0x50] sm:$0xf]
  %v1547 = vunpack.c.l.b16 %v1505
  %v1548 = vunpack.c.l.b16 %v1506
  %v1549 = vunpack.c.l.b16 %v1507
  %v1550 = vunpack.c.l.b16 %v1508
  %v1551 = vunpack.c.l.b16 %v1509
  %v1552 = vunpack.c.l.b16 %v1510
  %v1553 = vunpack.c.l.b16 %v1511
  %v1554 = vunpack.c.l.b16 %v1512
  %v1555 = vunpack.c.l.b16 %v1513
  %v1556 = vunpack.c.l.b16 %v1514
  %v1557 = vunpack.c.l.b16 %v1515
  %v1558 = vunpack.c.l.b16 %v1516
  %v1559 = vunpack.c.l.b16 %v1517
  %v1560 = vunpack.c.l.b16 %v1518
  %v1561 = vunpack.c.l.b16 %v1519
  %v1562 = vunpack.c.l.b16 %v1520
  %v1563 = vunpack.c.l.b16 %v1521
  %v1564 = vunpack.c.l.b16 %v1522
  %v1565 = vunpack.c.l.b16 %v1523
  %v1566 = vunpack.c.l.b16 %v1524
  %v1567 = vunpack.c.l.b16 %v1525
  %v1568 = vpack.c.b16 %v1548, %v1547
  %v1569 = vpack.c.b16 %v1550, %v1549
  %v1570 = vpack.c.b16 %v1552, %v1551
  %v1571 = vpack.c.b16 %v1554, %v1553
  %v1572 = vpack.c.b16 %v1556, %v1555
  %v1573 = vpack.c.b16 %v1558, %v1557
  %v1574 = vpack.c.b16 %v1560, %v1559
  %v1575 = vpack.c.b16 %v1562, %v1561
  %v1576 = vpack.c.b16 %v1564, %v1563
  %v1577 = vpack.c.b16 %v1566, %v1565
  %v1578 = vpack.c.b16 %v1567, %v1567
  %v1580 = vsel %vm105, %v1568, 0
  %v1583 = vsel %vm105, %v1569, 0
  %v1586 = vsel %vm105, %v1570, 0
  %v1589 = vsel %vm105, %v1571, 0
  %v1592 = vsel %vm105, %v1572, 0
  %v1595 = vsel %vm105, %v1573, 0
  %v1598 = vsel %vm105, %v1574, 0
  %v1601 = vsel %vm105, %v1575, 0
  %v1604 = vsel %vm105, %v1576, 0
  %v1607 = vsel %vm105, %v1577, 0
  %v1610 = vsel %vm105, %v1578, 0
  %1612 = vmatprep.subr.bf16.mxu0 0
  %1613 = vmatpush1.bf16.msra.mxu0 0
  %1614 = vmatprep.subr.bf16.mxu0 0
  %1615 = vmatpush1.bf16.msra.mxu0 0
  %1616 = vmatprep.subr.bf16.mxu0 0
  %1617 = vmatpush1.bf16.msra.mxu0 0
  %1618 = vmatprep.subr.bf16.mxu0 0
  %1619 = vmatpush1.bf16.msra.mxu0 0
  %1620 = vmatprep.subr.bf16.mxu0 0
  %1621 = vmatpush1.bf16.msra.mxu0 0
  %1622 = vmatprep.subr.bf16.mxu0 0
  %1623 = vmatpush1.bf16.msra.mxu0 0
  %1624 = vmatprep.subr.bf16.mxu0 0
  %1625 = vmatpush1.bf16.msra.mxu0 %v102
  %1626 = vmatprep.subr.bf16.mxu0 0
  %1627 = vmatpush1.bf16.msra.mxu0 %v101
  %1628 = vmatprep.subr.bf16.mxu0 0
  %1629 = vmatpush2.bf16.msra.mxu0 0
  %1630 = vmatprep.subr.bf16.mxu0 0
  %1631 = vmatpush2.bf16.msra.mxu0 0
  %1632 = vmatprep.subr.bf16.mxu0 0
  %1633 = vmatpush2.bf16.msra.mxu0 0
  %1634 = vmatprep.subr.bf16.mxu0 0
  %1635 = vmatpush2.bf16.msra.mxu0 0
  %1636 = vmatprep.subr.bf16.mxu0 0
  %1637 = vmatpush2.bf16.msra.mxu0 0
  %1638 = vmatprep.subr.bf16.mxu0 0
  %1639 = vmatpush2.bf16.msra.mxu0 0
  %1640 = vmatprep.subr.bf16.mxu0 0
  %1641 = vmatpush2.bf16.msra.mxu0 0
  %1642 = vmatprep.subr.bf16.mxu0 0
  %1643 = vmatpush2.bf16.msra.mxu0 0
  %1644 = vmatprep.mubr.bf16.mxu0 0
  %1645 = vmatmul.mubr.bf16.gmra.mxu0 %v1580
  %v1646 = vpop.f32.mrf.mxu0
  %v1647 = vadd.f32 0.0, %v1646
  %v1648 = vpop.f32.mrf.mxu0
  %v1649 = vpop.f32.mrf.mxu0
  %v1650 = vadd.f32 0.0, %v1649
  %v1651 = vpop.f32.mrf.mxu0
  %1652 = vmatprep.mubr.bf16.mxu0 0
  %1653 = vmatmul.mubr.bf16.gmra.mxu0 %v1583
  %v1654 = vpop.f32.mrf.mxu0
  %v1655 = vadd.f32 0.0, %v1654
  %v1656 = vpop.f32.mrf.mxu0
  %v1657 = vpop.f32.mrf.mxu0
  %v1658 = vadd.f32 0.0, %v1657
  %v1659 = vpop.f32.mrf.mxu0
  %1660 = vmatprep.mubr.bf16.mxu0 0
  %1661 = vmatmul.mubr.bf16.gmra.mxu0 %v1586
  %v1662 = vpop.f32.mrf.mxu0
  %v1663 = vadd.f32 0.0, %v1662
  %v1664 = vpop.f32.mrf.mxu0
  %v1665 = vpop.f32.mrf.mxu0
  %v1666 = vadd.f32 0.0, %v1665
  %v1667 = vpop.f32.mrf.mxu0
  %1668 = vmatprep.mubr.bf16.mxu0 0
  %1669 = vmatmul.mubr.bf16.gmra.mxu0 %v1589
  %v1670 = vpop.f32.mrf.mxu0
  %v1671 = vadd.f32 0.0, %v1670
  %v1672 = vpop.f32.mrf.mxu0
  %v1673 = vpop.f32.mrf.mxu0
  %v1674 = vadd.f32 0.0, %v1673
  %v1675 = vpop.f32.mrf.mxu0
  %1676 = vmatprep.mubr.bf16.mxu0 0
  %1677 = vmatmul.mubr.bf16.gmra.mxu0 %v1592
  %v1678 = vpop.f32.mrf.mxu0
  %v1679 = vadd.f32 0.0, %v1678
  %v1680 = vpop.f32.mrf.mxu0
  %v1681 = vpop.f32.mrf.mxu0
  %v1682 = vadd.f32 0.0, %v1681
  %v1683 = vpop.f32.mrf.mxu0
  %1684 = vmatprep.mubr.bf16.mxu0 0
  %1685 = vmatmul.mubr.bf16.gmra.mxu0 %v1595
  %v1686 = vpop.f32.mrf.mxu0
  %v1687 = vadd.f32 0.0, %v1686
  %v1688 = vpop.f32.mrf.mxu0
  %v1689 = vpop.f32.mrf.mxu0
  %v1690 = vadd.f32 0.0, %v1689
  %v1691 = vpop.f32.mrf.mxu0
  %1692 = vmatprep.mubr.bf16.mxu0 0
  %1693 = vmatmul.mubr.bf16.gmra.mxu0 %v1598
  %v1694 = vpop.f32.mrf.mxu0
  %v1695 = vadd.f32 0.0, %v1694
  %v1696 = vpop.f32.mrf.mxu0
  %v1697 = vpop.f32.mrf.mxu0
  %v1698 = vadd.f32 0.0, %v1697
  %v1699 = vpop.f32.mrf.mxu0
  %1700 = vmatprep.mubr.bf16.mxu0 0
  %1701 = vmatmul.mubr.bf16.gmra.mxu0 %v1601
  %v1702 = vpop.f32.mrf.mxu0
  %v1703 = vadd.f32 0.0, %v1702
  %v1704 = vpop.f32.mrf.mxu0
  %v1705 = vpop.f32.mrf.mxu0
  %v1706 = vadd.f32 0.0, %v1705
  %v1707 = vpop.f32.mrf.mxu0
  %1708 = vmatprep.mubr.bf16.mxu0 0
  %1709 = vmatmul.mubr.bf16.gmra.mxu0 %v1604
  %v1710 = vpop.f32.mrf.mxu0
  %v1711 = vadd.f32 0.0, %v1710
  %v1712 = vpop.f32.mrf.mxu0
  %v1713 = vpop.f32.mrf.mxu0
  %v1714 = vadd.f32 0.0, %v1713
  %v1715 = vpop.f32.mrf.mxu0
  %1716 = vmatprep.mubr.bf16.mxu0 0
  %1717 = vmatmul.mubr.bf16.gmra.mxu0 %v1607
  %v1718 = vpop.f32.mrf.mxu0
  %v1719 = vadd.f32 0.0, %v1718
  %v1720 = vpop.f32.mrf.mxu0
  %v1721 = vpop.f32.mrf.mxu0
  %v1722 = vadd.f32 0.0, %v1721
  %v1723 = vpop.f32.mrf.mxu0
  %1724 = vmatprep.mubr.bf16.mxu0 0
  %1725 = vmatmul.mubr.bf16.gmra.mxu0 %v1610
  %v1726 = vpop.f32.mrf.mxu0
  %v1727 = vadd.f32 0.0, %v1726
  %v1728 = vpop.f32.mrf.mxu0
  %v1729 = vpop.f32.mrf.mxu0
  %v1730 = vpop.f32.mrf.mxu0
  %1731 = vdwg.mxu0
  %v1732 = vmax.f32 %v1483, %v1647
  %v1733 = vmax.f32 %v1484, %v1650
  %v1734 = vmax.f32 %v1485, %v1655
  %v1735 = vmax.f32 %v1486, %v1658
  %v1736 = vmax.f32 %v1487, %v1663
  %v1737 = vmax.f32 %v1488, %v1666
  %v1738 = vmax.f32 %v1489, %v1671
  %v1739 = vmax.f32 %v1490, %v1674
  %v1740 = vmax.f32 %v1491, %v1679
  %v1741 = vmax.f32 %v1492, %v1682
  %v1742 = vmax.f32 %v1493, %v1687
  %v1743 = vmax.f32 %v1494, %v1690
  %v1744 = vmax.f32 %v1495, %v1695
  %v1745 = vmax.f32 %v1496, %v1698
  %v1746 = vmax.f32 %v1497, %v1703
  %v1747 = vmax.f32 %v1498, %v1706
  %v1748 = vmax.f32 %v1499, %v1711
  %v1749 = vmax.f32 %v1500, %v1714
  %v1750 = vmax.f32 %v1501, %v1719
  %v1751 = vmax.f32 %v1502, %v1722
  %v1752 = vmax.f32 %v1503, %v1727
  %s1753 = scalar_lea.vmem %s0, 588
  %v1754 = vld [vmem:[%s1753] sm:$0xf]
  %v1755 = vld [vmem:[%s1753 + $0x4] sm:$0xf]
  %v1756 = vld [vmem:[%s1753 + $0x8] sm:$0xf]
  %v1757 = vld [vmem:[%s1753 + $0xc] sm:$0xf]
  %v1758 = vld [vmem:[%s1753 + $0x10] sm:$0xf]
  %v1759 = vld [vmem:[%s1753 + $0x14] sm:$0xf]
  %v1760 = vld [vmem:[%s1753 + $0x18] sm:$0xf]
  %v1761 = vld [vmem:[%s1753 + $0x1c] sm:$0xf]
  %v1762 = vld [vmem:[%s1753 + $0x20] sm:$0xf]
  %v1763 = vld [vmem:[%s1753 + $0x24] sm:$0xf]
  %v1764 = vld [vmem:[%s1753 + $0x28] sm:$0xf]
  %v1765 = vld [vmem:[%s1753 + $0x2c] sm:$0xf]
  %v1766 = vld [vmem:[%s1753 + $0x30] sm:$0xf]
  %v1767 = vld [vmem:[%s1753 + $0x34] sm:$0xf]
  %v1768 = vld [vmem:[%s1753 + $0x38] sm:$0xf]
  %v1769 = vld [vmem:[%s1753 + $0x3c] sm:$0xf]
  %v1770 = vld [vmem:[%s1753 + $0x40] sm:$0xf]
  %v1771 = vld [vmem:[%s1753 + $0x44] sm:$0xf]
  %v1772 = vld [vmem:[%s1753 + $0x48] sm:$0xf]
  %v1773 = vld [vmem:[%s1753 + $0x4c] sm:$0xf]
  %v1774 = vld [vmem:[%s1753 + $0x50] sm:$0xf]
  %v1796 = vunpack.c.l.b16 %v1754
  %v1797 = vunpack.c.l.b16 %v1755
  %v1798 = vunpack.c.l.b16 %v1756
  %v1799 = vunpack.c.l.b16 %v1757
  %v1800 = vunpack.c.l.b16 %v1758
  %v1801 = vunpack.c.l.b16 %v1759
  %v1802 = vunpack.c.l.b16 %v1760
  %v1803 = vunpack.c.l.b16 %v1761
  %v1804 = vunpack.c.l.b16 %v1762
  %v1805 = vunpack.c.l.b16 %v1763
  %v1806 = vunpack.c.l.b16 %v1764
  %v1807 = vunpack.c.l.b16 %v1765
  %v1808 = vunpack.c.l.b16 %v1766
  %v1809 = vunpack.c.l.b16 %v1767
  %v1810 = vunpack.c.l.b16 %v1768
  %v1811 = vunpack.c.l.b16 %v1769
  %v1812 = vunpack.c.l.b16 %v1770
  %v1813 = vunpack.c.l.b16 %v1771
  %v1814 = vunpack.c.l.b16 %v1772
  %v1815 = vunpack.c.l.b16 %v1773
  %v1816 = vunpack.c.l.b16 %v1774
  %v1817 = vpack.c.b16 %v1797, %v1796
  %v1818 = vpack.c.b16 %v1799, %v1798
  %v1819 = vpack.c.b16 %v1801, %v1800
  %v1820 = vpack.c.b16 %v1803, %v1802
  %v1821 = vpack.c.b16 %v1805, %v1804
  %v1822 = vpack.c.b16 %v1807, %v1806
  %v1823 = vpack.c.b16 %v1809, %v1808
  %v1824 = vpack.c.b16 %v1811, %v1810
  %v1825 = vpack.c.b16 %v1813, %v1812
  %v1826 = vpack.c.b16 %v1815, %v1814
  %v1827 = vpack.c.b16 %v1816, %v1816
  %v1829 = vsel %vm105, %v1817, 0
  %v1832 = vsel %vm105, %v1818, 0
  %v1835 = vsel %vm105, %v1819, 0
  %v1838 = vsel %vm105, %v1820, 0
  %v1841 = vsel %vm105, %v1821, 0
  %v1844 = vsel %vm105, %v1822, 0
  %v1847 = vsel %vm105, %v1823, 0
  %v1850 = vsel %vm105, %v1824, 0
  %v1853 = vsel %vm105, %v1825, 0
  %v1856 = vsel %vm105, %v1826, 0
  %v1859 = vsel %vm105, %v1827, 0
  %1861 = vmatprep.subr.bf16.mxu0 0
  %1862 = vmatpush1.bf16.msra.mxu0 0
  %1863 = vmatprep.subr.bf16.mxu0 0
  %1864 = vmatpush1.bf16.msra.mxu0 0
  %1865 = vmatprep.subr.bf16.mxu0 0
  %1866 = vmatpush1.bf16.msra.mxu0 0
  %1867 = vmatprep.subr.bf16.mxu0 0
  %1868 = vmatpush1.bf16.msra.mxu0 0
  %1869 = vmatprep.subr.bf16.mxu0 0
  %1870 = vmatpush1.bf16.msra.mxu0 0
  %1871 = vmatprep.subr.bf16.mxu0 0
  %1872 = vmatpush1.bf16.msra.mxu0 0
  %1873 = vmatprep.subr.bf16.mxu0 0
  %1874 = vmatpush1.bf16.msra.mxu0 %v102
  %1875 = vmatprep.subr.bf16.mxu0 0
  %1876 = vmatpush1.bf16.msra.mxu0 %v101
  %1877 = vmatprep.subr.bf16.mxu0 0
  %1878 = vmatpush2.bf16.msra.mxu0 0
  %1879 = vmatprep.subr.bf16.mxu0 0
  %1880 = vmatpush2.bf16.msra.mxu0 0
  %1881 = vmatprep.subr.bf16.mxu0 0
  %1882 = vmatpush2.bf16.msra.mxu0 0
  %1883 = vmatprep.subr.bf16.mxu0 0
  %1884 = vmatpush2.bf16.msra.mxu0 0
  %1885 = vmatprep.subr.bf16.mxu0 0
  %1886 = vmatpush2.bf16.msra.mxu0 0
  %1887 = vmatprep.subr.bf16.mxu0 0
  %1888 = vmatpush2.bf16.msra.mxu0 0
  %1889 = vmatprep.subr.bf16.mxu0 0
  %1890 = vmatpush2.bf16.msra.mxu0 0
  %1891 = vmatprep.subr.bf16.mxu0 0
  %1892 = vmatpush2.bf16.msra.mxu0 0
  %1893 = vmatprep.mubr.bf16.mxu0 0
  %1894 = vmatmul.mubr.bf16.gmra.mxu0 %v1829
  %v1895 = vpop.f32.mrf.mxu0
  %v1896 = vadd.f32 0.0, %v1895
  %v1897 = vpop.f32.mrf.mxu0
  %v1898 = vpop.f32.mrf.mxu0
  %v1899 = vadd.f32 0.0, %v1898
  %v1900 = vpop.f32.mrf.mxu0
  %1901 = vmatprep.mubr.bf16.mxu0 0
  %1902 = vmatmul.mubr.bf16.gmra.mxu0 %v1832
  %v1903 = vpop.f32.mrf.mxu0
  %v1904 = vadd.f32 0.0, %v1903
  %v1905 = vpop.f32.mrf.mxu0
  %v1906 = vpop.f32.mrf.mxu0
  %v1907 = vadd.f32 0.0, %v1906
  %v1908 = vpop.f32.mrf.mxu0
  %1909 = vmatprep.mubr.bf16.mxu0 0
  %1910 = vmatmul.mubr.bf16.gmra.mxu0 %v1835
  %v1911 = vpop.f32.mrf.mxu0
  %v1912 = vadd.f32 0.0, %v1911
  %v1913 = vpop.f32.mrf.mxu0
  %v1914 = vpop.f32.mrf.mxu0
  %v1915 = vadd.f32 0.0, %v1914
  %v1916 = vpop.f32.mrf.mxu0
  %1917 = vmatprep.mubr.bf16.mxu0 0
  %1918 = vmatmul.mubr.bf16.gmra.mxu0 %v1838
  %v1919 = vpop.f32.mrf.mxu0
  %v1920 = vadd.f32 0.0, %v1919
  %v1921 = vpop.f32.mrf.mxu0
  %v1922 = vpop.f32.mrf.mxu0
  %v1923 = vadd.f32 0.0, %v1922
  %v1924 = vpop.f32.mrf.mxu0
  %1925 = vmatprep.mubr.bf16.mxu0 0
  %1926 = vmatmul.mubr.bf16.gmra.mxu0 %v1841
  %v1927 = vpop.f32.mrf.mxu0
  %v1928 = vadd.f32 0.0, %v1927
  %v1929 = vpop.f32.mrf.mxu0
  %v1930 = vpop.f32.mrf.mxu0
  %v1931 = vadd.f32 0.0, %v1930
  %v1932 = vpop.f32.mrf.mxu0
  %1933 = vmatprep.mubr.bf16.mxu0 0
  %1934 = vmatmul.mubr.bf16.gmra.mxu0 %v1844
  %v1935 = vpop.f32.mrf.mxu0
  %v1936 = vadd.f32 0.0, %v1935
  %v1937 = vpop.f32.mrf.mxu0
  %v1938 = vpop.f32.mrf.mxu0
  %v1939 = vadd.f32 0.0, %v1938
  %v1940 = vpop.f32.mrf.mxu0
  %1941 = vmatprep.mubr.bf16.mxu0 0
  %1942 = vmatmul.mubr.bf16.gmra.mxu0 %v1847
  %v1943 = vpop.f32.mrf.mxu0
  %v1944 = vadd.f32 0.0, %v1943
  %v1945 = vpop.f32.mrf.mxu0
  %v1946 = vpop.f32.mrf.mxu0
  %v1947 = vadd.f32 0.0, %v1946
  %v1948 = vpop.f32.mrf.mxu0
  %1949 = vmatprep.mubr.bf16.mxu0 0
  %1950 = vmatmul.mubr.bf16.gmra.mxu0 %v1850
  %v1951 = vpop.f32.mrf.mxu0
  %v1952 = vadd.f32 0.0, %v1951
  %v1953 = vpop.f32.mrf.mxu0
  %v1954 = vpop.f32.mrf.mxu0
  %v1955 = vadd.f32 0.0, %v1954
  %v1956 = vpop.f32.mrf.mxu0
  %1957 = vmatprep.mubr.bf16.mxu0 0
  %1958 = vmatmul.mubr.bf16.gmra.mxu0 %v1853
  %v1959 = vpop.f32.mrf.mxu0
  %v1960 = vadd.f32 0.0, %v1959
  %v1961 = vpop.f32.mrf.mxu0
  %v1962 = vpop.f32.mrf.mxu0
  %v1963 = vadd.f32 0.0, %v1962
  %v1964 = vpop.f32.mrf.mxu0
  %1965 = vmatprep.mubr.bf16.mxu0 0
  %1966 = vmatmul.mubr.bf16.gmra.mxu0 %v1856
  %v1967 = vpop.f32.mrf.mxu0
  %v1968 = vadd.f32 0.0, %v1967
  %v1969 = vpop.f32.mrf.mxu0
  %v1970 = vpop.f32.mrf.mxu0
  %v1971 = vadd.f32 0.0, %v1970
  %v1972 = vpop.f32.mrf.mxu0
  %1973 = vmatprep.mubr.bf16.mxu0 0
  %1974 = vmatmul.mubr.bf16.gmra.mxu0 %v1859
  %v1975 = vpop.f32.mrf.mxu0
  %v1976 = vadd.f32 0.0, %v1975
  %v1977 = vpop.f32.mrf.mxu0
  %v1978 = vpop.f32.mrf.mxu0
  %v1979 = vpop.f32.mrf.mxu0
  %1980 = vdwg.mxu0
  %v1981 = vmax.f32 %v1732, %v1896
  %v1982 = vmax.f32 %v1733, %v1899
  %v1983 = vmax.f32 %v1734, %v1904
  %v1984 = vmax.f32 %v1735, %v1907
  %v1985 = vmax.f32 %v1736, %v1912
  %v1986 = vmax.f32 %v1737, %v1915
  %v1987 = vmax.f32 %v1738, %v1920
  %v1988 = vmax.f32 %v1739, %v1923
  %v1989 = vmax.f32 %v1740, %v1928
  %v1990 = vmax.f32 %v1741, %v1931
  %v1991 = vmax.f32 %v1742, %v1936
  %v1992 = vmax.f32 %v1743, %v1939
  %v1993 = vmax.f32 %v1744, %v1944
  %v1994 = vmax.f32 %v1745, %v1947
  %v1995 = vmax.f32 %v1746, %v1952
  %v1996 = vmax.f32 %v1747, %v1955
  %v1997 = vmax.f32 %v1748, %v1960
  %v1998 = vmax.f32 %v1749, %v1963
  %v1999 = vmax.f32 %v1750, %v1968
  %v2000 = vmax.f32 %v1751, %v1971
  %v2001 = vmax.f32 %v1752, %v1976
  %s2002 = scalar_lea.vmem %s0, 672
  %v2003 = vld [vmem:[%s2002] sm:$0xf]
  %v2004 = vld [vmem:[%s2002 + $0x4] sm:$0xf]
  %v2005 = vld [vmem:[%s2002 + $0x8] sm:$0xf]
  %v2006 = vld [vmem:[%s2002 + $0xc] sm:$0xf]
  %v2007 = vld [vmem:[%s2002 + $0x10] sm:$0xf]
  %v2008 = vld [vmem:[%s2002 + $0x14] sm:$0xf]
  %v2009 = vld [vmem:[%s2002 + $0x18] sm:$0xf]
  %v2010 = vld [vmem:[%s2002 + $0x1c] sm:$0xf]
  %v2011 = vld [vmem:[%s2002 + $0x20] sm:$0xf]
  %v2012 = vld [vmem:[%s2002 + $0x24] sm:$0xf]
  %v2013 = vld [vmem:[%s2002 + $0x28] sm:$0xf]
  %v2014 = vld [vmem:[%s2002 + $0x2c] sm:$0xf]
  %v2015 = vld [vmem:[%s2002 + $0x30] sm:$0xf]
  %v2016 = vld [vmem:[%s2002 + $0x34] sm:$0xf]
  %v2017 = vld [vmem:[%s2002 + $0x38] sm:$0xf]
  %v2018 = vld [vmem:[%s2002 + $0x3c] sm:$0xf]
  %v2019 = vld [vmem:[%s2002 + $0x40] sm:$0xf]
  %v2020 = vld [vmem:[%s2002 + $0x44] sm:$0xf]
  %v2021 = vld [vmem:[%s2002 + $0x48] sm:$0xf]
  %v2022 = vld [vmem:[%s2002 + $0x4c] sm:$0xf]
  %v2023 = vld [vmem:[%s2002 + $0x50] sm:$0xf]
  %v2045 = vunpack.c.l.b16 %v2003
  %v2046 = vunpack.c.l.b16 %v2004
  %v2047 = vunpack.c.l.b16 %v2005
  %v2048 = vunpack.c.l.b16 %v2006
  %v2049 = vunpack.c.l.b16 %v2007
  %v2050 = vunpack.c.l.b16 %v2008
  %v2051 = vunpack.c.l.b16 %v2009
  %v2052 = vunpack.c.l.b16 %v2010
  %v2053 = vunpack.c.l.b16 %v2011
  %v2054 = vunpack.c.l.b16 %v2012
  %v2055 = vunpack.c.l.b16 %v2013
  %v2056 = vunpack.c.l.b16 %v2014
  %v2057 = vunpack.c.l.b16 %v2015
  %v2058 = vunpack.c.l.b16 %v2016
  %v2059 = vunpack.c.l.b16 %v2017
  %v2060 = vunpack.c.l.b16 %v2018
  %v2061 = vunpack.c.l.b16 %v2019
  %v2062 = vunpack.c.l.b16 %v2020
  %v2063 = vunpack.c.l.b16 %v2021
  %v2064 = vunpack.c.l.b16 %v2022
  %v2065 = vunpack.c.l.b16 %v2023
  %v2066 = vpack.c.b16 %v2046, %v2045
  %v2067 = vpack.c.b16 %v2048, %v2047
  %v2068 = vpack.c.b16 %v2050, %v2049
  %v2069 = vpack.c.b16 %v2052, %v2051
  %v2070 = vpack.c.b16 %v2054, %v2053
  %v2071 = vpack.c.b16 %v2056, %v2055
  %v2072 = vpack.c.b16 %v2058, %v2057
  %v2073 = vpack.c.b16 %v2060, %v2059
  %v2074 = vpack.c.b16 %v2062, %v2061
  %v2075 = vpack.c.b16 %v2064, %v2063
  %v2076 = vpack.c.b16 %v2065, %v2065
  %v2078 = vsel %vm105, %v2066, 0
  %v2081 = vsel %vm105, %v2067, 0
  %v2084 = vsel %vm105, %v2068, 0
  %v2087 = vsel %vm105, %v2069, 0
  %v2090 = vsel %vm105, %v2070, 0
  %v2093 = vsel %vm105, %v2071, 0
  %v2096 = vsel %vm105, %v2072, 0
  %v2099 = vsel %vm105, %v2073, 0
  %v2102 = vsel %vm105, %v2074, 0
  %v2105 = vsel %vm105, %v2075, 0
  %v2108 = vsel %vm105, %v2076, 0
  %2110 = vmatprep.subr.bf16.mxu0 0
  %2111 = vmatpush1.bf16.msra.mxu0 0
  %2112 = vmatprep.subr.bf16.mxu0 0
  %2113 = vmatpush1.bf16.msra.mxu0 0
  %2114 = vmatprep.subr.bf16.mxu0 0
  %2115 = vmatpush1.bf16.msra.mxu0 0
  %2116 = vmatprep.subr.bf16.mxu0 0
  %2117 = vmatpush1.bf16.msra.mxu0 0
  %2118 = vmatprep.subr.bf16.mxu0 0
  %2119 = vmatpush1.bf16.msra.mxu0 0
  %2120 = vmatprep.subr.bf16.mxu0 0
  %2121 = vmatpush1.bf16.msra.mxu0 0
  %2122 = vmatprep.subr.bf16.mxu0 0
  %2123 = vmatpush1.bf16.msra.mxu0 %v102
  %2124 = vmatprep.subr.bf16.mxu0 0
  %2125 = vmatpush1.bf16.msra.mxu0 %v101
  %2126 = vmatprep.subr.bf16.mxu0 0
  %2127 = vmatpush2.bf16.msra.mxu0 0
  %2128 = vmatprep.subr.bf16.mxu0 0
  %2129 = vmatpush2.bf16.msra.mxu0 0
  %2130 = vmatprep.subr.bf16.mxu0 0
  %2131 = vmatpush2.bf16.msra.mxu0 0
  %2132 = vmatprep.subr.bf16.mxu0 0
  %2133 = vmatpush2.bf16.msra.mxu0 0
  %2134 = vmatprep.subr.bf16.mxu0 0
  %2135 = vmatpush2.bf16.msra.mxu0 0
  %2136 = vmatprep.subr.bf16.mxu0 0
  %2137 = vmatpush2.bf16.msra.mxu0 0
  %2138 = vmatprep.subr.bf16.mxu0 0
  %2139 = vmatpush2.bf16.msra.mxu0 0
  %2140 = vmatprep.subr.bf16.mxu0 0
  %2141 = vmatpush2.bf16.msra.mxu0 0
  %2142 = vmatprep.mubr.bf16.mxu0 0
  %2143 = vmatmul.mubr.bf16.gmra.mxu0 %v2078
  %v2144 = vpop.f32.mrf.mxu0
  %v2145 = vadd.f32 0.0, %v2144
  %v2146 = vpop.f32.mrf.mxu0
  %v2147 = vpop.f32.mrf.mxu0
  %v2148 = vadd.f32 0.0, %v2147
  %v2149 = vpop.f32.mrf.mxu0
  %2150 = vmatprep.mubr.bf16.mxu0 0
  %2151 = vmatmul.mubr.bf16.gmra.mxu0 %v2081
  %v2152 = vpop.f32.mrf.mxu0
  %v2153 = vadd.f32 0.0, %v2152
  %v2154 = vpop.f32.mrf.mxu0
  %v2155 = vpop.f32.mrf.mxu0
  %v2156 = vadd.f32 0.0, %v2155
  %v2157 = vpop.f32.mrf.mxu0
  %2158 = vmatprep.mubr.bf16.mxu0 0
  %2159 = vmatmul.mubr.bf16.gmra.mxu0 %v2084
  %v2160 = vpop.f32.mrf.mxu0
  %v2161 = vadd.f32 0.0, %v2160
  %v2162 = vpop.f32.mrf.mxu0
  %v2163 = vpop.f32.mrf.mxu0
  %v2164 = vadd.f32 0.0, %v2163
  %v2165 = vpop.f32.mrf.mxu0
  %2166 = vmatprep.mubr.bf16.mxu0 0
  %2167 = vmatmul.mubr.bf16.gmra.mxu0 %v2087
  %v2168 = vpop.f32.mrf.mxu0
  %v2169 = vadd.f32 0.0, %v2168
  %v2170 = vpop.f32.mrf.mxu0
  %v2171 = vpop.f32.mrf.mxu0
  %v2172 = vadd.f32 0.0, %v2171
  %v2173 = vpop.f32.mrf.mxu0
  %2174 = vmatprep.mubr.bf16.mxu0 0
  %2175 = vmatmul.mubr.bf16.gmra.mxu0 %v2090
  %v2176 = vpop.f32.mrf.mxu0
  %v2177 = vadd.f32 0.0, %v2176
  %v2178 = vpop.f32.mrf.mxu0
  %v2179 = vpop.f32.mrf.mxu0
  %v2180 = vadd.f32 0.0, %v2179
  %v2181 = vpop.f32.mrf.mxu0
  %2182 = vmatprep.mubr.bf16.mxu0 0
  %2183 = vmatmul.mubr.bf16.gmra.mxu0 %v2093
  %v2184 = vpop.f32.mrf.mxu0
  %v2185 = vadd.f32 0.0, %v2184
  %v2186 = vpop.f32.mrf.mxu0
  %v2187 = vpop.f32.mrf.mxu0
  %v2188 = vadd.f32 0.0, %v2187
  %v2189 = vpop.f32.mrf.mxu0
  %2190 = vmatprep.mubr.bf16.mxu0 0
  %2191 = vmatmul.mubr.bf16.gmra.mxu0 %v2096
  %v2192 = vpop.f32.mrf.mxu0
  %v2193 = vadd.f32 0.0, %v2192
  %v2194 = vpop.f32.mrf.mxu0
  %v2195 = vpop.f32.mrf.mxu0
  %v2196 = vadd.f32 0.0, %v2195
  %v2197 = vpop.f32.mrf.mxu0
  %2198 = vmatprep.mubr.bf16.mxu0 0
  %2199 = vmatmul.mubr.bf16.gmra.mxu0 %v2099
  %v2200 = vpop.f32.mrf.mxu0
  %v2201 = vadd.f32 0.0, %v2200
  %v2202 = vpop.f32.mrf.mxu0
  %v2203 = vpop.f32.mrf.mxu0
  %v2204 = vadd.f32 0.0, %v2203
  %v2205 = vpop.f32.mrf.mxu0
  %2206 = vmatprep.mubr.bf16.mxu0 0
  %2207 = vmatmul.mubr.bf16.gmra.mxu0 %v2102
  %v2208 = vpop.f32.mrf.mxu0
  %v2209 = vadd.f32 0.0, %v2208
  %v2210 = vpop.f32.mrf.mxu0
  %v2211 = vpop.f32.mrf.mxu0
  %v2212 = vadd.f32 0.0, %v2211
  %v2213 = vpop.f32.mrf.mxu0
  %2214 = vmatprep.mubr.bf16.mxu0 0
  %2215 = vmatmul.mubr.bf16.gmra.mxu0 %v2105
  %v2216 = vpop.f32.mrf.mxu0
  %v2217 = vadd.f32 0.0, %v2216
  %v2218 = vpop.f32.mrf.mxu0
  %v2219 = vpop.f32.mrf.mxu0
  %v2220 = vadd.f32 0.0, %v2219
  %v2221 = vpop.f32.mrf.mxu0
  %2222 = vmatprep.mubr.bf16.mxu0 0
  %2223 = vmatmul.mubr.bf16.gmra.mxu0 %v2108
  %v2224 = vpop.f32.mrf.mxu0
  %v2225 = vadd.f32 0.0, %v2224
  %v2226 = vpop.f32.mrf.mxu0
  %v2227 = vpop.f32.mrf.mxu0
  %v2228 = vpop.f32.mrf.mxu0
  %2229 = vdwg.mxu0
  %v2230 = vmax.f32 %v1981, %v2145
  %v2231 = vmax.f32 %v1982, %v2148
  %v2232 = vmax.f32 %v1983, %v2153
  %v2233 = vmax.f32 %v1984, %v2156
  %v2234 = vmax.f32 %v1985, %v2161
  %v2235 = vmax.f32 %v1986, %v2164
  %v2236 = vmax.f32 %v1987, %v2169
  %v2237 = vmax.f32 %v1988, %v2172
  %v2238 = vmax.f32 %v1989, %v2177
  %v2239 = vmax.f32 %v1990, %v2180
  %v2240 = vmax.f32 %v1991, %v2185
  %v2241 = vmax.f32 %v1992, %v2188
  %v2242 = vmax.f32 %v1993, %v2193
  %v2243 = vmax.f32 %v1994, %v2196
  %v2244 = vmax.f32 %v1995, %v2201
  %v2245 = vmax.f32 %v1996, %v2204
  %v2246 = vmax.f32 %v1997, %v2209
  %v2247 = vmax.f32 %v1998, %v2212
  %v2248 = vmax.f32 %v1999, %v2217
  %v2249 = vmax.f32 %v2000, %v2220
  %v2250 = vmax.f32 %v2001, %v2225
  %v2251 = vld [vmem:[%s2] sm:$0x1]
  %v2253 = vlaneseq
  %v2254 = vshrl.u32 %v2253, 7
  %v2255 = vsub.s32 0, %v2254
  %v2256 = vrot.slane %v2251, %v2255
  %v2258 = vadd.f32 %v2230, %v2256
  %v2259 = vadd.f32 %v2231, %v2256
  %v2260 = vadd.f32 %v2232, %v2256
  %v2261 = vadd.f32 %v2233, %v2256
  %v2262 = vadd.f32 %v2234, %v2256
  %v2263 = vadd.f32 %v2235, %v2256
  %v2264 = vadd.f32 %v2236, %v2256
  %v2265 = vadd.f32 %v2237, %v2256
  %v2266 = vadd.f32 %v2238, %v2256
  %v2267 = vadd.f32 %v2239, %v2256
  %v2268 = vadd.f32 %v2240, %v2256
  %v2269 = vadd.f32 %v2241, %v2256
  %v2270 = vadd.f32 %v2242, %v2256
  %v2271 = vadd.f32 %v2243, %v2256
  %v2272 = vadd.f32 %v2244, %v2256
  %v2273 = vadd.f32 %v2245, %v2256
  %v2274 = vadd.f32 %v2246, %v2256
  %v2275 = vadd.f32 %v2247, %v2256
  %v2276 = vadd.f32 %v2248, %v2256
  %v2277 = vadd.f32 %v2249, %v2256
  %v2278 = vadd.f32 %v2250, %v2256
  %v2279 = vmax.f32 %v2258, 0.0
  %v2280 = vmax.f32 %v2259, 0.0
  %v2281 = vmax.f32 %v2260, 0.0
  %v2282 = vmax.f32 %v2261, 0.0
  %v2283 = vmax.f32 %v2262, 0.0
  %v2284 = vmax.f32 %v2263, 0.0
  %v2285 = vmax.f32 %v2264, 0.0
  %v2286 = vmax.f32 %v2265, 0.0
  %v2287 = vmax.f32 %v2266, 0.0
  %v2288 = vmax.f32 %v2267, 0.0
  %v2289 = vmax.f32 %v2268, 0.0
  %v2290 = vmax.f32 %v2269, 0.0
  %v2291 = vmax.f32 %v2270, 0.0
  %v2292 = vmax.f32 %v2271, 0.0
  %v2293 = vmax.f32 %v2272, 0.0
  %v2294 = vmax.f32 %v2273, 0.0
  %v2295 = vmax.f32 %v2274, 0.0
  %v2296 = vmax.f32 %v2275, 0.0
  %v2297 = vmax.f32 %v2276, 0.0
  %v2298 = vmax.f32 %v2277, 0.0
  %v2299 = vmax.f32 %v2278, 0.0
  %2300 = vst [vmem:[%s3] sm:$0xff] %v2279
  %2301 = vst [vmem:[%s3 + $0x8] sm:$0xff] %v2280
  %2302 = vst [vmem:[%s3 + $0x10] sm:$0xff] %v2281
  %2303 = vst [vmem:[%s3 + $0x18] sm:$0xff] %v2282
  %2304 = vst [vmem:[%s3 + $0x20] sm:$0xff] %v2283
  %2305 = vst [vmem:[%s3 + $0x28] sm:$0xff] %v2284
  %2306 = vst [vmem:[%s3 + $0x30] sm:$0xff] %v2285
  %2307 = vst [vmem:[%s3 + $0x38] sm:$0xff] %v2286
  %2308 = vst [vmem:[%s3 + $0x40] sm:$0xff] %v2287
  %2309 = vst [vmem:[%s3 + $0x48] sm:$0xff] %v2288
  %2310 = vst [vmem:[%s3 + $0x50] sm:$0xff] %v2289
  %2311 = vst [vmem:[%s3 + $0x58] sm:$0xff] %v2290
  %2312 = vst [vmem:[%s3 + $0x60] sm:$0xff] %v2291
  %2313 = vst [vmem:[%s3 + $0x68] sm:$0xff] %v2292
  %2314 = vst [vmem:[%s3 + $0x70] sm:$0xff] %v2293
  %2315 = vst [vmem:[%s3 + $0x78] sm:$0xff] %v2294
  %2316 = vst [vmem:[%s3 + $0x80] sm:$0xff] %v2295
  %2317 = vst [vmem:[%s3 + $0x88] sm:$0xff] %v2296
  %2318 = vst [vmem:[%s3 + $0x90] sm:$0xff] %v2297
  %2319 = vst [vmem:[%s3 + $0x98] sm:$0xff] %v2298
  %2320 = vst [vmem:[%s3 + $0xa0] sm:$0xff] %v2299
  // Predicated region
  $region14: #{net_forward.3} parent=0 // pred_check
    _
  $region15: #{net_forward.3} parent=0 // pred_check_branch
    %2322 = sbr.rel (0) target = $region17
  $region16: #{net_forward.3} parent=0 // pred_region
    _
  $region17: #{net_forward.3} parent=0 // pred_fallthru
    _
  // Predicated region
  $region18: #{net_forward.3} parent=0 // pred_check
    _
  $region19: #{net_forward.3} parent=0 // pred_check_branch
    %2324 = sbr.rel (0) target = $region21
  $region20: #{net_forward.3} parent=0 // pred_region
    _
  $region21: #{net_forward.3} parent=0 // pred_fallthru
    _

// kernel: net_forward.4
$region0: #{net_forward.4}
  #allocation0 [shape = 'u32[]', space=smem, size = 0x4, offset = 0x4, fixed_abs, tag = 'smem constant byte address 0x4 - core index']
  #allocation1 [shape = 'u32[144,128]{1,0:T(1,128)}', space=vmem, size = 0x12000, scoped, tag = 'internal scratch']
  %s0 = inlined_call_operand.vmem [shape: bf16[9,24,256], index: 0, kind: input, shape index: {}]
  %s1 = inlined_call_operand.vmem [shape: bf16[256,128], index: 1, kind: input, shape index: {}]
  %s2 = inlined_call_operand.vmem [shape: f32[1,128], index: 2, kind: input, shape index: {}]
  %s3 = inlined_call_operand.vmem [shape: f32[24,128], index: 3, kind: output, shape index: {}]
  %s4 = sld [smem:[#allocation0]]
  $region22: #{net_forward.4} parent=0
    _
  %s6 = ssub.s32 1, %s4
  %s7 = scalar_select 0, %s6, %s4
  // Predicated region
  $region2: #{net_forward.4} parent=0 // pred_check
    _
  $region3: #{net_forward.4} parent=0 // pred_check_branch
    %9 = sbr.rel (0) target = $region5
  $region4: #{net_forward.4} parent=0 // pred_region
    _
  $region5: #{net_forward.4} parent=0 // pred_fallthru
    _
  // Predicated region
  $region6: #{net_forward.4} parent=0 // pred_check
    _
  $region7: #{net_forward.4} parent=0 // pred_check_branch
    %11 = sbr.rel (0) target = $region9
  $region8: #{net_forward.4} parent=0 // pred_region
    _
  $region9: #{net_forward.4} parent=0 // pred_fallthru
    _
  // Predicated region
  $region10: #{net_forward.4} parent=0 // pred_check
    _
  $region11: #{net_forward.4} parent=0 // pred_check_branch
    %13 = sbr.rel (0) target = $region13
  $region12: #{net_forward.4} parent=0 // pred_region
    _
  $region13: #{net_forward.4} parent=0 // pred_fallthru
    _
  %v15 = vld [vmem:[%s0] sm:$0xff]
  %v16 = vld [vmem:[%s0 + $0x8] sm:$0xff]
  %v17 = vld [vmem:[%s0 + $0x10] sm:$0xff]
  %v18 = vld [vmem:[%s1] sm:$0xf]
  %v19 = vld [vmem:[%s1 + $0x4] sm:$0xf]
  %v20 = vld [vmem:[%s1 + $0x8] sm:$0xf]
  %v21 = vld [vmem:[%s1 + $0xc] sm:$0xf]
  %v22 = vld [vmem:[%s1 + $0x10] sm:$0xf]
  %v23 = vld [vmem:[%s1 + $0x14] sm:$0xf]
  %v24 = vld [vmem:[%s1 + $0x18] sm:$0xf]
  %v25 = vld [vmem:[%s1 + $0x1c] sm:$0xf]
  %v26 = vld [vmem:[%s1 + $0x20] sm:$0xf]
  %v27 = vld [vmem:[%s1 + $0x24] sm:$0xf]
  %v28 = vld [vmem:[%s1 + $0x28] sm:$0xf]
  %v29 = vld [vmem:[%s1 + $0x2c] sm:$0xf]
  %v30 = vld [vmem:[%s1 + $0x30] sm:$0xf]
  %v31 = vld [vmem:[%s1 + $0x34] sm:$0xf]
  %v32 = vld [vmem:[%s1 + $0x38] sm:$0xf]
  %v33 = vld [vmem:[%s1 + $0x3c] sm:$0xf]
  %v34 = vld [vmem:[%s1 + $0x40] sm:$0xf]
  %v35 = vld [vmem:[%s1 + $0x44] sm:$0xf]
  %v36 = vld [vmem:[%s1 + $0x48] sm:$0xf]
  %v37 = vld [vmem:[%s1 + $0x4c] sm:$0xf]
  %v38 = vld [vmem:[%s1 + $0x50] sm:$0xf]
  %v39 = vld [vmem:[%s1 + $0x54] sm:$0xf]
  %v40 = vld [vmem:[%s1 + $0x58] sm:$0xf]
  %v41 = vld [vmem:[%s1 + $0x5c] sm:$0xf]
  %v42 = vld [vmem:[%s1 + $0x60] sm:$0xf]
  %v43 = vld [vmem:[%s1 + $0x64] sm:$0xf]
  %v44 = vld [vmem:[%s1 + $0x68] sm:$0xf]
  %v45 = vld [vmem:[%s1 + $0x6c] sm:$0xf]
  %v46 = vld [vmem:[%s1 + $0x70] sm:$0xf]
  %v47 = vld [vmem:[%s1 + $0x74] sm:$0xf]
  %v48 = vld [vmem:[%s1 + $0x78] sm:$0xf]
  %v49 = vld [vmem:[%s1 + $0x7c] sm:$0xf]
  %v53 = vunpack.c.l.b16 %v15
  %v54 = vunpack.c.h.b16 %v15
  %v55 = vunpack.c.l.b16 %v16
  %v56 = vunpack.c.h.b16 %v16
  %v57 = vunpack.c.l.b16 %v17
  %v58 = vunpack.c.h.b16 %v17
  %v59 = vpack.c.b16 %v55, %v53
  %v60 = vpack.c.b16 %v56, %v54
  %v61 = vpack.c.b16 %v57, %v57
  %v62 = vpack.c.b16 %v58, %v58
  %v99 = vunpack.c.l.b16 %v18
  %v100 = vunpack.c.l.b16 %v19
  %v101 = vunpack.c.l.b16 %v20
  %v102 = vunpack.c.l.b16 %v21
  %v103 = vunpack.c.l.b16 %v22
  %v104 = vunpack.c.l.b16 %v23
  %v105 = vunpack.c.l.b16 %v24
  %v106 = vunpack.c.l.b16 %v25
  %v107 = vunpack.c.l.b16 %v26
  %v108 = vunpack.c.l.b16 %v27
  %v109 = vunpack.c.l.b16 %v28
  %v110 = vunpack.c.l.b16 %v29
  %v111 = vunpack.c.l.b16 %v30
  %v112 = vunpack.c.l.b16 %v31
  %v113 = vunpack.c.l.b16 %v32
  %v114 = vunpack.c.l.b16 %v33
  %v115 = vunpack.c.l.b16 %v34
  %v116 = vunpack.c.l.b16 %v35
  %v117 = vunpack.c.l.b16 %v36
  %v118 = vunpack.c.l.b16 %v37
  %v119 = vunpack.c.l.b16 %v38
  %v120 = vunpack.c.l.b16 %v39
  %v121 = vunpack.c.l.b16 %v40
  %v122 = vunpack.c.l.b16 %v41
  %v123 = vunpack.c.l.b16 %v42
  %v124 = vunpack.c.l.b16 %v43
  %v125 = vunpack.c.l.b16 %v44
  %v126 = vunpack.c.l.b16 %v45
  %v127 = vunpack.c.l.b16 %v46
  %v128 = vunpack.c.l.b16 %v47
  %v129 = vunpack.c.l.b16 %v48
  %v130 = vunpack.c.l.b16 %v49
  %v131 = vpack.c.b16 %v100, %v99
  %v132 = vpack.c.b16 %v102, %v101
  %v133 = vpack.c.b16 %v104, %v103
  %v134 = vpack.c.b16 %v106, %v105
  %v135 = vpack.c.b16 %v108, %v107
  %v136 = vpack.c.b16 %v110, %v109
  %v137 = vpack.c.b16 %v112, %v111
  %v138 = vpack.c.b16 %v114, %v113
  %v139 = vpack.c.b16 %v116, %v115
  %v140 = vpack.c.b16 %v118, %v117
  %v141 = vpack.c.b16 %v120, %v119
  %v142 = vpack.c.b16 %v122, %v121
  %v143 = vpack.c.b16 %v124, %v123
  %v144 = vpack.c.b16 %v126, %v125
  %v145 = vpack.c.b16 %v128, %v127
  %v146 = vpack.c.b16 %v130, %v129
  %163 = vmatprep.subr.bf16.mxu0 0
  %164 = vmatpush1.bf16.msra.mxu0 %v138
  %165 = vmatprep.subr.bf16.mxu0 0
  %166 = vmatpush1.bf16.msra.mxu0 %v137
  %167 = vmatprep.subr.bf16.mxu0 0
  %168 = vmatpush1.bf16.msra.mxu0 %v136
  %169 = vmatprep.subr.bf16.mxu0 0
  %170 = vmatpush1.bf16.msra.mxu0 %v135
  %171 = vmatprep.subr.bf16.mxu0 0
  %172 = vmatpush1.bf16.msra.mxu0 %v134
  %173 = vmatprep.subr.bf16.mxu0 0
  %174 = vmatpush1.bf16.msra.mxu0 %v133
  %175 = vmatprep.subr.bf16.mxu0 0
  %176 = vmatpush1.bf16.msra.mxu0 %v132
  %177 = vmatprep.subr.bf16.mxu0 0
  %178 = vmatpush1.bf16.msra.mxu0 %v131
  %179 = vmatprep.subr.bf16.mxu0 0
  %180 = vmatpush2.bf16.msra.mxu0 %v146
  %181 = vmatprep.subr.bf16.mxu0 0
  %182 = vmatpush2.bf16.msra.mxu0 %v145
  %183 = vmatprep.subr.bf16.mxu0 0
  %184 = vmatpush2.bf16.msra.mxu0 %v144
  %185 = vmatprep.subr.bf16.mxu0 0
  %186 = vmatpush2.bf16.msra.mxu0 %v143
  %187 = vmatprep.subr.bf16.mxu0 0
  %188 = vmatpush2.bf16.msra.mxu0 %v142
  %189 = vmatprep.subr.bf16.mxu0 0
  %190 = vmatpush2.bf16.msra.mxu0 %v141
  %191 = vmatprep.subr.bf16.mxu0 0
  %192 = vmatpush2.bf16.msra.mxu0 %v140
  %193 = vmatprep.subr.bf16.mxu0 0
  %194 = vmatpush2.bf16.msra.mxu0 %v139
  %195 = vmatprep.mubr.bf16.mxu0 %v60
  %196 = vmatmul.mubr.bf16.gmra.mxu0 %v59
  %v197 = vpop.f32.mrf.mxu0
  %v198 = vadd.f32 0.0, %v197
  %v199 = vpop.f32.mrf.mxu0
  %v200 = vpop.f32.mrf.mxu0
  %v201 = vadd.f32 0.0, %v200
  %v202 = vpop.f32.mrf.mxu0
  %203 = vmatprep.mubr.bf16.mxu0 %v62
  %204 = vmatmul.mubr.bf16.gmra.mxu0 %v61
  %v205 = vpop.f32.mrf.mxu0
  %v206 = vadd.f32 0.0, %v205
  %v207 = vpop.f32.mrf.mxu0
  %v208 = vpop.f32.mrf.mxu0
  %v209 = vpop.f32.mrf.mxu0
  %210 = vdwg.mxu0
  %s211 = scalar_lea.vmem %s0, 24
  %v212 = vld [vmem:[%s211] sm:$0xff]
  %v213 = vld [vmem:[%s211 + $0x8] sm:$0xff]
  %v214 = vld [vmem:[%s211 + $0x10] sm:$0xff]
  %v218 = vunpack.c.l.b16 %v212
  %v219 = vunpack.c.h.b16 %v212
  %v220 = vunpack.c.l.b16 %v213
  %v221 = vunpack.c.h.b16 %v213
  %v222 = vunpack.c.l.b16 %v214
  %v223 = vunpack.c.h.b16 %v214
  %v224 = vpack.c.b16 %v220, %v218
  %v225 = vpack.c.b16 %v221, %v219
  %v226 = vpack.c.b16 %v222, %v222
  %v227 = vpack.c.b16 %v223, %v223
  %232 = vmatprep.subr.bf16.mxu0 0
  %233 = vmatpush1.bf16.msra.mxu0 %v138
  %234 = vmatprep.subr.bf16.mxu0 0
  %235 = vmatpush1.bf16.msra.mxu0 %v137
  %236 = vmatprep.subr.bf16.mxu0 0
  %237 = vmatpush1.bf16.msra.mxu0 %v136
  %238 = vmatprep.subr.bf16.mxu0 0
  %239 = vmatpush1.bf16.msra.mxu0 %v135
  %240 = vmatprep.subr.bf16.mxu0 0
  %241 = vmatpush1.bf16.msra.mxu0 %v134
  %242 = vmatprep.subr.bf16.mxu0 0
  %243 = vmatpush1.bf16.msra.mxu0 %v133
  %244 = vmatprep.subr.bf16.mxu0 0
  %245 = vmatpush1.bf16.msra.mxu0 %v132
  %246 = vmatprep.subr.bf16.mxu0 0
  %247 = vmatpush1.bf16.msra.mxu0 %v131
  %248 = vmatprep.subr.bf16.mxu0 0
  %249 = vmatpush2.bf16.msra.mxu0 %v146
  %250 = vmatprep.subr.bf16.mxu0 0
  %251 = vmatpush2.bf16.msra.mxu0 %v145
  %252 = vmatprep.subr.bf16.mxu0 0
  %253 = vmatpush2.bf16.msra.mxu0 %v144
  %254 = vmatprep.subr.bf16.mxu0 0
  %255 = vmatpush2.bf16.msra.mxu0 %v143
  %256 = vmatprep.subr.bf16.mxu0 0
  %257 = vmatpush2.bf16.msra.mxu0 %v142
  %258 = vmatprep.subr.bf16.mxu0 0
  %259 = vmatpush2.bf16.msra.mxu0 %v141
  %260 = vmatprep.subr.bf16.mxu0 0
  %261 = vmatpush2.bf16.msra.mxu0 %v140
  %262 = vmatprep.subr.bf16.mxu0 0
  %263 = vmatpush2.bf16.msra.mxu0 %v139
  %264 = vmatprep.mubr.bf16.mxu0 %v225
  %265 = vmatmul.mubr.bf16.gmra.mxu0 %v224
  %v266 = vpop.f32.mrf.mxu0
  %v267 = vadd.f32 0.0, %v266
  %v268 = vpop.f32.mrf.mxu0
  %v269 = vpop.f32.mrf.mxu0
  %v270 = vadd.f32 0.0, %v269
  %v271 = vpop.f32.mrf.mxu0
  %272 = vmatprep.mubr.bf16.mxu0 %v227
  %273 = vmatmul.mubr.bf16.gmra.mxu0 %v226
  %v274 = vpop.f32.mrf.mxu0
  %v275 = vadd.f32 0.0, %v274
  %v276 = vpop.f32.mrf.mxu0
  %v277 = vpop.f32.mrf.mxu0
  %v278 = vpop.f32.mrf.mxu0
  %279 = vdwg.mxu0
  %v280 = vmax.f32 %v198, %v267
  %v281 = vmax.f32 %v201, %v270
  %v282 = vmax.f32 %v206, %v275
  %s283 = scalar_lea.vmem %s0, 48
  %v284 = vld [vmem:[%s283] sm:$0xff]
  %v285 = vld [vmem:[%s283 + $0x8] sm:$0xff]
  %v286 = vld [vmem:[%s283 + $0x10] sm:$0xff]
  %v290 = vunpack.c.l.b16 %v284
  %v291 = vunpack.c.h.b16 %v284
  %v292 = vunpack.c.l.b16 %v285
  %v293 = vunpack.c.h.b16 %v285
  %v294 = vunpack.c.l.b16 %v286
  %v295 = vunpack.c.h.b16 %v286
  %v296 = vpack.c.b16 %v292, %v290
  %v297 = vpack.c.b16 %v293, %v291
  %v298 = vpack.c.b16 %v294, %v294
  %v299 = vpack.c.b16 %v295, %v295
  %304 = vmatprep.subr.bf16.mxu0 0
  %305 = vmatpush1.bf16.msra.mxu0 %v138
  %306 = vmatprep.subr.bf16.mxu0 0
  %307 = vmatpush1.bf16.msra.mxu0 %v137
  %308 = vmatprep.subr.bf16.mxu0 0
  %309 = vmatpush1.bf16.msra.mxu0 %v136
  %310 = vmatprep.subr.bf16.mxu0 0
  %311 = vmatpush1.bf16.msra.mxu0 %v135
  %312 = vmatprep.subr.bf16.mxu0 0
  %313 = vmatpush1.bf16.msra.mxu0 %v134
  %314 = vmatprep.subr.bf16.mxu0 0
  %315 = vmatpush1.bf16.msra.mxu0 %v133
  %316 = vmatprep.subr.bf16.mxu0 0
  %317 = vmatpush1.bf16.msra.mxu0 %v132
  %318 = vmatprep.subr.bf16.mxu0 0
  %319 = vmatpush1.bf16.msra.mxu0 %v131
  %320 = vmatprep.subr.bf16.mxu0 0
  %321 = vmatpush2.bf16.msra.mxu0 %v146
  %322 = vmatprep.subr.bf16.mxu0 0
  %323 = vmatpush2.bf16.msra.mxu0 %v145
  %324 = vmatprep.subr.bf16.mxu0 0
  %325 = vmatpush2.bf16.msra.mxu0 %v144
  %326 = vmatprep.subr.bf16.mxu0 0
  %327 = vmatpush2.bf16.msra.mxu0 %v143
  %328 = vmatprep.subr.bf16.mxu0 0
  %329 = vmatpush2.bf16.msra.mxu0 %v142
  %330 = vmatprep.subr.bf16.mxu0 0
  %331 = vmatpush2.bf16.msra.mxu0 %v141
  %332 = vmatprep.subr.bf16.mxu0 0
  %333 = vmatpush2.bf16.msra.mxu0 %v140
  %334 = vmatprep.subr.bf16.mxu0 0
  %335 = vmatpush2.bf16.msra.mxu0 %v139
  %336 = vmatprep.mubr.bf16.mxu0 %v297
  %337 = vmatmul.mubr.bf16.gmra.mxu0 %v296
  %v338 = vpop.f32.mrf.mxu0
  %v339 = vadd.f32 0.0, %v338
  %v340 = vpop.f32.mrf.mxu0
  %v341 = vpop.f32.mrf.mxu0
  %v342 = vadd.f32 0.0, %v341
  %v343 = vpop.f32.mrf.mxu0
  %344 = vmatprep.mubr.bf16.mxu0 %v299
  %345 = vmatmul.mubr.bf16.gmra.mxu0 %v298
  %v346 = vpop.f32.mrf.mxu0
  %v347 = vadd.f32 0.0, %v346
  %v348 = vpop.f32.mrf.mxu0
  %v349 = vpop.f32.mrf.mxu0
  %v350 = vpop.f32.mrf.mxu0
  %351 = vdwg.mxu0
  %v352 = vmax.f32 %v280, %v339
  %v353 = vmax.f32 %v281, %v342
  %v354 = vmax.f32 %v282, %v347
  %s355 = scalar_lea.vmem %s0, 72
  %v356 = vld [vmem:[%s355] sm:$0xff]
  %v357 = vld [vmem:[%s355 + $0x8] sm:$0xff]
  %v358 = vld [vmem:[%s355 + $0x10] sm:$0xff]
  %v362 = vunpack.c.l.b16 %v356
  %v363 = vunpack.c.h.b16 %v356
  %v364 = vunpack.c.l.b16 %v357
  %v365 = vunpack.c.h.b16 %v357
  %v366 = vunpack.c.l.b16 %v358
  %v367 = vunpack.c.h.b16 %v358
  %v368 = vpack.c.b16 %v364, %v362
  %v369 = vpack.c.b16 %v365, %v363
  %v370 = vpack.c.b16 %v366, %v366
  %v371 = vpack.c.b16 %v367, %v367
  %376 = vmatprep.subr.bf16.mxu0 0
  %377 = vmatpush1.bf16.msra.mxu0 %v138
  %378 = vmatprep.subr.bf16.mxu0 0
  %379 = vmatpush1.bf16.msra.mxu0 %v137
  %380 = vmatprep.subr.bf16.mxu0 0
  %381 = vmatpush1.bf16.msra.mxu0 %v136
  %382 = vmatprep.subr.bf16.mxu0 0
  %383 = vmatpush1.bf16.msra.mxu0 %v135
  %384 = vmatprep.subr.bf16.mxu0 0
  %385 = vmatpush1.bf16.msra.mxu0 %v134
  %386 = vmatprep.subr.bf16.mxu0 0
  %387 = vmatpush1.bf16.msra.mxu0 %v133
  %388 = vmatprep.subr.bf16.mxu0 0
  %389 = vmatpush1.bf16.msra.mxu0 %v132
  %390 = vmatprep.subr.bf16.mxu0 0
  %391 = vmatpush1.bf16.msra.mxu0 %v131
  %392 = vmatprep.subr.bf16.mxu0 0
  %393 = vmatpush2.bf16.msra.mxu0 %v146
  %394 = vmatprep.subr.bf16.mxu0 0
  %395 = vmatpush2.bf16.msra.mxu0 %v145
  %396 = vmatprep.subr.bf16.mxu0 0
  %397 = vmatpush2.bf16.msra.mxu0 %v144
  %398 = vmatprep.subr.bf16.mxu0 0
  %399 = vmatpush2.bf16.msra.mxu0 %v143
  %400 = vmatprep.subr.bf16.mxu0 0
  %401 = vmatpush2.bf16.msra.mxu0 %v142
  %402 = vmatprep.subr.bf16.mxu0 0
  %403 = vmatpush2.bf16.msra.mxu0 %v141
  %404 = vmatprep.subr.bf16.mxu0 0
  %405 = vmatpush2.bf16.msra.mxu0 %v140
  %406 = vmatprep.subr.bf16.mxu0 0
  %407 = vmatpush2.bf16.msra.mxu0 %v139
  %408 = vmatprep.mubr.bf16.mxu0 %v369
  %409 = vmatmul.mubr.bf16.gmra.mxu0 %v368
  %v410 = vpop.f32.mrf.mxu0
  %v411 = vadd.f32 0.0, %v410
  %v412 = vpop.f32.mrf.mxu0
  %v413 = vpop.f32.mrf.mxu0
  %v414 = vadd.f32 0.0, %v413
  %v415 = vpop.f32.mrf.mxu0
  %416 = vmatprep.mubr.bf16.mxu0 %v371
  %417 = vmatmul.mubr.bf16.gmra.mxu0 %v370
  %v418 = vpop.f32.mrf.mxu0
  %v419 = vadd.f32 0.0, %v418
  %v420 = vpop.f32.mrf.mxu0
  %v421 = vpop.f32.mrf.mxu0
  %v422 = vpop.f32.mrf.mxu0
  %423 = vdwg.mxu0
  %v424 = vmax.f32 %v352, %v411
  %v425 = vmax.f32 %v353, %v414
  %v426 = vmax.f32 %v354, %v419
  %s427 = scalar_lea.vmem %s0, 96
  %v428 = vld [vmem:[%s427] sm:$0xff]
  %v429 = vld [vmem:[%s427 + $0x8] sm:$0xff]
  %v430 = vld [vmem:[%s427 + $0x10] sm:$0xff]
  %v434 = vunpack.c.l.b16 %v428
  %v435 = vunpack.c.h.b16 %v428
  %v436 = vunpack.c.l.b16 %v429
  %v437 = vunpack.c.h.b16 %v429
  %v438 = vunpack.c.l.b16 %v430
  %v439 = vunpack.c.h.b16 %v430
  %v440 = vpack.c.b16 %v436, %v434
  %v441 = vpack.c.b16 %v437, %v435
  %v442 = vpack.c.b16 %v438, %v438
  %v443 = vpack.c.b16 %v439, %v439
  %448 = vmatprep.subr.bf16.mxu0 0
  %449 = vmatpush1.bf16.msra.mxu0 %v138
  %450 = vmatprep.subr.bf16.mxu0 0
  %451 = vmatpush1.bf16.msra.mxu0 %v137
  %452 = vmatprep.subr.bf16.mxu0 0
  %453 = vmatpush1.bf16.msra.mxu0 %v136
  %454 = vmatprep.subr.bf16.mxu0 0
  %455 = vmatpush1.bf16.msra.mxu0 %v135
  %456 = vmatprep.subr.bf16.mxu0 0
  %457 = vmatpush1.bf16.msra.mxu0 %v134
  %458 = vmatprep.subr.bf16.mxu0 0
  %459 = vmatpush1.bf16.msra.mxu0 %v133
  %460 = vmatprep.subr.bf16.mxu0 0
  %461 = vmatpush1.bf16.msra.mxu0 %v132
  %462 = vmatprep.subr.bf16.mxu0 0
  %463 = vmatpush1.bf16.msra.mxu0 %v131
  %464 = vmatprep.subr.bf16.mxu0 0
  %465 = vmatpush2.bf16.msra.mxu0 %v146
  %466 = vmatprep.subr.bf16.mxu0 0
  %467 = vmatpush2.bf16.msra.mxu0 %v145
  %468 = vmatprep.subr.bf16.mxu0 0
  %469 = vmatpush2.bf16.msra.mxu0 %v144
  %470 = vmatprep.subr.bf16.mxu0 0
  %471 = vmatpush2.bf16.msra.mxu0 %v143
  %472 = vmatprep.subr.bf16.mxu0 0
  %473 = vmatpush2.bf16.msra.mxu0 %v142
  %474 = vmatprep.subr.bf16.mxu0 0
  %475 = vmatpush2.bf16.msra.mxu0 %v141
  %476 = vmatprep.subr.bf16.mxu0 0
  %477 = vmatpush2.bf16.msra.mxu0 %v140
  %478 = vmatprep.subr.bf16.mxu0 0
  %479 = vmatpush2.bf16.msra.mxu0 %v139
  %480 = vmatprep.mubr.bf16.mxu0 %v441
  %481 = vmatmul.mubr.bf16.gmra.mxu0 %v440
  %v482 = vpop.f32.mrf.mxu0
  %v483 = vadd.f32 0.0, %v482
  %v484 = vpop.f32.mrf.mxu0
  %v485 = vpop.f32.mrf.mxu0
  %v486 = vadd.f32 0.0, %v485
  %v487 = vpop.f32.mrf.mxu0
  %488 = vmatprep.mubr.bf16.mxu0 %v443
  %489 = vmatmul.mubr.bf16.gmra.mxu0 %v442
  %v490 = vpop.f32.mrf.mxu0
  %v491 = vadd.f32 0.0, %v490
  %v492 = vpop.f32.mrf.mxu0
  %v493 = vpop.f32.mrf.mxu0
  %v494 = vpop.f32.mrf.mxu0
  %495 = vdwg.mxu0
  %v496 = vmax.f32 %v424, %v483
  %v497 = vmax.f32 %v425, %v486
  %v498 = vmax.f32 %v426, %v491
  %s499 = scalar_lea.vmem %s0, 120
  %v500 = vld [vmem:[%s499] sm:$0xff]
  %v501 = vld [vmem:[%s499 + $0x8] sm:$0xff]
  %v502 = vld [vmem:[%s499 + $0x10] sm:$0xff]
  %v506 = vunpack.c.l.b16 %v500
  %v507 = vunpack.c.h.b16 %v500
  %v508 = vunpack.c.l.b16 %v501
  %v509 = vunpack.c.h.b16 %v501
  %v510 = vunpack.c.l.b16 %v502
  %v511 = vunpack.c.h.b16 %v502
  %v512 = vpack.c.b16 %v508, %v506
  %v513 = vpack.c.b16 %v509, %v507
  %v514 = vpack.c.b16 %v510, %v510
  %v515 = vpack.c.b16 %v511, %v511
  %520 = vmatprep.subr.bf16.mxu0 0
  %521 = vmatpush1.bf16.msra.mxu0 %v138
  %522 = vmatprep.subr.bf16.mxu0 0
  %523 = vmatpush1.bf16.msra.mxu0 %v137
  %524 = vmatprep.subr.bf16.mxu0 0
  %525 = vmatpush1.bf16.msra.mxu0 %v136
  %526 = vmatprep.subr.bf16.mxu0 0
  %527 = vmatpush1.bf16.msra.mxu0 %v135
  %528 = vmatprep.subr.bf16.mxu0 0
  %529 = vmatpush1.bf16.msra.mxu0 %v134
  %530 = vmatprep.subr.bf16.mxu0 0
  %531 = vmatpush1.bf16.msra.mxu0 %v133
  %532 = vmatprep.subr.bf16.mxu0 0
  %533 = vmatpush1.bf16.msra.mxu0 %v132
  %534 = vmatprep.subr.bf16.mxu0 0
  %535 = vmatpush1.bf16.msra.mxu0 %v131
  %536 = vmatprep.subr.bf16.mxu0 0
  %537 = vmatpush2.bf16.msra.mxu0 %v146
  %538 = vmatprep.subr.bf16.mxu0 0
  %539 = vmatpush2.bf16.msra.mxu0 %v145
  %540 = vmatprep.subr.bf16.mxu0 0
  %541 = vmatpush2.bf16.msra.mxu0 %v144
  %542 = vmatprep.subr.bf16.mxu0 0
  %543 = vmatpush2.bf16.msra.mxu0 %v143
  %544 = vmatprep.subr.bf16.mxu0 0
  %545 = vmatpush2.bf16.msra.mxu0 %v142
  %546 = vmatprep.subr.bf16.mxu0 0
  %547 = vmatpush2.bf16.msra.mxu0 %v141
  %548 = vmatprep.subr.bf16.mxu0 0
  %549 = vmatpush2.bf16.msra.mxu0 %v140
  %550 = vmatprep.subr.bf16.mxu0 0
  %551 = vmatpush2.bf16.msra.mxu0 %v139
  %552 = vmatprep.mubr.bf16.mxu0 %v513
  %553 = vmatmul.mubr.bf16.gmra.mxu0 %v512
  %v554 = vpop.f32.mrf.mxu0
  %v555 = vadd.f32 0.0, %v554
  %v556 = vpop.f32.mrf.mxu0
  %v557 = vpop.f32.mrf.mxu0
  %v558 = vadd.f32 0.0, %v557
  %v559 = vpop.f32.mrf.mxu0
  %560 = vmatprep.mubr.bf16.mxu0 %v515
  %561 = vmatmul.mubr.bf16.gmra.mxu0 %v514
  %v562 = vpop.f32.mrf.mxu0
  %v563 = vadd.f32 0.0, %v562
  %v564 = vpop.f32.mrf.mxu0
  %v565 = vpop.f32.mrf.mxu0
  %v566 = vpop.f32.mrf.mxu0
  %567 = vdwg.mxu0
  %v568 = vmax.f32 %v496, %v555
  %v569 = vmax.f32 %v497, %v558
  %v570 = vmax.f32 %v498, %v563
  %s571 = scalar_lea.vmem %s0, 144
  %v572 = vld [vmem:[%s571] sm:$0xff]
  %v573 = vld [vmem:[%s571 + $0x8] sm:$0xff]
  %v574 = vld [vmem:[%s571 + $0x10] sm:$0xff]
  %v578 = vunpack.c.l.b16 %v572
  %v579 = vunpack.c.h.b16 %v572
  %v580 = vunpack.c.l.b16 %v573
  %v581 = vunpack.c.h.b16 %v573
  %v582 = vunpack.c.l.b16 %v574
  %v583 = vunpack.c.h.b16 %v574
  %v584 = vpack.c.b16 %v580, %v578
  %v585 = vpack.c.b16 %v581, %v579
  %v586 = vpack.c.b16 %v582, %v582
  %v587 = vpack.c.b16 %v583, %v583
  %592 = vmatprep.subr.bf16.mxu0 0
  %593 = vmatpush1.bf16.msra.mxu0 %v138
  %594 = vmatprep.subr.bf16.mxu0 0
  %595 = vmatpush1.bf16.msra.mxu0 %v137
  %596 = vmatprep.subr.bf16.mxu0 0
  %597 = vmatpush1.bf16.msra.mxu0 %v136
  %598 = vmatprep.subr.bf16.mxu0 0
  %599 = vmatpush1.bf16.msra.mxu0 %v135
  %600 = vmatprep.subr.bf16.mxu0 0
  %601 = vmatpush1.bf16.msra.mxu0 %v134
  %602 = vmatprep.subr.bf16.mxu0 0
  %603 = vmatpush1.bf16.msra.mxu0 %v133
  %604 = vmatprep.subr.bf16.mxu0 0
  %605 = vmatpush1.bf16.msra.mxu0 %v132
  %606 = vmatprep.subr.bf16.mxu0 0
  %607 = vmatpush1.bf16.msra.mxu0 %v131
  %608 = vmatprep.subr.bf16.mxu0 0
  %609 = vmatpush2.bf16.msra.mxu0 %v146
  %610 = vmatprep.subr.bf16.mxu0 0
  %611 = vmatpush2.bf16.msra.mxu0 %v145
  %612 = vmatprep.subr.bf16.mxu0 0
  %613 = vmatpush2.bf16.msra.mxu0 %v144
  %614 = vmatprep.subr.bf16.mxu0 0
  %615 = vmatpush2.bf16.msra.mxu0 %v143
  %616 = vmatprep.subr.bf16.mxu0 0
  %617 = vmatpush2.bf16.msra.mxu0 %v142
  %618 = vmatprep.subr.bf16.mxu0 0
  %619 = vmatpush2.bf16.msra.mxu0 %v141
  %620 = vmatprep.subr.bf16.mxu0 0
  %621 = vmatpush2.bf16.msra.mxu0 %v140
  %622 = vmatprep.subr.bf16.mxu0 0
  %623 = vmatpush2.bf16.msra.mxu0 %v139
  %624 = vmatprep.mubr.bf16.mxu0 %v585
  %625 = vmatmul.mubr.bf16.gmra.mxu0 %v584
  %v626 = vpop.f32.mrf.mxu0
  %v627 = vadd.f32 0.0, %v626
  %v628 = vpop.f32.mrf.mxu0
  %v629 = vpop.f32.mrf.mxu0
  %v630 = vadd.f32 0.0, %v629
  %v631 = vpop.f32.mrf.mxu0
  %632 = vmatprep.mubr.bf16.mxu0 %v587
  %633 = vmatmul.mubr.bf16.gmra.mxu0 %v586
  %v634 = vpop.f32.mrf.mxu0
  %v635 = vadd.f32 0.0, %v634
  %v636 = vpop.f32.mrf.mxu0
  %v637 = vpop.f32.mrf.mxu0
  %v638 = vpop.f32.mrf.mxu0
  %639 = vdwg.mxu0
  %v640 = vmax.f32 %v568, %v627
  %v641 = vmax.f32 %v569, %v630
  %v642 = vmax.f32 %v570, %v635
  %s643 = scalar_lea.vmem %s0, 168
  %v644 = vld [vmem:[%s643] sm:$0xff]
  %v645 = vld [vmem:[%s643 + $0x8] sm:$0xff]
  %v646 = vld [vmem:[%s643 + $0x10] sm:$0xff]
  %v650 = vunpack.c.l.b16 %v644
  %v651 = vunpack.c.h.b16 %v644
  %v652 = vunpack.c.l.b16 %v645
  %v653 = vunpack.c.h.b16 %v645
  %v654 = vunpack.c.l.b16 %v646
  %v655 = vunpack.c.h.b16 %v646
  %v656 = vpack.c.b16 %v652, %v650
  %v657 = vpack.c.b16 %v653, %v651
  %v658 = vpack.c.b16 %v654, %v654
  %v659 = vpack.c.b16 %v655, %v655
  %664 = vmatprep.subr.bf16.mxu0 0
  %665 = vmatpush1.bf16.msra.mxu0 %v138
  %666 = vmatprep.subr.bf16.mxu0 0
  %667 = vmatpush1.bf16.msra.mxu0 %v137
  %668 = vmatprep.subr.bf16.mxu0 0
  %669 = vmatpush1.bf16.msra.mxu0 %v136
  %670 = vmatprep.subr.bf16.mxu0 0
  %671 = vmatpush1.bf16.msra.mxu0 %v135
  %672 = vmatprep.subr.bf16.mxu0 0
  %673 = vmatpush1.bf16.msra.mxu0 %v134
  %674 = vmatprep.subr.bf16.mxu0 0
  %675 = vmatpush1.bf16.msra.mxu0 %v133
  %676 = vmatprep.subr.bf16.mxu0 0
  %677 = vmatpush1.bf16.msra.mxu0 %v132
  %678 = vmatprep.subr.bf16.mxu0 0
  %679 = vmatpush1.bf16.msra.mxu0 %v131
  %680 = vmatprep.subr.bf16.mxu0 0
  %681 = vmatpush2.bf16.msra.mxu0 %v146
  %682 = vmatprep.subr.bf16.mxu0 0
  %683 = vmatpush2.bf16.msra.mxu0 %v145
  %684 = vmatprep.subr.bf16.mxu0 0
  %685 = vmatpush2.bf16.msra.mxu0 %v144
  %686 = vmatprep.subr.bf16.mxu0 0
  %687 = vmatpush2.bf16.msra.mxu0 %v143
  %688 = vmatprep.subr.bf16.mxu0 0
  %689 = vmatpush2.bf16.msra.mxu0 %v142
  %690 = vmatprep.subr.bf16.mxu0 0
  %691 = vmatpush2.bf16.msra.mxu0 %v141
  %692 = vmatprep.subr.bf16.mxu0 0
  %693 = vmatpush2.bf16.msra.mxu0 %v140
  %694 = vmatprep.subr.bf16.mxu0 0
  %695 = vmatpush2.bf16.msra.mxu0 %v139
  %696 = vmatprep.mubr.bf16.mxu0 %v657
  %697 = vmatmul.mubr.bf16.gmra.mxu0 %v656
  %v698 = vpop.f32.mrf.mxu0
  %v699 = vadd.f32 0.0, %v698
  %v700 = vpop.f32.mrf.mxu0
  %v701 = vpop.f32.mrf.mxu0
  %v702 = vadd.f32 0.0, %v701
  %v703 = vpop.f32.mrf.mxu0
  %704 = vmatprep.mubr.bf16.mxu0 %v659
  %705 = vmatmul.mubr.bf16.gmra.mxu0 %v658
  %v706 = vpop.f32.mrf.mxu0
  %v707 = vadd.f32 0.0, %v706
  %v708 = vpop.f32.mrf.mxu0
  %v709 = vpop.f32.mrf.mxu0
  %v710 = vpop.f32.mrf.mxu0
  %711 = vdwg.mxu0
  %v712 = vmax.f32 %v640, %v699
  %v713 = vmax.f32 %v641, %v702
  %v714 = vmax.f32 %v642, %v707
  %s715 = scalar_lea.vmem %s0, 192
  %v716 = vld [vmem:[%s715] sm:$0xff]
  %v717 = vld [vmem:[%s715 + $0x8] sm:$0xff]
  %v718 = vld [vmem:[%s715 + $0x10] sm:$0xff]
  %v722 = vunpack.c.l.b16 %v716
  %v723 = vunpack.c.h.b16 %v716
  %v724 = vunpack.c.l.b16 %v717
  %v725 = vunpack.c.h.b16 %v717
  %v726 = vunpack.c.l.b16 %v718
  %v727 = vunpack.c.h.b16 %v718
  %v728 = vpack.c.b16 %v724, %v722
  %v729 = vpack.c.b16 %v725, %v723
  %v730 = vpack.c.b16 %v726, %v726
  %v731 = vpack.c.b16 %v727, %v727
  %736 = vmatprep.subr.bf16.mxu0 0
  %737 = vmatpush1.bf16.msra.mxu0 %v138
  %738 = vmatprep.subr.bf16.mxu0 0
  %739 = vmatpush1.bf16.msra.mxu0 %v137
  %740 = vmatprep.subr.bf16.mxu0 0
  %741 = vmatpush1.bf16.msra.mxu0 %v136
  %742 = vmatprep.subr.bf16.mxu0 0
  %743 = vmatpush1.bf16.msra.mxu0 %v135
  %744 = vmatprep.subr.bf16.mxu0 0
  %745 = vmatpush1.bf16.msra.mxu0 %v134
  %746 = vmatprep.subr.bf16.mxu0 0
  %747 = vmatpush1.bf16.msra.mxu0 %v133
  %748 = vmatprep.subr.bf16.mxu0 0
  %749 = vmatpush1.bf16.msra.mxu0 %v132
  %750 = vmatprep.subr.bf16.mxu0 0
  %751 = vmatpush1.bf16.msra.mxu0 %v131
  %752 = vmatprep.subr.bf16.mxu0 0
  %753 = vmatpush2.bf16.msra.mxu0 %v146
  %754 = vmatprep.subr.bf16.mxu0 0
  %755 = vmatpush2.bf16.msra.mxu0 %v145
  %756 = vmatprep.subr.bf16.mxu0 0
  %757 = vmatpush2.bf16.msra.mxu0 %v144
  %758 = vmatprep.subr.bf16.mxu0 0
  %759 = vmatpush2.bf16.msra.mxu0 %v143
  %760 = vmatprep.subr.bf16.mxu0 0
  %761 = vmatpush2.bf16.msra.mxu0 %v142
  %762 = vmatprep.subr.bf16.mxu0 0
  %763 = vmatpush2.bf16.msra.mxu0 %v141
  %764 = vmatprep.subr.bf16.mxu0 0
  %765 = vmatpush2.bf16.msra.mxu0 %v140
  %766 = vmatprep.subr.bf16.mxu0 0
  %767 = vmatpush2.bf16.msra.mxu0 %v139
  %768 = vmatprep.mubr.bf16.mxu0 %v729
  %769 = vmatmul.mubr.bf16.gmra.mxu0 %v728
  %v770 = vpop.f32.mrf.mxu0
  %v771 = vadd.f32 0.0, %v770
  %v772 = vpop.f32.mrf.mxu0
  %v773 = vpop.f32.mrf.mxu0
  %v774 = vadd.f32 0.0, %v773
  %v775 = vpop.f32.mrf.mxu0
  %776 = vmatprep.mubr.bf16.mxu0 %v731
  %777 = vmatmul.mubr.bf16.gmra.mxu0 %v730
  %v778 = vpop.f32.mrf.mxu0
  %v779 = vadd.f32 0.0, %v778
  %v780 = vpop.f32.mrf.mxu0
  %v781 = vpop.f32.mrf.mxu0
  %v782 = vpop.f32.mrf.mxu0
  %783 = vdwg.mxu0
  %v784 = vmax.f32 %v712, %v771
  %v785 = vmax.f32 %v713, %v774
  %v786 = vmax.f32 %v714, %v779
  %v787 = vld [vmem:[%s2] sm:$0x1]
  %v789 = vlaneseq
  %v790 = vshrl.u32 %v789, 7
  %v791 = vsub.s32 0, %v790
  %v792 = vrot.slane %v787, %v791
  %v794 = vadd.f32 %v784, %v792
  %v795 = vadd.f32 %v785, %v792
  %v796 = vadd.f32 %v786, %v792
  %v797 = vmax.f32 %v794, 0.0
  %v798 = vmax.f32 %v795, 0.0
  %v799 = vmax.f32 %v796, 0.0
  %800 = vst [vmem:[%s3] sm:$0xff] %v797
  %801 = vst [vmem:[%s3 + $0x8] sm:$0xff] %v798
  %802 = vst [vmem:[%s3 + $0x10] sm:$0xff] %v799
  // Predicated region
  $region14: #{net_forward.4} parent=0 // pred_check
    _
  $region15: #{net_forward.4} parent=0 // pred_check_branch
    %804 = sbr.rel (0) target = $region17
  $region16: #{net_forward.4} parent=0 // pred_region
    _
  $region17: #{net_forward.4} parent=0 // pred_fallthru
    _
  // Predicated region
  $region18: #{net_forward.4} parent=0 // pred_check
    _
  $region19: #{net_forward.4} parent=0 // pred_check_branch
    %806 = sbr.rel (0) target = $region21
  $region20: #{net_forward.4} parent=0 // pred_region
    _
  $region21: #{net_forward.4} parent=0 // pred_fallthru
    _

// kernel: net_forward.5
$region0: #{net_forward.5}
  #allocation0 [shape = 'u32[]', space=smem, size = 0x4, offset = 0x4, fixed_abs, tag = 'smem constant byte address 0x4 - core index']
  #allocation1 [shape = 'u32[144,128]{1,0:T(1,128)}', space=vmem, size = 0x12000, scoped, tag = 'internal scratch']
  %s0 = inlined_call_operand.vmem [shape: bf16[8,360], index: 0, kind: input, shape index: {}]
  %s1 = inlined_call_operand.vmem [shape: bf16[360,128], index: 1, kind: input, shape index: {}]
  %s2 = inlined_call_operand.vmem [shape: f32[1,128], index: 2, kind: input, shape index: {}]
  %s3 = inlined_call_operand.vmem [shape: bf16[128,128], index: 3, kind: input, shape index: {}]
  %s4 = inlined_call_operand.vmem [shape: f32[1,128], index: 4, kind: input, shape index: {}]
  %s5 = inlined_call_operand.vmem [shape: f32[8,128], index: 5, kind: output, shape index: {}]
  %s6 = sld [smem:[#allocation0]]
  $region30: #{net_forward.5} parent=0
    _
  %s8 = ssub.s32 1, %s6
  %s9 = scalar_select 0, %s8, %s6
  // Predicated region
  $region2: #{net_forward.5} parent=0 // pred_check
    _
  $region3: #{net_forward.5} parent=0 // pred_check_branch
    %11 = sbr.rel (0) target = $region5
  $region4: #{net_forward.5} parent=0 // pred_region
    _
  $region5: #{net_forward.5} parent=0 // pred_fallthru
    _
  // Predicated region
  $region6: #{net_forward.5} parent=0 // pred_check
    _
  $region7: #{net_forward.5} parent=0 // pred_check_branch
    %13 = sbr.rel (0) target = $region9
  $region8: #{net_forward.5} parent=0 // pred_region
    _
  $region9: #{net_forward.5} parent=0 // pred_fallthru
    _
  // Predicated region
  $region10: #{net_forward.5} parent=0 // pred_check
    _
  $region11: #{net_forward.5} parent=0 // pred_check_branch
    %15 = sbr.rel (0) target = $region13
  $region12: #{net_forward.5} parent=0 // pred_region
    _
  $region13: #{net_forward.5} parent=0 // pred_fallthru
    _
  // Predicated region
  $region14: #{net_forward.5} parent=0 // pred_check
    _
  $region15: #{net_forward.5} parent=0 // pred_check_branch
    %17 = sbr.rel (0) target = $region17
  $region16: #{net_forward.5} parent=0 // pred_region
    _
  $region17: #{net_forward.5} parent=0 // pred_fallthru
    _
  // Predicated region
  $region18: #{net_forward.5} parent=0 // pred_check
    _
  $region19: #{net_forward.5} parent=0 // pred_check_branch
    %19 = sbr.rel (0) target = $region21
  $region20: #{net_forward.5} parent=0 // pred_region
    _
  $region21: #{net_forward.5} parent=0 // pred_fallthru
    _
  %v21 = vld [vmem:[%s0] sm:$0xff]
  %v22 = vld [vmem:[%s0 + $0x8] sm:$0xf]
  %v23 = vld [vmem:[%s1] sm:$0xf]
  %v24 = vld [vmem:[%s1 + $0x4] sm:$0xf]
  %v25 = vld [vmem:[%s1 + $0x8] sm:$0xf]
  %v26 = vld [vmem:[%s1 + $0xc] sm:$0xf]
  %v27 = vld [vmem:[%s1 + $0x10] sm:$0xf]
  %v28 = vld [vmem:[%s1 + $0x14] sm:$0xf]
  %v29 = vld [vmem:[%s1 + $0x18] sm:$0xf]
  %v30 = vld [vmem:[%s1 + $0x1c] sm:$0xf]
  %v31 = vld [vmem:[%s1 + $0x20] sm:$0xf]
  %v32 = vld [vmem:[%s1 + $0x24] sm:$0xf]
  %v33 = vld [vmem:[%s1 + $0x28] sm:$0xf]
  %v34 = vld [vmem:[%s1 + $0x2c] sm:$0xf]
  %v35 = vld [vmem:[%s1 + $0x30] sm:$0xf]
  %v36 = vld [vmem:[%s1 + $0x34] sm:$0xf]
  %v37 = vld [vmem:[%s1 + $0x38] sm:$0xf]
  %v38 = vld [vmem:[%s1 + $0x3c] sm:$0xf]
  %v39 = vld [vmem:[%s1 + $0x40] sm:$0xf]
  %v40 = vld [vmem:[%s1 + $0x44] sm:$0xf]
  %v41 = vld [vmem:[%s1 + $0x48] sm:$0xf]
  %v42 = vld [vmem:[%s1 + $0x4c] sm:$0xf]
  %v43 = vld [vmem:[%s1 + $0x50] sm:$0xf]
  %v44 = vld [vmem:[%s1 + $0x54] sm:$0xf]
  %v45 = vld [vmem:[%s1 + $0x58] sm:$0xf]
  %v46 = vld [vmem:[%s1 + $0x5c] sm:$0xf]
  %v47 = vld [vmem:[%s1 + $0x60] sm:$0xf]
  %v48 = vld [vmem:[%s1 + $0x64] sm:$0xf]
  %v49 = vld [vmem:[%s1 + $0x68] sm:$0xf]
  %v50 = vld [vmem:[%s1 + $0x6c] sm:$0xf]
  %v51 = vld [vmem:[%s1 + $0x70] sm:$0xf]
  %v52 = vld [vmem:[%s1 + $0x74] sm:$0xf]
  %v53 = vld [vmem:[%s1 + $0x78] sm:$0xf]
  %v54 = vld [vmem:[%s1 + $0x7c] sm:$0xf]
  %v55 = vld [vmem:[%s1 + $0x80] sm:$0xf]
  %v56 = vld [vmem:[%s1 + $0x84] sm:$0xf]
  %v57 = vld [vmem:[%s1 + $0x88] sm:$0xf]
  %v58 = vld [vmem:[%s1 + $0x8c] sm:$0xf]
  %v59 = vld [vmem:[%s1 + $0x90] sm:$0xf]
  %v60 = vld [vmem:[%s1 + $0x94] sm:$0xf]
  %v61 = vld [vmem:[%s1 + $0x98] sm:$0xf]
  %v62 = vld [vmem:[%s1 + $0x9c] sm:$0xf]
  %v63 = vld [vmem:[%s1 + $0xa0] sm:$0xf]
  %v64 = vld [vmem:[%s1 + $0xa4] sm:$0xf]
  %v65 = vld [vmem:[%s1 + $0xa8] sm:$0xf]
  %v66 = vld [vmem:[%s1 + $0xac] sm:$0xf]
  %v67 = vld [vmem:[%s1 + $0xb0] sm:$0xf]
  %v68 = vld [vmem:[%s2] sm:$0x1]
  %v70 = vlaneseq
  %v71 = vshrl.u32 %v70, 7
  %v72 = vsub.s32 0, %v71
  %v73 = vrot.slane %v68, %v72
  %v77 = vunpack.c.l.b16 %v21
  %v78 = vunpack.c.h.b16 %v21
  %v79 = vunpack.c.l.b16 %v22
  %v80 = vpack.c.b16 %v77, %v77
  %v81 = vpack.c.b16 %v78, %v78
  %v82 = vpack.c.b16 %v79, %v79
  %v130 = vunpack.c.l.b16 %v23
  %v131 = vunpack.c.l.b16 %v24
  %v132 = vunpack.c.l.b16 %v25
  %v133 = vunpack.c.l.b16 %v26
  %v134 = vunpack.c.l.b16 %v27
  %v135 = vunpack.c.l.b16 %v28
  %v136 = vunpack.c.l.b16 %v29
  %v137 = vunpack.c.l.b16 %v30
  %v138 = vunpack.c.l.b16 %v31
  %v139 = vunpack.c.l.b16 %v32
  %v140 = vunpack.c.l.b16 %v33
  %v141 = vunpack.c.l.b16 %v34
  %v142 = vunpack.c.l.b16 %v35
  %v143 = vunpack.c.l.b16 %v36
  %v144 = vunpack.c.l.b16 %v37
  %v145 = vunpack.c.l.b16 %v38
  %v146 = vunpack.c.l.b16 %v39
  %v147 = vunpack.c.l.b16 %v40
  %v148 = vunpack.c.l.b16 %v41
  %v149 = vunpack.c.l.b16 %v42
  %v150 = vunpack.c.l.b16 %v43
  %v151 = vunpack.c.l.b16 %v44
  %v152 = vunpack.c.l.b16 %v45
  %v153 = vunpack.c.l.b16 %v46
  %v154 = vunpack.c.l.b16 %v47
  %v155 = vunpack.c.l.b16 %v48
  %v156 = vunpack.c.l.b16 %v49
  %v157 = vunpack.c.l.b16 %v50
  %v158 = vunpack.c.l.b16 %v51
  %v159 = vunpack.c.l.b16 %v52
  %v160 = vunpack.c.l.b16 %v53
  %v161 = vunpack.c.l.b16 %v54
  %v162 = vunpack.c.l.b16 %v55
  %v163 = vunpack.c.l.b16 %v56
  %v164 = vunpack.c.l.b16 %v57
  %v165 = vunpack.c.l.b16 %v58
  %v166 = vunpack.c.l.b16 %v59
  %v167 = vunpack.c.l.b16 %v60
  %v168 = vunpack.c.l.b16 %v61
  %v169 = vunpack.c.l.b16 %v62
  %v170 = vunpack.c.l.b16 %v63
  %v171 = vunpack.c.l.b16 %v64
  %v172 = vunpack.c.l.b16 %v65
  %v173 = vunpack.c.l.b16 %v66
  %v174 = vunpack.c.l.b16 %v67
  %v175 = vpack.c.b16 %v131, %v130
  %v176 = vpack.c.b16 %v133, %v132
  %v177 = vpack.c.b16 %v135, %v134
  %v178 = vpack.c.b16 %v137, %v136
  %v179 = vpack.c.b16 %v139, %v138
  %v180 = vpack.c.b16 %v141, %v140
  %v181 = vpack.c.b16 %v143, %v142
  %v182 = vpack.c.b16 %v145, %v144
  %v183 = vpack.c.b16 %v147, %v146
  %v184 = vpack.c.b16 %v149, %v148
  %v185 = vpack.c.b16 %v151, %v150
  %v186 = vpack.c.b16 %v153, %v152
  %v187 = vpack.c.b16 %v155, %v154
  %v188 = vpack.c.b16 %v157, %v156
  %v189 = vpack.c.b16 %v159, %v158
  %v190 = vpack.c.b16 %v161, %v160
  %v191 = vpack.c.b16 %v163, %v162
  %v192 = vpack.c.b16 %v165, %v164
  %v193 = vpack.c.b16 %v167, %v166
  %v194 = vpack.c.b16 %v169, %v168
  %v195 = vpack.c.b16 %v171, %v170
  %v196 = vpack.c.b16 %v173, %v172
  %v197 = vpack.c.b16 %v174, %v174
  %vm220 = vcmask 850944
  %v222 = vsel %vm220, %v82, 0
  %vm224 = vcmask 1043456
  %v226 = vsel %vm224, %v197, 0
  %228 = vmatprep.subr.bf16.mxu0 0
  %229 = vmatpush1.bf16.msra.mxu0 %v182
  %230 = vmatprep.subr.bf16.mxu0 0
  %231 = vmatpush1.bf16.msra.mxu0 %v181
  %232 = vmatprep.subr.bf16.mxu0 0
  %233 = vmatpush1.bf16.msra.mxu0 %v180
  %234 = vmatprep.subr.bf16.mxu0 0
  %235 = vmatpush1.bf16.msra.mxu0 %v179
  %236 = vmatprep.subr.bf16.mxu0 0
  %237 = vmatpush1.bf16.msra.mxu0 %v178
  %238 = vmatprep.subr.bf16.mxu0 0
  %239 = vmatpush1.bf16.msra.mxu0 %v177
  %240 = vmatprep.subr.bf16.mxu0 0
  %241 = vmatpush1.bf16.msra.mxu0 %v176
  %242 = vmatprep.subr.bf16.mxu0 0
  %243 = vmatpush1.bf16.msra.mxu0 %v175
  %244 = vmatprep.subr.bf16.mxu0 0
  %245 = vmatpush2.bf16.msra.mxu0 %v190
  %246 = vmatprep.subr.bf16.mxu0 0
  %247 = vmatpush2.bf16.msra.mxu0 %v189
  %248 = vmatprep.subr.bf16.mxu0 0
  %249 = vmatpush2.bf16.msra.mxu0 %v188
  %250 = vmatprep.subr.bf16.mxu0 0
  %251 = vmatpush2.bf16.msra.mxu0 %v187
  %252 = vmatprep.subr.bf16.mxu0 0
  %253 = vmatpush2.bf16.msra.mxu0 %v186
  %254 = vmatprep.subr.bf16.mxu0 0
  %255 = vmatpush2.bf16.msra.mxu0 %v185
  %256 = vmatprep.subr.bf16.mxu0 0
  %257 = vmatpush2.bf16.msra.mxu0 %v184
  %258 = vmatprep.subr.bf16.mxu0 0
  %259 = vmatpush2.bf16.msra.mxu0 %v183
  %260 = vmatprep.mubr.bf16.mxu0 %v81
  %261 = vmatmul.mubr.bf16.gmra.mxu0 %v80
  %v262 = vpop.f32.mrf.mxu0
  %v263 = vadd.f32 %v73, %v262
  %v264 = vpop.f32.mrf.mxu0
  %v265 = vpop.f32.mrf.mxu0
  %v266 = vpop.f32.mrf.mxu0
  %267 = vdwg.mxu0
  %268 = vmatprep.subr.bf16.mxu0 0
  %269 = vmatpush1.bf16.msra.mxu0 0
  %270 = vmatprep.subr.bf16.mxu0 0
  %271 = vmatpush1.bf16.msra.mxu0 %v226
  %272 = vmatprep.subr.bf16.mxu0 0
  %273 = vmatpush1.bf16.msra.mxu0 %v196
  %274 = vmatprep.subr.bf16.mxu0 0
  %275 = vmatpush1.bf16.msra.mxu0 %v195
  %276 = vmatprep.subr.bf16.mxu0 0
  %277 = vmatpush1.bf16.msra.mxu0 %v194
  %278 = vmatprep.subr.bf16.mxu0 0
  %279 = vmatpush1.bf16.msra.mxu0 %v193
  %280 = vmatprep.subr.bf16.mxu0 0
  %281 = vmatpush1.bf16.msra.mxu0 %v192
  %282 = vmatprep.subr.bf16.mxu0 0
  %283 = vmatpush1.bf16.msra.mxu0 %v191
  %284 = vmatprep.subr.bf16.mxu0 0
  %285 = vmatpush2.bf16.msra.mxu0 0
  %286 = vmatprep.subr.bf16.mxu0 0
  %287 = vmatpush2.bf16.msra.mxu0 0
  %288 = vmatprep.subr.bf16.mxu0 0
  %289 = vmatpush2.bf16.msra.mxu0 0
  %290 = vmatprep.subr.bf16.mxu0 0
  %291 = vmatpush2.bf16.msra.mxu0 0
  %292 = vmatprep.subr.bf16.mxu0 0
  %293 = vmatpush2.bf16.msra.mxu0 0
  %294 = vmatprep.subr.bf16.mxu0 0
  %295 = vmatpush2.bf16.msra.mxu0 0
  %296 = vmatprep.subr.bf16.mxu0 0
  %297 = vmatpush2.bf16.msra.mxu0 0
  %298 = vmatprep.subr.bf16.mxu0 0
  %299 = vmatpush2.bf16.msra.mxu0 0
  %300 = vmatprep.mubr.bf16.mxu0 0
  %301 = vmatmul.mubr.bf16.gmra.mxu0 %v222
  %v302 = vpop.f32.mrf.mxu0
  %v303 = vadd.f32 %v263, %v302
  %v304 = vpop.f32.mrf.mxu0
  %v305 = vpop.f32.mrf.mxu0
  %v306 = vpop.f32.mrf.mxu0
  %307 = vdwg.mxu0
  %v308 = vmax.f32 %v303, 0.0
  %v309 = vpack.c.bf16 %v308, %v308
  %v310 = vld [vmem:[%s3] sm:$0xf]
  %v311 = vld [vmem:[%s3 + $0x4] sm:$0xf]
  %v312 = vld [vmem:[%s3 + $0x8] sm:$0xf]
  %v313 = vld [vmem:[%s3 + $0xc] sm:$0xf]
  %v314 = vld [vmem:[%s3 + $0x10] sm:$0xf]
  %v315 = vld [vmem:[%s3 + $0x14] sm:$0xf]
  %v316 = vld [vmem:[%s3 + $0x18] sm:$0xf]
  %v317 = vld [vmem:[%s3 + $0x1c] sm:$0xf]
  %v318 = vld [vmem:[%s3 + $0x20] sm:$0xf]
  %v319 = vld [vmem:[%s3 + $0x24] sm:$0xf]
  %v320 = vld [vmem:[%s3 + $0x28] sm:$0xf]
  %v321 = vld [vmem:[%s3 + $0x2c] sm:$0xf]
  %v322 = vld [vmem:[%s3 + $0x30] sm:$0xf]
  %v323 = vld [vmem:[%s3 + $0x34] sm:$0xf]
  %v324 = vld [vmem:[%s3 + $0x38] sm:$0xf]
  %v325 = vld [vmem:[%s3 + $0x3c] sm:$0xf]
  %v326 = vld [vmem:[%s4] sm:$0x1]
  %v328 = vlaneseq
  %v329 = vshrl.u32 %v328, 7
  %v330 = vsub.s32 0, %v329
  %v331 = vrot.slane %v326, %v330
  %v349 = vunpack.c.l.b16 %v310
  %v350 = vunpack.c.l.b16 %v311
  %v351 = vunpack.c.l.b16 %v312
  %v352 = vunpack.c.l.b16 %v313
  %v353 = vunpack.c.l.b16 %v314
  %v354 = vunpack.c.l.b16 %v315
  %v355 = vunpack.c.l.b16 %v316
  %v356 = vunpack.c.l.b16 %v317
  %v357 = vunpack.c.l.b16 %v318
  %v358 = vunpack.c.l.b16 %v319
  %v359 = vunpack.c.l.b16 %v320
  %v360 = vunpack.c.l.b16 %v321
  %v361 = vunpack.c.l.b16 %v322
  %v362 = vunpack.c.l.b16 %v323
  %v363 = vunpack.c.l.b16 %v324
  %v364 = vunpack.c.l.b16 %v325
  %v365 = vpack.c.b16 %v350, %v349
  %v366 = vpack.c.b16 %v352, %v351
  %v367 = vpack.c.b16 %v354, %v353
  %v368 = vpack.c.b16 %v356, %v355
  %v369 = vpack.c.b16 %v358, %v357
  %v370 = vpack.c.b16 %v360, %v359
  %v371 = vpack.c.b16 %v362, %v361
  %v372 = vpack.c.b16 %v364, %v363
  %381 = vmatprep.subr.bf16.mxu0 0
  %382 = vmatpush1.bf16.msra.mxu0 %v372
  %383 = vmatprep.subr.bf16.mxu0 0
  %384 = vmatpush1.bf16.msra.mxu0 %v371
  %385 = vmatprep.subr.bf16.mxu0 0
  %386 = vmatpush1.bf16.msra.mxu0 %v370
  %387 = vmatprep.subr.bf16.mxu0 0
  %388 = vmatpush1.bf16.msra.mxu0 %v369
  %389 = vmatprep.subr.bf16.mxu0 0
  %390 = vmatpush1.bf16.msra.mxu0 %v368
  %391 = vmatprep.subr.bf16.mxu0 0
  %392 = vmatpush1.bf16.msra.mxu0 %v367
  %393 = vmatprep.subr.bf16.mxu0 0
  %394 = vmatpush1.bf16.msra.mxu0 %v366
  %395 = vmatprep.subr.bf16.mxu0 0
  %396 = vmatpush1.bf16.msra.mxu0 %v365
  %397 = vmatprep.subr.bf16.mxu0 0
  %398 = vmatpush2.bf16.msra.mxu0 0
  %399 = vmatprep.subr.bf16.mxu0 0
  %400 = vmatpush2.bf16.msra.mxu0 0
  %401 = vmatprep.subr.bf16.mxu0 0
  %402 = vmatpush2.bf16.msra.mxu0 0
  %403 = vmatprep.subr.bf16.mxu0 0
  %404 = vmatpush2.bf16.msra.mxu0 0
  %405 = vmatprep.subr.bf16.mxu0 0
  %406 = vmatpush2.bf16.msra.mxu0 0
  %407 = vmatprep.subr.bf16.mxu0 0
  %408 = vmatpush2.bf16.msra.mxu0 0
  %409 = vmatprep.subr.bf16.mxu0 0
  %410 = vmatpush2.bf16.msra.mxu0 0
  %411 = vmatprep.subr.bf16.mxu0 0
  %412 = vmatpush2.bf16.msra.mxu0 0
  %413 = vmatprep.mubr.bf16.mxu0 0
  %414 = vmatmul.mubr.bf16.gmra.mxu0 %v309
  %v415 = vpop.f32.mrf.mxu0
  %v416 = vadd.f32 %v331, %v415
  %v417 = vpop.f32.mrf.mxu0
  %v418 = vpop.f32.mrf.mxu0
  %v419 = vpop.f32.mrf.mxu0
  %420 = vdwg.mxu0
  %v421 = vlaneseq
  %v422 = vand.u32 %v421, 127
  %vm423 = vcmp.lt.s32.totalorder %v422, 10
  %v424 = vsel %vm423, %v416, -inf
  %425 = vmax.xlane.f32.xlu0 %v424
  %v426 = vpop.xlane.xlu0 %425
  %v427 = vsub.f32 %v424, %v426
  %v428 = vmul.f32 %v427, 1.442695
  %v429 = vpow.pop %v428
  %430 = vadd.xlane.f32.xlu0 %v429
  %v431 = vpop.xlane.xlu0 %430
  %v432 = vlog2.pop %v431
  %v433 = vmul.f32 %v432, 0.6931472
  %v434 = vsub.f32 %v427, %v433
  %435 = vst [vmem:[%s5] sm:$0xff] %v434
  // Predicated region
  $region22: #{net_forward.5} parent=0 // pred_check
    _
  $region23: #{net_forward.5} parent=0 // pred_check_branch
    %437 = sbr.rel (0) target = $region25
  $region24: #{net_forward.5} parent=0 // pred_region
    _
  $region25: #{net_forward.5} parent=0 // pred_fallthru
    _
  // Predicated region
  $region26: #{net_forward.5} parent=0 // pred_check
    _
  $region27: #{net_forward.5} parent=0 // pred_check_branch
    %439 = sbr.rel (0) target = $region29
  $region28: #{net_forward.5} parent=0 // pred_region
    _
  $region29: #{net_forward.5} parent=0 // pred_fallthru
    _

</llo_original>
